<compile_context>
chip_gen: v5e
topology: v5e:2x2
jax: 0.10.0
libtpu: 0.0.40
codegen_flags: <defaults>
</compile_context>

<pallas_src>
import jax
import jax.numpy as jnp
from jax.experimental import pallas as pl
from jax.experimental.pallas import tpu as pltpu


def residual_block_kernel(xpad_ref, w1_ref, b1_ref, w2_ref, b2_ref,
                          w3_ref, b3_ref, o_ref, im_ref, ypad_ref):
    # xpad_ref block: (NB, H+2, W+2, C); o_ref block: (NB, H, W, C)
    NB, Hp2, Wp2, C = xpad_ref.shape
    H, W = Hp2 - 2, Wp2 - 2
    M = NB * H * W

    # ---- conv1 (3x3, pad=1): im2col -> one (M, 9C) x (9C, C) MXU matmul ----
    for k in range(9):
        dh, dw = k // 3, k % 3
        im_ref[:, :, :, k * C:(k + 1) * C] = xpad_ref[:, dh:dh + H, dw:dw + W, :]
    im1 = im_ref[...].reshape(M, 9 * C)                       # aligned collapse (W%8==0)
    y = jnp.dot(im1, w1_ref[...], preferred_element_type=jnp.float32) + b1_ref[...]
    y = jnp.maximum(y, 0.0)                                   # ReLU, (M, C)

    # ---- re-pad relu(conv1) into the persistent scratch for conv2's taps ----
    # Only the border strips are zeroed (every step, so it is correct no matter
    # how the parallel grid is split across cores); interior is overwritten.
    zero_row = jnp.zeros((NB, 1, Wp2, C), jnp.float32)
    zero_col = jnp.zeros((NB, H, 1, C), jnp.float32)
    ypad_ref[:, 0:1, :, :] = zero_row
    ypad_ref[:, H + 1:H + 2, :, :] = zero_row
    ypad_ref[:, 1:H + 1, 0:1, :] = zero_col
    ypad_ref[:, 1:H + 1, W + 1:W + 2, :] = zero_col
    ypad_ref[:, 1:H + 1, 1:W + 1, :] = y.reshape(NB, H, W, C)

    # ---- conv2 (3x3, pad=1): im2col -> one (M, 9C) x (9C, C) matmul ----
    for k in range(9):
        dh, dw = k // 3, k % 3
        im_ref[:, :, :, k * C:(k + 1) * C] = ypad_ref[:, dh:dh + H, dw:dw + W, :]
    im2 = im_ref[...].reshape(M, 9 * C)
    acc2 = jnp.dot(im2, w2_ref[...], preferred_element_type=jnp.float32) + b2_ref[...]

    # ---- conv3 (1x1) on the original (unpadded) x ----
    x_center = xpad_ref[:, 1:H + 1, 1:W + 1, :].reshape(M, C)
    z = jnp.dot(x_center, w3_ref[...], preferred_element_type=jnp.float32) + b3_ref[...]

    # ---- residual add + ReLU ----
    o_ref[...] = jnp.maximum(z + acc2, 0.0).reshape(NB, H, W, C)


def _pick_batch_block(n):
    """Images per grid step: amortize per-step overhead but keep grid >= 2 (v7x)."""
    if n <= 2:
        return 1
    for nb in range(min(8, n // 2), 0, -1):
        if n % nb == 0:
            return nb
    return 1


def residual_block_forward(x_nchw, params, block_n=None):
    """x_nchw: (N, C, H, W) float32. params: PyTorch-layout weights/biases."""
    w1, b1, w2, b2, w3, b3 = params
    N, C, H, W = x_nchw.shape

    # NCHW -> NHWC, zero-pad spatial dims by 1 (for the two 3x3 convs).
    x_nhwc = jnp.transpose(x_nchw, (0, 2, 3, 1)).astype(jnp.float32)
    xpad = jnp.pad(x_nhwc, ((0, 0), (1, 1), (1, 1), (0, 0)))

    # PyTorch conv weight (Cout, Cin, kh, kw) -> im2col weight (kh*kw*Cin, Cout),
    # row index = (dh*3 + dw)*C + cin, matching the im2col column layout.
    w1k = jnp.transpose(w1, (2, 3, 1, 0)).reshape(9 * C, C)
    w2k = jnp.transpose(w2, (2, 3, 1, 0)).reshape(9 * C, C)
    w3k = jnp.transpose(w3[:, :, 0, 0], (1, 0))               # (Cin, Cout)
    b1r = b1.reshape(1, C)
    b2r = b2.reshape(1, C)
    b3r = b3.reshape(1, C)

    if block_n is None:
        block_n = _pick_batch_block(N)
    grid = (N // block_n,)

    out_nhwc = pl.pallas_call(
        residual_block_kernel,
        out_shape=jax.ShapeDtypeStruct((N, H, W, C), jnp.float32),
        grid=grid,
        in_specs=[
            pl.BlockSpec((block_n, H + 2, W + 2, C), lambda n: (n, 0, 0, 0)),
            pl.BlockSpec((9 * C, C), lambda n: (0, 0)),        # w1 (im2col)
            pl.BlockSpec((1, C), lambda n: (0, 0)),            # b1
            pl.BlockSpec((9 * C, C), lambda n: (0, 0)),        # w2 (im2col)
            pl.BlockSpec((1, C), lambda n: (0, 0)),            # b2
            pl.BlockSpec((C, C), lambda n: (0, 0)),            # w3 (1x1)
            pl.BlockSpec((1, C), lambda n: (0, 0)),            # b3
        ],
        out_specs=pl.BlockSpec((block_n, H, W, C), lambda n: (n, 0, 0, 0)),
        scratch_shapes=[
            pltpu.VMEM((block_n, H, W, 9 * C), jnp.float32),        # im2col matrix
            pltpu.VMEM((block_n, H + 2, W + 2, C), jnp.float32),    # padded conv1 out
        ],
        compiler_params=pltpu.CompilerParams(
            dimension_semantics=("parallel",),
            # Tiny blocks here; limit set explicitly so enlarged H/W/C/block_n
            # still pipelines (safe on v5e/v6e/v7x: <= physical VMEM everywhere).
            vmem_limit_bytes=32 * 1024 * 1024,
        ),
    )(xpad, w1k, b1r, w2k, b2r, w3k, b3r)

    return jnp.transpose(out_nhwc, (0, 3, 1, 2))               # back to NCHW


def _reference_forward(x_nchw, params):
    """Pure-JAX reference matching the PyTorch module semantics (NCHW convs)."""
    w1, b1, w2, b2, w3, b3 = params
    dimnums = ('NCHW', 'OIHW', 'NCHW')

    def conv(x, w, b, pad):
        y = jax.lax.conv_general_dilated(
            x, w, window_strides=(1, 1),
            padding=((pad, pad), (pad, pad)),
            dimension_numbers=dimnums)
        return y + b[None, :, None, None]

    y = jax.nn.relu(conv(x_nchw, w1, b1, 1))
    y = conv(y, w2, b2, 1)
    z = conv(x_nchw, w3, b3, 0)
    return jax.nn.relu(z + y)


if __name__ == "__main__":
    N, C, H, W = 2, 8, 16, 16

    key = jax.random.PRNGKey(0)
    kx, k1, k2, k3, k4, k5, k6 = jax.random.split(key, 7)

    x = jax.random.normal(kx, (N, C, H, W), dtype=jnp.float32)

    # Deterministic synthetic parameters (PyTorch conv weight layout: Cout, Cin, kh, kw).
    w1 = jax.random.normal(k1, (C, C, 3, 3), dtype=jnp.float32) * 0.1
    b1 = jax.random.normal(k2, (C,), dtype=jnp.float32) * 0.1
    w2 = jax.random.normal(k3, (C, C, 3, 3), dtype=jnp.float32) * 0.1
    b2 = jax.random.normal(k4, (C,), dtype=jnp.float32) * 0.1
    w3 = jax.random.normal(k5, (C, C, 1, 1), dtype=jnp.float32) * 0.1
    b3 = jax.random.normal(k6, (C,), dtype=jnp.float32) * 0.1
    params = (w1, b1, w2, b2, w3, b3)

    out = residual_block_forward(x, params)
    out = jax.block_until_ready(out)

    ref = jax.block_until_ready(_reference_forward(x, params))
    assert out.shape == (N, C, H, W)
    assert jnp.allclose(out, ref, atol=2e-4, rtol=2e-4), "mismatch vs reference"

    print("KERNEL_OK")
</pallas_src>

<mosaic_0001>
module attributes {stable_mosaic.version = 11 : i64} {
  func.func @residual_block_kernel(%arg0: i32, %arg1: memref<1x18x18x8xf32, #tpu.memory_space<vmem>>, %arg2: memref<72x8xf32, #tpu.memory_space<vmem>>, %arg3: memref<1x8xf32, #tpu.memory_space<vmem>>, %arg4: memref<72x8xf32, #tpu.memory_space<vmem>>, %arg5: memref<1x8xf32, #tpu.memory_space<vmem>>, %arg6: memref<8x8xf32, #tpu.memory_space<vmem>>, %arg7: memref<1x8xf32, #tpu.memory_space<vmem>>, %arg8: memref<1x16x16x8xf32, #tpu.memory_space<vmem>>, %arg9: memref<1x16x16x72xf32, #tpu.memory_space<vmem>>, %arg10: memref<1x18x18x8xf32, #tpu.memory_space<vmem>>) attributes {dimension_semantics = [#tpu.dimension_semantics<parallel>], iteration_bounds = array<i64: 2>, scalar_prefetch = 0 : i64, scratch_operands = 2 : i64, tpu.core_type = #tpu.core_type<tc>, window_params = [{transform_indices = @transform_0, window_bounds = array<i64: 1, 18, 18, 8>}, {pipeline_mode = #tpu.pipeline_mode<synchronous>, transform_indices = @transform_1, window_bounds = array<i64: 72, 8>}, {pipeline_mode = #tpu.pipeline_mode<synchronous>, transform_indices = @transform_2, window_bounds = array<i64: 1, 8>}, {pipeline_mode = #tpu.pipeline_mode<synchronous>, transform_indices = @transform_3, window_bounds = array<i64: 72, 8>}, {pipeline_mode = #tpu.pipeline_mode<synchronous>, transform_indices = @transform_4, window_bounds = array<i64: 1, 8>}, {pipeline_mode = #tpu.pipeline_mode<synchronous>, transform_indices = @transform_5, window_bounds = array<i64: 8, 8>}, {pipeline_mode = #tpu.pipeline_mode<synchronous>, transform_indices = @transform_6, window_bounds = array<i64: 1, 8>}, {transform_indices = @transform_7, window_bounds = array<i64: 1, 16, 16, 8>}]} {
    %c0 = arith.constant 0 : index
    %c0_0 = arith.constant 0 : index
    %c0_1 = arith.constant 0 : index
    %c0_2 = arith.constant 0 : index
    %0 = vector.load %arg1[%c0, %c0_0, %c0_1, %c0_2] : memref<1x18x18x8xf32, #tpu.memory_space<vmem>>, vector<1x16x16x8xf32>
    %c0_3 = arith.constant 0 : index
    %c0_4 = arith.constant 0 : index
    %c0_5 = arith.constant 0 : index
    %c0_6 = arith.constant 0 : index
    %1 = vector.load %arg9[%c0_3, %c0_4, %c0_5, %c0_6] : memref<1x16x16x72xf32, #tpu.memory_space<vmem>>, vector<1x16x16x8xf32>
    tpu.vector_store %arg9[%c0_3, %c0_4, %c0_5, %c0_6], %0 {strides = array<i32>} : memref<1x16x16x72xf32, #tpu.memory_space<vmem>>, vector<1x16x16x8xf32>,
    %c0_7 = arith.constant 0 : index
    %c0_8 = arith.constant 0 : index
    %c1 = arith.constant 1 : index
    %c0_9 = arith.constant 0 : index
    %2 = vector.load %arg1[%c0_7, %c0_8, %c1, %c0_9] : memref<1x18x18x8xf32, #tpu.memory_space<vmem>>, vector<1x16x16x8xf32>
    %c0_10 = arith.constant 0 : index
    %c0_11 = arith.constant 0 : index
    %c0_12 = arith.constant 0 : index
    %c8 = arith.constant 8 : index
    %3 = vector.load %arg9[%c0_10, %c0_11, %c0_12, %c8] : memref<1x16x16x72xf32, #tpu.memory_space<vmem>>, vector<1x16x16x8xf32>
    tpu.vector_store %arg9[%c0_10, %c0_11, %c0_12, %c8], %2 {strides = array<i32>} : memref<1x16x16x72xf32, #tpu.memory_space<vmem>>, vector<1x16x16x8xf32>,
    %c0_13 = arith.constant 0 : index
    %c0_14 = arith.constant 0 : index
    %c2 = arith.constant 2 : index
    %c0_15 = arith.constant 0 : index
    %4 = vector.load %arg1[%c0_13, %c0_14, %c2, %c0_15] : memref<1x18x18x8xf32, #tpu.memory_space<vmem>>, vector<1x16x16x8xf32>
    %c0_16 = arith.constant 0 : index
    %c0_17 = arith.constant 0 : index
    %c0_18 = arith.constant 0 : index
    %c16 = arith.constant 16 : index
    %5 = vector.load %arg9[%c0_16, %c0_17, %c0_18, %c16] : memref<1x16x16x72xf32, #tpu.memory_space<vmem>>, vector<1x16x16x8xf32>
    tpu.vector_store %arg9[%c0_16, %c0_17, %c0_18, %c16], %4 {strides = array<i32>} : memref<1x16x16x72xf32, #tpu.memory_space<vmem>>, vector<1x16x16x8xf32>,
    %c0_19 = arith.constant 0 : index
    %c1_20 = arith.constant 1 : index
    %c0_21 = arith.constant 0 : index
    %c0_22 = arith.constant 0 : index
    %6 = vector.load %arg1[%c0_19, %c1_20, %c0_21, %c0_22] : memref<1x18x18x8xf32, #tpu.memory_space<vmem>>, vector<1x16x16x8xf32>
    %c0_23 = arith.constant 0 : index
    %c0_24 = arith.constant 0 : index
    %c0_25 = arith.constant 0 : index
    %c24 = arith.constant 24 : index
    %7 = vector.load %arg9[%c0_23, %c0_24, %c0_25, %c24] : memref<1x16x16x72xf32, #tpu.memory_space<vmem>>, vector<1x16x16x8xf32>
    tpu.vector_store %arg9[%c0_23, %c0_24, %c0_25, %c24], %6 {strides = array<i32>} : memref<1x16x16x72xf32, #tpu.memory_space<vmem>>, vector<1x16x16x8xf32>,
    %c0_26 = arith.constant 0 : index
    %c1_27 = arith.constant 1 : index
    %c1_28 = arith.constant 1 : index
    %c0_29 = arith.constant 0 : index
    %8 = vector.load %arg1[%c0_26, %c1_27, %c1_28, %c0_29] : memref<1x18x18x8xf32, #tpu.memory_space<vmem>>, vector<1x16x16x8xf32>
    %c0_30 = arith.constant 0 : index
    %c0_31 = arith.constant 0 : index
    %c0_32 = arith.constant 0 : index
    %c32 = arith.constant 32 : index
    %9 = vector.load %arg9[%c0_30, %c0_31, %c0_32, %c32] : memref<1x16x16x72xf32, #tpu.memory_space<vmem>>, vector<1x16x16x8xf32>
    tpu.vector_store %arg9[%c0_30, %c0_31, %c0_32, %c32], %8 {strides = array<i32>} : memref<1x16x16x72xf32, #tpu.memory_space<vmem>>, vector<1x16x16x8xf32>,
    %c0_33 = arith.constant 0 : index
    %c1_34 = arith.constant 1 : index
    %c2_35 = arith.constant 2 : index
    %c0_36 = arith.constant 0 : index
    %10 = vector.load %arg1[%c0_33, %c1_34, %c2_35, %c0_36] : memref<1x18x18x8xf32, #tpu.memory_space<vmem>>, vector<1x16x16x8xf32>
    %c0_37 = arith.constant 0 : index
    %c0_38 = arith.constant 0 : index
    %c0_39 = arith.constant 0 : index
    %c40 = arith.constant 40 : index
    %11 = vector.load %arg9[%c0_37, %c0_38, %c0_39, %c40] : memref<1x16x16x72xf32, #tpu.memory_space<vmem>>, vector<1x16x16x8xf32>
    tpu.vector_store %arg9[%c0_37, %c0_38, %c0_39, %c40], %10 {strides = array<i32>} : memref<1x16x16x72xf32, #tpu.memory_space<vmem>>, vector<1x16x16x8xf32>,
    %c0_40 = arith.constant 0 : index
    %c2_41 = arith.constant 2 : index
    %c0_42 = arith.constant 0 : index
    %c0_43 = arith.constant 0 : index
    %12 = vector.load %arg1[%c0_40, %c2_41, %c0_42, %c0_43] : memref<1x18x18x8xf32, #tpu.memory_space<vmem>>, vector<1x16x16x8xf32>
    %c0_44 = arith.constant 0 : index
    %c0_45 = arith.constant 0 : index
    %c0_46 = arith.constant 0 : index
    %c48 = arith.constant 48 : index
    %13 = vector.load %arg9[%c0_44, %c0_45, %c0_46, %c48] : memref<1x16x16x72xf32, #tpu.memory_space<vmem>>, vector<1x16x16x8xf32>
    tpu.vector_store %arg9[%c0_44, %c0_45, %c0_46, %c48], %12 {strides = array<i32>} : memref<1x16x16x72xf32, #tpu.memory_space<vmem>>, vector<1x16x16x8xf32>,
    %c0_47 = arith.constant 0 : index
    %c2_48 = arith.constant 2 : index
    %c1_49 = arith.constant 1 : index
    %c0_50 = arith.constant 0 : index
    %14 = vector.load %arg1[%c0_47, %c2_48, %c1_49, %c0_50] : memref<1x18x18x8xf32, #tpu.memory_space<vmem>>, vector<1x16x16x8xf32>
    %c0_51 = arith.constant 0 : index
    %c0_52 = arith.constant 0 : index
    %c0_53 = arith.constant 0 : index
    %c56 = arith.constant 56 : index
    %15 = vector.load %arg9[%c0_51, %c0_52, %c0_53, %c56] : memref<1x16x16x72xf32, #tpu.memory_space<vmem>>, vector<1x16x16x8xf32>
    tpu.vector_store %arg9[%c0_51, %c0_52, %c0_53, %c56], %14 {strides = array<i32>} : memref<1x16x16x72xf32, #tpu.memory_space<vmem>>, vector<1x16x16x8xf32>,
    %c0_54 = arith.constant 0 : index
    %c2_55 = arith.constant 2 : index
    %c2_56 = arith.constant 2 : index
    %c0_57 = arith.constant 0 : index
    %16 = vector.load %arg1[%c0_54, %c2_55, %c2_56, %c0_57] : memref<1x18x18x8xf32, #tpu.memory_space<vmem>>, vector<1x16x16x8xf32>
    %c0_58 = arith.constant 0 : index
    %c0_59 = arith.constant 0 : index
    %c0_60 = arith.constant 0 : index
    %c64 = arith.constant 64 : index
    %17 = vector.load %arg9[%c0_58, %c0_59, %c0_60, %c64] : memref<1x16x16x72xf32, #tpu.memory_space<vmem>>, vector<1x16x16x8xf32>
    tpu.vector_store %arg9[%c0_58, %c0_59, %c0_60, %c64], %16 {strides = array<i32>} : memref<1x16x16x72xf32, #tpu.memory_space<vmem>>, vector<1x16x16x8xf32>,
    %c0_61 = arith.constant 0 : index
    %c0_62 = arith.constant 0 : index
    %c0_63 = arith.constant 0 : index
    %c0_64 = arith.constant 0 : index
    %18 = vector.load %arg9[%c0_61, %c0_62, %c0_63, %c0_64] : memref<1x16x16x72xf32, #tpu.memory_space<vmem>>, vector<1x16x16x72xf32>
    %19 = vector.shape_cast %18 : vector<1x16x16x72xf32> to vector<256x72xf32>
    %c0_65 = arith.constant 0 : index
    %c0_66 = arith.constant 0 : index
    %20 = vector.load %arg2[%c0_65, %c0_66] : memref<72x8xf32, #tpu.memory_space<vmem>>, vector<72x8xf32>
    %cst = arith.constant dense<0.000000e+00> : vector<256x8xf32>
    %21 = tpu.matmul %19, %20, %cst {dimension_numbers = #tpu.dot_dimension_numbers<[1], [0], [0], [1], [0, 0, 1, 1], [], []>} : vector<256x72xf32>, vector<72x8xf32>, vector<256x8xf32> -> vector<256x8xf32>
    %c0_67 = arith.constant 0 : index
    %c0_68 = arith.constant 0 : index
    %22 = vector.load %arg3[%c0_67, %c0_68] : memref<1x8xf32, #tpu.memory_space<vmem>>, vector<1x8xf32>
    %23 = vector.broadcast %22 : vector<1x8xf32> to vector<256x8xf32>
    %24 = arith.addf %21, %23 : vector<256x8xf32>
    %cst_69 = arith.constant 0.000000e+00 : f32
    %25 = vector.broadcast %cst_69 : f32 to vector<256x8xf32>
    %26 = arith.maximumf %24, %25 : vector<256x8xf32>
    %cst_70 = arith.constant 0.000000e+00 : f32
    %27 = vector.broadcast %cst_70 : f32 to vector<1x1x18x8xf32>
    %cst_71 = arith.constant 0.000000e+00 : f32
    %28 = vector.broadcast %cst_71 : f32 to vector<1x16x1x8xf32>
    %c0_72 = arith.constant 0 : index
    %c0_73 = arith.constant 0 : index
    %c0_74 = arith.constant 0 : index
    %c0_75 = arith.constant 0 : index
    %29 = vector.load %arg10[%c0_72, %c0_73, %c0_74, %c0_75] : memref<1x18x18x8xf32, #tpu.memory_space<vmem>>, vector<1x1x18x8xf32>
    tpu.vector_store %arg10[%c0_72, %c0_73, %c0_74, %c0_75], %27 {strides = array<i32>} : memref<1x18x18x8xf32, #tpu.memory_space<vmem>>, vector<1x1x18x8xf32>,
    %c0_76 = arith.constant 0 : index
    %c17 = arith.constant 17 : index
    %c0_77 = arith.constant 0 : index
    %c0_78 = arith.constant 0 : index
    %30 = vector.load %arg10[%c0_76, %c17, %c0_77, %c0_78] : memref<1x18x18x8xf32, #tpu.memory_space<vmem>>, vector<1x1x18x8xf32>
    tpu.vector_store %arg10[%c0_76, %c17, %c0_77, %c0_78], %27 {strides = array<i32>} : memref<1x18x18x8xf32, #tpu.memory_space<vmem>>, vector<1x1x18x8xf32>,
    %c0_79 = arith.constant 0 : index
    %c1_80 = arith.constant 1 : index
    %c0_81 = arith.constant 0 : index
    %c0_82 = arith.constant 0 : index
    %31 = vector.load %arg10[%c0_79, %c1_80, %c0_81, %c0_82] : memref<1x18x18x8xf32, #tpu.memory_space<vmem>>, vector<1x16x1x8xf32>
    tpu.vector_store %arg10[%c0_79, %c1_80, %c0_81, %c0_82], %28 {strides = array<i32>} : memref<1x18x18x8xf32, #tpu.memory_space<vmem>>, vector<1x16x1x8xf32>,
    %c0_83 = arith.constant 0 : index
    %c1_84 = arith.constant 1 : index
    %c17_85 = arith.constant 17 : index
    %c0_86 = arith.constant 0 : index
    %32 = vector.load %arg10[%c0_83, %c1_84, %c17_85, %c0_86] : memref<1x18x18x8xf32, #tpu.memory_space<vmem>>, vector<1x16x1x8xf32>
    tpu.vector_store %arg10[%c0_83, %c1_84, %c17_85, %c0_86], %28 {strides = array<i32>} : memref<1x18x18x8xf32, #tpu.memory_space<vmem>>, vector<1x16x1x8xf32>,
    %33 = vector.shape_cast %26 : vector<256x8xf32> to vector<1x16x16x8xf32>
    %c0_87 = arith.constant 0 : index
    %c1_88 = arith.constant 1 : index
    %c1_89 = arith.constant 1 : index
    %c0_90 = arith.constant 0 : index
    %34 = vector.load %arg10[%c0_87, %c1_88, %c1_89, %c0_90] : memref<1x18x18x8xf32, #tpu.memory_space<vmem>>, vector<1x16x16x8xf32>
    tpu.vector_store %arg10[%c0_87, %c1_88, %c1_89, %c0_90], %33 {strides = array<i32>} : memref<1x18x18x8xf32, #tpu.memory_space<vmem>>, vector<1x16x16x8xf32>,
    %c0_91 = arith.constant 0 : index
    %c0_92 = arith.constant 0 : index
    %c0_93 = arith.constant 0 : index
    %c0_94 = arith.constant 0 : index
    %35 = vector.load %arg10[%c0_91, %c0_92, %c0_93, %c0_94] : memref<1x18x18x8xf32, #tpu.memory_space<vmem>>, vector<1x16x16x8xf32>
    %c0_95 = arith.constant 0 : index
    %c0_96 = arith.constant 0 : index
    %c0_97 = arith.constant 0 : index
    %c0_98 = arith.constant 0 : index
    %36 = vector.load %arg9[%c0_95, %c0_96, %c0_97, %c0_98] : memref<1x16x16x72xf32, #tpu.memory_space<vmem>>, vector<1x16x16x8xf32>
    tpu.vector_store %arg9[%c0_95, %c0_96, %c0_97, %c0_98], %35 {strides = array<i32>} : memref<1x16x16x72xf32, #tpu.memory_space<vmem>>, vector<1x16x16x8xf32>,
    %c0_99 = arith.constant 0 : index
    %c0_100 = arith.constant 0 : index
    %c1_101 = arith.constant 1 : index
    %c0_102 = arith.constant 0 : index
    %37 = vector.load %arg10[%c0_99, %c0_100, %c1_101, %c0_102] : memref<1x18x18x8xf32, #tpu.memory_space<vmem>>, vector<1x16x16x8xf32>
    %c0_103 = arith.constant 0 : index
    %c0_104 = arith.constant 0 : index
    %c0_105 = arith.constant 0 : index
    %c8_106 = arith.constant 8 : index
    %38 = vector.load %arg9[%c0_103, %c0_104, %c0_105, %c8_106] : memref<1x16x16x72xf32, #tpu.memory_space<vmem>>, vector<1x16x16x8xf32>
    tpu.vector_store %arg9[%c0_103, %c0_104, %c0_105, %c8_106], %37 {strides = array<i32>} : memref<1x16x16x72xf32, #tpu.memory_space<vmem>>, vector<1x16x16x8xf32>,
    %c0_107 = arith.constant 0 : index
    %c0_108 = arith.constant 0 : index
    %c2_109 = arith.constant 2 : index
    %c0_110 = arith.constant 0 : index
    %39 = vector.load %arg10[%c0_107, %c0_108, %c2_109, %c0_110] : memref<1x18x18x8xf32, #tpu.memory_space<vmem>>, vector<1x16x16x8xf32>
    %c0_111 = arith.constant 0 : index
    %c0_112 = arith.constant 0 : index
    %c0_113 = arith.constant 0 : index
    %c16_114 = arith.constant 16 : index
    %40 = vector.load %arg9[%c0_111, %c0_112, %c0_113, %c16_114] : memref<1x16x16x72xf32, #tpu.memory_space<vmem>>, vector<1x16x16x8xf32>
    tpu.vector_store %arg9[%c0_111, %c0_112, %c0_113, %c16_114], %39 {strides = array<i32>} : memref<1x16x16x72xf32, #tpu.memory_space<vmem>>, vector<1x16x16x8xf32>,
    %c0_115 = arith.constant 0 : index
    %c1_116 = arith.constant 1 : index
    %c0_117 = arith.constant 0 : index
    %c0_118 = arith.constant 0 : index
    %41 = vector.load %arg10[%c0_115, %c1_116, %c0_117, %c0_118] : memref<1x18x18x8xf32, #tpu.memory_space<vmem>>, vector<1x16x16x8xf32>
    %c0_119 = arith.constant 0 : index
    %c0_120 = arith.constant 0 : index
    %c0_121 = arith.constant 0 : index
    %c24_122 = arith.constant 24 : index
    %42 = vector.load %arg9[%c0_119, %c0_120, %c0_121, %c24_122] : memref<1x16x16x72xf32, #tpu.memory_space<vmem>>, vector<1x16x16x8xf32>
    tpu.vector_store %arg9[%c0_119, %c0_120, %c0_121, %c24_122], %41 {strides = array<i32>} : memref<1x16x16x72xf32, #tpu.memory_space<vmem>>, vector<1x16x16x8xf32>,
    %c0_123 = arith.constant 0 : index
    %c1_124 = arith.constant 1 : index
    %c1_125 = arith.constant 1 : index
    %c0_126 = arith.constant 0 : index
    %43 = vector.load %arg10[%c0_123, %c1_124, %c1_125, %c0_126] : memref<1x18x18x8xf32, #tpu.memory_space<vmem>>, vector<1x16x16x8xf32>
    %c0_127 = arith.constant 0 : index
    %c0_128 = arith.constant 0 : index
    %c0_129 = arith.constant 0 : index
    %c32_130 = arith.constant 32 : index
    %44 = vector.load %arg9[%c0_127, %c0_128, %c0_129, %c32_130] : memref<1x16x16x72xf32, #tpu.memory_space<vmem>>, vector<1x16x16x8xf32>
    tpu.vector_store %arg9[%c0_127, %c0_128, %c0_129, %c32_130], %43 {strides = array<i32>} : memref<1x16x16x72xf32, #tpu.memory_space<vmem>>, vector<1x16x16x8xf32>,
    %c0_131 = arith.constant 0 : index
    %c1_132 = arith.constant 1 : index
    %c2_133 = arith.constant 2 : index
    %c0_134 = arith.constant 0 : index
    %45 = vector.load %arg10[%c0_131, %c1_132, %c2_133, %c0_134] : memref<1x18x18x8xf32, #tpu.memory_space<vmem>>, vector<1x16x16x8xf32>
    %c0_135 = arith.constant 0 : index
    %c0_136 = arith.constant 0 : index
    %c0_137 = arith.constant 0 : index
    %c40_138 = arith.constant 40 : index
    %46 = vector.load %arg9[%c0_135, %c0_136, %c0_137, %c40_138] : memref<1x16x16x72xf32, #tpu.memory_space<vmem>>, vector<1x16x16x8xf32>
    tpu.vector_store %arg9[%c0_135, %c0_136, %c0_137, %c40_138], %45 {strides = array<i32>} : memref<1x16x16x72xf32, #tpu.memory_space<vmem>>, vector<1x16x16x8xf32>,
    %c0_139 = arith.constant 0 : index
    %c2_140 = arith.constant 2 : index
    %c0_141 = arith.constant 0 : index
    %c0_142 = arith.constant 0 : index
    %47 = vector.load %arg10[%c0_139, %c2_140, %c0_141, %c0_142] : memref<1x18x18x8xf32, #tpu.memory_space<vmem>>, vector<1x16x16x8xf32>
    %c0_143 = arith.constant 0 : index
    %c0_144 = arith.constant 0 : index
    %c0_145 = arith.constant 0 : index
    %c48_146 = arith.constant 48 : index
    %48 = vector.load %arg9[%c0_143, %c0_144, %c0_145, %c48_146] : memref<1x16x16x72xf32, #tpu.memory_space<vmem>>, vector<1x16x16x8xf32>
    tpu.vector_store %arg9[%c0_143, %c0_144, %c0_145, %c48_146], %47 {strides = array<i32>} : memref<1x16x16x72xf32, #tpu.memory_space<vmem>>, vector<1x16x16x8xf32>,
    %c0_147 = arith.constant 0 : index
    %c2_148 = arith.constant 2 : index
    %c1_149 = arith.constant 1 : index
    %c0_150 = arith.constant 0 : index
    %49 = vector.load %arg10[%c0_147, %c2_148, %c1_149, %c0_150] : memref<1x18x18x8xf32, #tpu.memory_space<vmem>>, vector<1x16x16x8xf32>
    %c0_151 = arith.constant 0 : index
    %c0_152 = arith.constant 0 : index
    %c0_153 = arith.constant 0 : index
    %c56_154 = arith.constant 56 : index
    %50 = vector.load %arg9[%c0_151, %c0_152, %c0_153, %c56_154] : memref<1x16x16x72xf32, #tpu.memory_space<vmem>>, vector<1x16x16x8xf32>
    tpu.vector_store %arg9[%c0_151, %c0_152, %c0_153, %c56_154], %49 {strides = array<i32>} : memref<1x16x16x72xf32, #tpu.memory_space<vmem>>, vector<1x16x16x8xf32>,
    %c0_155 = arith.constant 0 : index
    %c2_156 = arith.constant 2 : index
    %c2_157 = arith.constant 2 : index
    %c0_158 = arith.constant 0 : index
    %51 = vector.load %arg10[%c0_155, %c2_156, %c2_157, %c0_158] : memref<1x18x18x8xf32, #tpu.memory_space<vmem>>, vector<1x16x16x8xf32>
    %c0_159 = arith.constant 0 : index
    %c0_160 = arith.constant 0 : index
    %c0_161 = arith.constant 0 : index
    %c64_162 = arith.constant 64 : index
    %52 = vector.load %arg9[%c0_159, %c0_160, %c0_161, %c64_162] : memref<1x16x16x72xf32, #tpu.memory_space<vmem>>, vector<1x16x16x8xf32>
    tpu.vector_store %arg9[%c0_159, %c0_160, %c0_161, %c64_162], %51 {strides = array<i32>} : memref<1x16x16x72xf32, #tpu.memory_space<vmem>>, vector<1x16x16x8xf32>,
    %c0_163 = arith.constant 0 : index
    %c0_164 = arith.constant 0 : index
    %c0_165 = arith.constant 0 : index
    %c0_166 = arith.constant 0 : index
    %53 = vector.load %arg9[%c0_163, %c0_164, %c0_165, %c0_166] : memref<1x16x16x72xf32, #tpu.memory_space<vmem>>, vector<1x16x16x72xf32>
    %54 = vector.shape_cast %53 : vector<1x16x16x72xf32> to vector<256x72xf32>
    %c0_167 = arith.constant 0 : index
    %c0_168 = arith.constant 0 : index
    %55 = vector.load %arg4[%c0_167, %c0_168] : memref<72x8xf32, #tpu.memory_space<vmem>>, vector<72x8xf32>
    %cst_169 = arith.constant dense<0.000000e+00> : vector<256x8xf32>
    %56 = tpu.matmul %54, %55, %cst_169 {dimension_numbers = #tpu.dot_dimension_numbers<[1], [0], [0], [1], [0, 0, 1, 1], [], []>} : vector<256x72xf32>, vector<72x8xf32>, vector<256x8xf32> -> vector<256x8xf32>
    %c0_170 = arith.constant 0 : index
    %c0_171 = arith.constant 0 : index
    %57 = vector.load %arg5[%c0_170, %c0_171] : memref<1x8xf32, #tpu.memory_space<vmem>>, vector<1x8xf32>
    %58 = vector.broadcast %57 : vector<1x8xf32> to vector<256x8xf32>
    %59 = arith.addf %56, %58 : vector<256x8xf32>
    %c0_172 = arith.constant 0 : index
    %c1_173 = arith.constant 1 : index
    %c1_174 = arith.constant 1 : index
    %c0_175 = arith.constant 0 : index
    %60 = vector.load %arg1[%c0_172, %c1_173, %c1_174, %c0_175] : memref<1x18x18x8xf32, #tpu.memory_space<vmem>>, vector<1x16x16x8xf32>
    %61 = vector.shape_cast %60 : vector<1x16x16x8xf32> to vector<256x8xf32>
    %c0_176 = arith.constant 0 : index
    %c0_177 = arith.constant 0 : index
    %62 = vector.load %arg6[%c0_176, %c0_177] : memref<8x8xf32, #tpu.memory_space<vmem>>, vector<8x8xf32>
    %cst_178 = arith.constant dense<0.000000e+00> : vector<256x8xf32>
    %63 = tpu.matmul %61, %62, %cst_178 {dimension_numbers = #tpu.dot_dimension_numbers<[1], [0], [0], [1], [0, 0, 1, 1], [], []>} : vector<256x8xf32>, vector<8x8xf32>, vector<256x8xf32> -> vector<256x8xf32>
    %c0_179 = arith.constant 0 : index
    %c0_180 = arith.constant 0 : index
    %64 = vector.load %arg7[%c0_179, %c0_180] : memref<1x8xf32, #tpu.memory_space<vmem>>, vector<1x8xf32>
    %65 = vector.broadcast %64 : vector<1x8xf32> to vector<256x8xf32>
    %66 = arith.addf %63, %65 : vector<256x8xf32>
    %67 = arith.addf %66, %59 : vector<256x8xf32>
    %cst_181 = arith.constant 0.000000e+00 : f32
    %68 = vector.broadcast %cst_181 : f32 to vector<256x8xf32>
    %69 = arith.maximumf %67, %68 : vector<256x8xf32>
    %70 = vector.shape_cast %69 : vector<256x8xf32> to vector<1x16x16x8xf32>
    %c0_182 = arith.constant 0 : index
    %c0_183 = arith.constant 0 : index
    %c0_184 = arith.constant 0 : index
    %c0_185 = arith.constant 0 : index
    %71 = vector.load %arg8[%c0_182, %c0_183, %c0_184, %c0_185] : memref<1x16x16x8xf32, #tpu.memory_space<vmem>>, vector<1x16x16x8xf32>
    tpu.vector_store %arg8[%c0_182, %c0_183, %c0_184, %c0_185], %70 {strides = array<i32>} : memref<1x16x16x8xf32, #tpu.memory_space<vmem>>, vector<1x16x16x8xf32>,
    return
  }
  func.func @transform_0(%arg0: i32) -> (i32, i32, i32, i32) {
    %c0_i32 = arith.constant 0 : i32
    %c0_i32_0 = arith.constant 0 : i32
    %c0_i32_1 = arith.constant 0 : i32
    %c0_i32_2 = arith.constant 0 : i32
    return %arg0, %c0_i32, %c0_i32_0, %c0_i32_1 : i32, i32, i32, i32
  }
  func.func @transform_1(%arg0: i32) -> (i32, i32) {
    %c0_i32 = arith.constant 0 : i32
    %c0_i32_0 = arith.constant 0 : i32
    %c0_i32_1 = arith.constant 0 : i32
    return %c0_i32, %c0_i32_0 : i32, i32
  }
  func.func @transform_2(%arg0: i32) -> (i32, i32) {
    %c0_i32 = arith.constant 0 : i32
    %c0_i32_0 = arith.constant 0 : i32
    %c0_i32_1 = arith.constant 0 : i32
    return %c0_i32, %c0_i32_0 : i32, i32
  }
  func.func @transform_3(%arg0: i32) -> (i32, i32) {
    %c0_i32 = arith.constant 0 : i32
    %c0_i32_0 = arith.constant 0 : i32
    %c0_i32_1 = arith.constant 0 : i32
    return %c0_i32, %c0_i32_0 : i32, i32
  }
  func.func @transform_4(%arg0: i32) -> (i32, i32) {
    %c0_i32 = arith.constant 0 : i32
    %c0_i32_0 = arith.constant 0 : i32
    %c0_i32_1 = arith.constant 0 : i32
    return %c0_i32, %c0_i32_0 : i32, i32
  }
  func.func @transform_5(%arg0: i32) -> (i32, i32) {
    %c0_i32 = arith.constant 0 : i32
    %c0_i32_0 = arith.constant 0 : i32
    %c0_i32_1 = arith.constant 0 : i32
    return %c0_i32, %c0_i32_0 : i32, i32
  }
  func.func @transform_6(%arg0: i32) -> (i32, i32) {
    %c0_i32 = arith.constant 0 : i32
    %c0_i32_0 = arith.constant 0 : i32
    %c0_i32_1 = arith.constant 0 : i32
    return %c0_i32, %c0_i32_0 : i32, i32
  }
  func.func @transform_7(%arg0: i32) -> (i32, i32, i32, i32) {
    %c0_i32 = arith.constant 0 : i32
    %c0_i32_0 = arith.constant 0 : i32
    %c0_i32_1 = arith.constant 0 : i32
    %c0_i32_2 = arith.constant 0 : i32
    return %arg0, %c0_i32, %c0_i32_0, %c0_i32_1 : i32, i32, i32, i32
  }
}

</mosaic_0001>

<llo_original>
// kernel: tpu_custom_call.1
$region0: #{tpu_custom_call.1}
  #allocation0 [shape = 'u32[]', space=smem, size = 0x4, offset = 0x4, fixed_abs, tag = 'smem constant byte address 0x4 - core index']
  #allocation1 [shape = 'u32[72,128]{1,0:T(1,128)}', space=vmem, size = 0x9000, scoped, tag = 'internal scratch']
  #allocation2 [shape = 'f32[1,16,16,72]{3,2,1,0:T(8,128)}', space=vmem, size = 0x20000, scoped, tag = 'scratch operand']
  #allocation3 [shape = 'f32[1,18,18,8]{3,2,1,0:T(8,128)}', space=vmem, size = 0x36000, scoped, tag = 'scratch operand']
  %s0 = inlined_call_operand.vmem [shape: f32[2,18,18,8], index: 0, kind: input, shape index: {}]
  %s1 = inlined_call_operand.vmem [shape: f32[72,8], index: 1, kind: input, shape index: {}]
  %s2 = inlined_call_operand.vmem [shape: f32[1,8], index: 2, kind: input, shape index: {}]
  %s3 = inlined_call_operand.vmem [shape: f32[72,8], index: 3, kind: input, shape index: {}]
  %s4 = inlined_call_operand.vmem [shape: f32[1,8], index: 4, kind: input, shape index: {}]
  %s5 = inlined_call_operand.vmem [shape: f32[8,8], index: 5, kind: input, shape index: {}]
  %s6 = inlined_call_operand.vmem [shape: f32[1,8], index: 6, kind: input, shape index: {}]
  %s7 = inlined_call_operand.vmem [shape: f32[2,16,16,8], index: 7, kind: output, shape index: {}]
  %s8 = sld [smem:[#allocation0]]
  $region61: #{tpu_custom_call.1} parent=0
    _
  %s10 = ssub.s32 1, %s8
  %s11 = scalar_select 0, %s10, %s8
  loop: start=0, step=1, limit=4
  $region2: #{tpu_custom_call.1} parent=0 // loop_pre_header
    _
  $region3: #{tpu_custom_call.1} parent=0 // loop_header
    %s13 = sphi 0, %s17
    %p14 = scmp.ge.s32.totalorder %s13, 4
    %s23 = sphi 0, %s25
    %s26 = sphi 0, %s23
    %s27 = sphi 0, %s26
    %s43 = sphi 0, %s27
    %s47 = sphi 0, %s47
    %s49 = sphi 0, %s47
    %s50 = sphi 0, %s49
    %s64 = sphi 0, %s50
    %s68 = sphi 0, %s68
    %s70 = sphi 0, %s68
    %s71 = sphi 0, %s70
    %s85 = sphi 0, %s71
    %s89 = sphi 0, %s89
    %s91 = sphi 0, %s89
    %s92 = sphi 0, %s91
    %s106 = sphi 0, %s92
    %s110 = sphi 0, %s110
    %s112 = sphi 0, %s110
    %s113 = sphi 0, %s112
    %s127 = sphi 0, %s113
    %s131 = sphi 0, %s131
    %s133 = sphi 0, %s131
    %s134 = sphi 0, %s133
    %s148 = sphi 0, %s134
    %s152 = sphi 0, %s152
    %s154 = sphi 0, %s152
    %s155 = sphi 0, %s154
    %s169 = sphi 0, %s155
    %s175 = sphi 0, %s177
    %s178 = sphi 0, %s175
    %s179 = sphi 0, %s178
    %s195 = sphi 0, %s179
  $region4: #{tpu_custom_call.1} parent=0 // loop_header_branch
    %16 = sbr.rel (%p14) target = $region8
  $region5: #{tpu_custom_call.1} parent=0 // loop_body
    %s18 = ssub.s32 %s13, 1
    %s19 = ssub.s32 %s13, 2
    %s20 = sadd.s32 %s13, 1
    %s21 = ssub.s32 %s13, %s20
    %p22 = scmp.eq.s32.totalorder %s21, 0
    %s24 = sadd.s32 %s23, 1
    %s25 = scalar_select %p22, %s23, %s24
    %p28 = pneg %p22
    %p29 = scmp.eq.s32.totalorder %s13, 1
    %p30 = por %p28, %p29
    %p31 = scmp.ne.s32.totalorder %s23, %s26
    %p32 = scmp.eq.s32.totalorder %s13, 0
    %p33 = por %p31, %p32
    %p34 = scmp.ne.s32.totalorder %s23, %s26
    %p35 = scmp.eq.s32.totalorder %s18, 1
    %p36 = por %p34, %p35
    %p37 = scmp.ne.s32.totalorder %s26, %s27
    %p38 = scmp.eq.s32.totalorder %s18, 0
    %p39 = por %p37, %p38
    %p40 = scmp.ne.s32.totalorder %s26, %s27
    %p41 = scmp.eq.s32.totalorder %s19, 1
    %p42 = por %p40, %p41
    %p44 = scmp.ne.s32.totalorder %s27, %s43
    %p45 = scmp.eq.s32.totalorder %s19, 0
    %p46 = por %p44, %p45
    %s48 = sadd.s32 %s47, 1
    %p51 = scmp.eq.s32.totalorder %s13, 1
    %p52 = scmp.ne.s32.totalorder %s47, %s49
    %p53 = scmp.eq.s32.totalorder %s13, 0
    %p54 = por %p52, %p53
    %p55 = scmp.ne.s32.totalorder %s47, %s49
    %p56 = scmp.eq.s32.totalorder %s18, 1
    %p57 = por %p55, %p56
    %p58 = scmp.ne.s32.totalorder %s49, %s50
    %p59 = scmp.eq.s32.totalorder %s18, 0
    %p60 = por %p58, %p59
    %p61 = scmp.ne.s32.totalorder %s49, %s50
    %p62 = scmp.eq.s32.totalorder %s19, 1
    %p63 = por %p61, %p62
    %p65 = scmp.ne.s32.totalorder %s50, %s64
    %p66 = scmp.eq.s32.totalorder %s19, 0
    %p67 = por %p65, %p66
    %s69 = sadd.s32 %s68, 1
    %p72 = scmp.eq.s32.totalorder %s13, 1
    %p73 = scmp.ne.s32.totalorder %s68, %s70
    %p74 = scmp.eq.s32.totalorder %s13, 0
    %p75 = por %p73, %p74
    %p76 = scmp.ne.s32.totalorder %s68, %s70
    %p77 = scmp.eq.s32.totalorder %s18, 1
    %p78 = por %p76, %p77
    %p79 = scmp.ne.s32.totalorder %s70, %s71
    %p80 = scmp.eq.s32.totalorder %s18, 0
    %p81 = por %p79, %p80
    %p82 = scmp.ne.s32.totalorder %s70, %s71
    %p83 = scmp.eq.s32.totalorder %s19, 1
    %p84 = por %p82, %p83
    %p86 = scmp.ne.s32.totalorder %s71, %s85
    %p87 = scmp.eq.s32.totalorder %s19, 0
    %p88 = por %p86, %p87
    %s90 = sadd.s32 %s89, 1
    %p93 = scmp.eq.s32.totalorder %s13, 1
    %p94 = scmp.ne.s32.totalorder %s89, %s91
    %p95 = scmp.eq.s32.totalorder %s13, 0
    %p96 = por %p94, %p95
    %p97 = scmp.ne.s32.totalorder %s89, %s91
    %p98 = scmp.eq.s32.totalorder %s18, 1
    %p99 = por %p97, %p98
    %p100 = scmp.ne.s32.totalorder %s91, %s92
    %p101 = scmp.eq.s32.totalorder %s18, 0
    %p102 = por %p100, %p101
    %p103 = scmp.ne.s32.totalorder %s91, %s92
    %p104 = scmp.eq.s32.totalorder %s19, 1
    %p105 = por %p103, %p104
    %p107 = scmp.ne.s32.totalorder %s92, %s106
    %p108 = scmp.eq.s32.totalorder %s19, 0
    %p109 = por %p107, %p108
    %s111 = sadd.s32 %s110, 1
    %p114 = scmp.eq.s32.totalorder %s13, 1
    %p115 = scmp.ne.s32.totalorder %s110, %s112
    %p116 = scmp.eq.s32.totalorder %s13, 0
    %p117 = por %p115, %p116
    %p118 = scmp.ne.s32.totalorder %s110, %s112
    %p119 = scmp.eq.s32.totalorder %s18, 1
    %p120 = por %p118, %p119
    %p121 = scmp.ne.s32.totalorder %s112, %s113
    %p122 = scmp.eq.s32.totalorder %s18, 0
    %p123 = por %p121, %p122
    %p124 = scmp.ne.s32.totalorder %s112, %s113
    %p125 = scmp.eq.s32.totalorder %s19, 1
    %p126 = por %p124, %p125
    %p128 = scmp.ne.s32.totalorder %s113, %s127
    %p129 = scmp.eq.s32.totalorder %s19, 0
    %p130 = por %p128, %p129
    %s132 = sadd.s32 %s131, 1
    %p135 = scmp.eq.s32.totalorder %s13, 1
    %p136 = scmp.ne.s32.totalorder %s131, %s133
    %p137 = scmp.eq.s32.totalorder %s13, 0
    %p138 = por %p136, %p137
    %p139 = scmp.ne.s32.totalorder %s131, %s133
    %p140 = scmp.eq.s32.totalorder %s18, 1
    %p141 = por %p139, %p140
    %p142 = scmp.ne.s32.totalorder %s133, %s134
    %p143 = scmp.eq.s32.totalorder %s18, 0
    %p144 = por %p142, %p143
    %p145 = scmp.ne.s32.totalorder %s133, %s134
    %p146 = scmp.eq.s32.totalorder %s19, 1
    %p147 = por %p145, %p146
    %p149 = scmp.ne.s32.totalorder %s134, %s148
    %p150 = scmp.eq.s32.totalorder %s19, 0
    %p151 = por %p149, %p150
    %s153 = sadd.s32 %s152, 1
    %p156 = scmp.eq.s32.totalorder %s13, 1
    %p157 = scmp.ne.s32.totalorder %s152, %s154
    %p158 = scmp.eq.s32.totalorder %s13, 0
    %p159 = por %p157, %p158
    %p160 = scmp.ne.s32.totalorder %s152, %s154
    %p161 = scmp.eq.s32.totalorder %s18, 1
    %p162 = por %p160, %p161
    %p163 = scmp.ne.s32.totalorder %s154, %s155
    %p164 = scmp.eq.s32.totalorder %s18, 0
    %p165 = por %p163, %p164
    %p166 = scmp.ne.s32.totalorder %s154, %s155
    %p167 = scmp.eq.s32.totalorder %s19, 1
    %p168 = por %p166, %p167
    %p170 = scmp.ne.s32.totalorder %s155, %s169
    %p171 = scmp.eq.s32.totalorder %s19, 0
    %p172 = por %p170, %p171
    %s173 = ssub.s32 %s13, %s20
    %p174 = scmp.eq.s32.totalorder %s173, 0
    %s176 = sadd.s32 %s175, 1
    %s177 = scalar_select %p174, %s175, %s176
    %p180 = pneg %p174
    %p181 = scmp.eq.s32.totalorder %s13, 1
    %p182 = por %p180, %p181
    %p183 = scmp.ne.s32.totalorder %s175, %s178
    %p184 = scmp.eq.s32.totalorder %s13, 0
    %p185 = por %p183, %p184
    %p186 = scmp.ne.s32.totalorder %s175, %s178
    %p187 = scmp.eq.s32.totalorder %s18, 1
    %p188 = por %p186, %p187
    %p189 = scmp.ne.s32.totalorder %s178, %s179
    %p190 = scmp.eq.s32.totalorder %s18, 0
    %p191 = por %p189, %p190
    %p192 = scmp.ne.s32.totalorder %s178, %s179
    %p193 = scmp.eq.s32.totalorder %s19, 1
    %p194 = por %p192, %p193
    %p196 = scmp.ne.s32.totalorder %s179, %s195
    %p197 = scmp.eq.s32.totalorder %s19, 0
    %p198 = por %p196, %p197
    %p199 = scmp.le.s32.totalorder 1, %s13
    %p200 = scmp.lt.s32.totalorder %s13, 3
    %p201 = pnand %p199, %p200
    %p202 = pneg %p201
    // Predicated region
    $region9: #{tpu_custom_call.1} parent=5 // pred_check
      _
    $region10: #{tpu_custom_call.1} parent=5 // pred_check_branch
      %204 = sbr.rel (%p201) target = $region12
    $region11: #{tpu_custom_call.1} parent=5 // pred_region
      %s205 = ssub.s32 %s13, 1
      // Predicated region
      $region13: #{tpu_custom_call.1} parent=11 // pred_check
        %p206 = pneg %p60
      $region14: #{tpu_custom_call.1} parent=11 // pred_check_branch
        %208 = sbr.rel (%p206) target = $region16
      $region15: #{tpu_custom_call.1} parent=11 // pred_region
        _
      $region16: #{tpu_custom_call.1} parent=11 // pred_fallthru
        _
      // Predicated region
      $region17: #{tpu_custom_call.1} parent=11 // pred_check
        %p209 = pneg %p81
      $region18: #{tpu_custom_call.1} parent=11 // pred_check_branch
        %211 = sbr.rel (%p209) target = $region20
      $region19: #{tpu_custom_call.1} parent=11 // pred_region
        _
      $region20: #{tpu_custom_call.1} parent=11 // pred_fallthru
        _
      // Predicated region
      $region21: #{tpu_custom_call.1} parent=11 // pred_check
        %p212 = pneg %p102
      $region22: #{tpu_custom_call.1} parent=11 // pred_check_branch
        %214 = sbr.rel (%p212) target = $region24
      $region23: #{tpu_custom_call.1} parent=11 // pred_region
        _
      $region24: #{tpu_custom_call.1} parent=11 // pred_fallthru
        _
      // Predicated region
      $region25: #{tpu_custom_call.1} parent=11 // pred_check
        %p215 = pneg %p123
      $region26: #{tpu_custom_call.1} parent=11 // pred_check_branch
        %217 = sbr.rel (%p215) target = $region28
      $region27: #{tpu_custom_call.1} parent=11 // pred_region
        _
      $region28: #{tpu_custom_call.1} parent=11 // pred_fallthru
        _
      // Predicated region
      $region29: #{tpu_custom_call.1} parent=11 // pred_check
        %p218 = pneg %p144
      $region30: #{tpu_custom_call.1} parent=11 // pred_check_branch
        %220 = sbr.rel (%p218) target = $region32
      $region31: #{tpu_custom_call.1} parent=11 // pred_region
        _
      $region32: #{tpu_custom_call.1} parent=11 // pred_fallthru
        _
      // Predicated region
      $region33: #{tpu_custom_call.1} parent=11 // pred_check
        %p221 = pneg %p165
      $region34: #{tpu_custom_call.1} parent=11 // pred_check_branch
        %223 = sbr.rel (%p221) target = $region36
      $region35: #{tpu_custom_call.1} parent=11 // pred_region
        _
      $region36: #{tpu_custom_call.1} parent=11 // pred_fallthru
        _
    $region12: #{tpu_custom_call.1} parent=5 // pred_fallthru
      _
    %p224 = scmp.lt.s32.totalorder %s13, 2
    // Predicated region
    $region37: #{tpu_custom_call.1} parent=5 // pred_check
      %p225 = pneg %p224
    $region38: #{tpu_custom_call.1} parent=5 // pred_check_branch
      %227 = sbr.rel (%p225) target = $region40
    $region39: #{tpu_custom_call.1} parent=5 // pred_region
      // Predicated region
      $region41: #{tpu_custom_call.1} parent=39 // pred_check
        %p228 = pneg %p33
      $region42: #{tpu_custom_call.1} parent=39 // pred_check_branch
        %230 = sbr.rel (%p228) target = $region44
      $region43: #{tpu_custom_call.1} parent=39 // pred_region
        %p231 = scmp.lt.s32.totalorder %s13, 1
        %s232 = scalar_select %p231, %s13, 1
        %s233 = smul.addr %s232, 54
        %s234 = smul.addr %s233, 8
        %s235 = scalar_lea.vmem %s0, %s234
      $region44: #{tpu_custom_call.1} parent=39 // pred_fallthru
        _
    $region40: #{tpu_custom_call.1} parent=5 // pred_fallthru
      _
    %p236 = scmp.le.s32.totalorder 1, %s13
    %p237 = scmp.lt.s32.totalorder %s13, 3
    %p238 = pnand %p236, %p237
    %p239 = pneg %p238
    // Predicated region
    $region45: #{tpu_custom_call.1} parent=5 // pred_check
      _
    $region46: #{tpu_custom_call.1} parent=5 // pred_check_branch
      %241 = sbr.rel (%p238) target = $region48
    $region47: #{tpu_custom_call.1} parent=5 // pred_region
      %s242 = ssub.s32 %s13, 1
      %p243 = scmp.lt.s32.totalorder %s18, 1
      %s244 = scalar_select %p243, %s18, 1
      %s245 = smul.addr %s244, 54
      %s246 = smul.addr %s245, 8
      %s247 = scalar_lea.vmem %s0, %s246
      %p248 = pneg %p39
      %p249 = pneg %p36
      %p250 = pneg %p60
      %p251 = pneg %p57
      %p252 = pneg %p81
      %p253 = pneg %p78
      %p254 = pneg %p102
      %p255 = pneg %p99
      %p256 = pneg %p123
      %p257 = pneg %p120
      %p258 = pneg %p144
      %p259 = pneg %p141
      %p260 = pneg %p165
      %p261 = pneg %p162
      %p262 = pneg %p191
      %p263 = pneg %p188
      %p264 = scmp.lt.s32.totalorder %s18, 1
      %s265 = scalar_select %p264, %s18, 1
      %s266 = smul.addr %s265, 32
      %s267 = smul.addr %s266, 8
      %s268 = scalar_lea.vmem %s7, %s267
      %p269 = scmp.lt.s32.totalorder %s18, 1
      %s270 = scalar_select %p269, %s18, 1
      %s271 = smul.addr %s270, 54
      %s272 = smul.addr %s271, 8
      %s273 = scalar_lea.vmem %s0, %s272
      %p274 = scmp.lt.s32.totalorder %s18, 1
      %s275 = scalar_select %p274, %s18, 1
      %s276 = smul.addr %s275, 32
      %s277 = smul.addr %s276, 8
      %s278 = scalar_lea.vmem %s7, %s277
      %v279 = vld [vmem:[%s273] sm:$0xff]
      %v280 = vld [vmem:[%s273 + $0x8] sm:$0xff]
      %v281 = vld [vmem:[%s273 + $0x18] sm:$0xff]
      %v282 = vld [vmem:[%s273 + $0x20] sm:$0xff]
      %v283 = vld [vmem:[%s273 + $0x30] sm:$0xff]
      %v284 = vld [vmem:[%s273 + $0x38] sm:$0xff]
      %v285 = vld [vmem:[%s273 + $0x48] sm:$0xff]
      %v286 = vld [vmem:[%s273 + $0x50] sm:$0xff]
      %v287 = vld [vmem:[%s273 + $0x60] sm:$0xff]
      %v288 = vld [vmem:[%s273 + $0x68] sm:$0xff]
      %v289 = vld [vmem:[%s273 + $0x78] sm:$0xff]
      %v290 = vld [vmem:[%s273 + $0x80] sm:$0xff]
      %v291 = vld [vmem:[%s273 + $0x90] sm:$0xff]
      %v292 = vld [vmem:[%s273 + $0x98] sm:$0xff]
      %v293 = vld [vmem:[%s273 + $0xa8] sm:$0xff]
      %v294 = vld [vmem:[%s273 + $0xb0] sm:$0xff]
      %v295 = vld [vmem:[%s273 + $0xc0] sm:$0xff]
      %v296 = vld [vmem:[%s273 + $0xc8] sm:$0xff]
      %v297 = vld [vmem:[%s273 + $0xd8] sm:$0xff]
      %v298 = vld [vmem:[%s273 + $0xe0] sm:$0xff]
      %v299 = vld [vmem:[%s273 + $0xf0] sm:$0xff]
      %v300 = vld [vmem:[%s273 + $0xf8] sm:$0xff]
      %v301 = vld [vmem:[%s273 + $0x108] sm:$0xff]
      %v302 = vld [vmem:[%s273 + $0x110] sm:$0xff]
      %v303 = vld [vmem:[%s273 + $0x120] sm:$0xff]
      %v304 = vld [vmem:[%s273 + $0x128] sm:$0xff]
      %v305 = vld [vmem:[%s273 + $0x138] sm:$0xff]
      %v306 = vld [vmem:[%s273 + $0x140] sm:$0xff]
      %v307 = vld [vmem:[%s273 + $0x150] sm:$0xff]
      %v308 = vld [vmem:[%s273 + $0x158] sm:$0xff]
      %v309 = vld [vmem:[%s273 + $0x168] sm:$0xff]
      %v310 = vld [vmem:[%s273 + $0x170] sm:$0xff]
      %vm311 = vcmask 64512
      %312 = vst.msk [vmem:[#allocation2] sm:$0xff] %vm311, %v279
      %313 = vst.msk [vmem:[#allocation2 + $0x8] sm:$0xff] %vm311, %v280
      %314 = vst.msk [vmem:[#allocation2 + $0x10] sm:$0xff] %vm311, %v281
      %315 = vst.msk [vmem:[#allocation2 + $0x18] sm:$0xff] %vm311, %v282
      %316 = vst.msk [vmem:[#allocation2 + $0x20] sm:$0xff] %vm311, %v283
      %317 = vst.msk [vmem:[#allocation2 + $0x28] sm:$0xff] %vm311, %v284
      %318 = vst.msk [vmem:[#allocation2 + $0x30] sm:$0xff] %vm311, %v285
      %319 = vst.msk [vmem:[#allocation2 + $0x38] sm:$0xff] %vm311, %v286
      %320 = vst.msk [vmem:[#allocation2 + $0x40] sm:$0xff] %vm311, %v287
      %321 = vst.msk [vmem:[#allocation2 + $0x48] sm:$0xff] %vm311, %v288
      %322 = vst.msk [vmem:[#allocation2 + $0x50] sm:$0xff] %vm311, %v289
      %323 = vst.msk [vmem:[#allocation2 + $0x58] sm:$0xff] %vm311, %v290
      %324 = vst.msk [vmem:[#allocation2 + $0x60] sm:$0xff] %vm311, %v291
      %325 = vst.msk [vmem:[#allocation2 + $0x68] sm:$0xff] %vm311, %v292
      %326 = vst.msk [vmem:[#allocation2 + $0x70] sm:$0xff] %vm311, %v293
      %327 = vst.msk [vmem:[#allocation2 + $0x78] sm:$0xff] %vm311, %v294
      %328 = vst.msk [vmem:[#allocation2 + $0x80] sm:$0xff] %vm311, %v295
      %329 = vst.msk [vmem:[#allocation2 + $0x88] sm:$0xff] %vm311, %v296
      %330 = vst.msk [vmem:[#allocation2 + $0x90] sm:$0xff] %vm311, %v297
      %331 = vst.msk [vmem:[#allocation2 + $0x98] sm:$0xff] %vm311, %v298
      %332 = vst.msk [vmem:[#allocation2 + $0xa0] sm:$0xff] %vm311, %v299
      %333 = vst.msk [vmem:[#allocation2 + $0xa8] sm:$0xff] %vm311, %v300
      %334 = vst.msk [vmem:[#allocation2 + $0xb0] sm:$0xff] %vm311, %v301
      %335 = vst.msk [vmem:[#allocation2 + $0xb8] sm:$0xff] %vm311, %v302
      %336 = vst.msk [vmem:[#allocation2 + $0xc0] sm:$0xff] %vm311, %v303
      %337 = vst.msk [vmem:[#allocation2 + $0xc8] sm:$0xff] %vm311, %v304
      %338 = vst.msk [vmem:[#allocation2 + $0xd0] sm:$0xff] %vm311, %v305
      %339 = vst.msk [vmem:[#allocation2 + $0xd8] sm:$0xff] %vm311, %v306
      %340 = vst.msk [vmem:[#allocation2 + $0xe0] sm:$0xff] %vm311, %v307
      %341 = vst.msk [vmem:[#allocation2 + $0xe8] sm:$0xff] %vm311, %v308
      %342 = vst.msk [vmem:[#allocation2 + $0xf0] sm:$0xff] %vm311, %v309
      %343 = vst.msk [vmem:[#allocation2 + $0xf8] sm:$0xff] %vm311, %v310
      %v344 = vld [vmem:[%s273 + $0x1] sm:$0xff]
      %v345 = vld [vmem:[%s273 + $0x9] sm:$0xff]
      %v346 = vld [vmem:[%s273 + $0x19] sm:$0xff]
      %v347 = vld [vmem:[%s273 + $0x21] sm:$0xff]
      %v348 = vld [vmem:[%s273 + $0x31] sm:$0xff]
      %v349 = vld [vmem:[%s273 + $0x39] sm:$0xff]
      %v350 = vld [vmem:[%s273 + $0x49] sm:$0xff]
      %v351 = vld [vmem:[%s273 + $0x51] sm:$0xff]
      %v352 = vld [vmem:[%s273 + $0x61] sm:$0xff]
      %v353 = vld [vmem:[%s273 + $0x69] sm:$0xff]
      %v354 = vld [vmem:[%s273 + $0x79] sm:$0xff]
      %v355 = vld [vmem:[%s273 + $0x81] sm:$0xff]
      %v356 = vld [vmem:[%s273 + $0x91] sm:$0xff]
      %v357 = vld [vmem:[%s273 + $0x99] sm:$0xff]
      %v358 = vld [vmem:[%s273 + $0xa9] sm:$0xff]
      %v359 = vld [vmem:[%s273 + $0xb1] sm:$0xff]
      %v360 = vld [vmem:[%s273 + $0xc1] sm:$0xff]
      %v361 = vld [vmem:[%s273 + $0xc9] sm:$0xff]
      %v362 = vld [vmem:[%s273 + $0xd9] sm:$0xff]
      %v363 = vld [vmem:[%s273 + $0xe1] sm:$0xff]
      %v364 = vld [vmem:[%s273 + $0xf1] sm:$0xff]
      %v365 = vld [vmem:[%s273 + $0xf9] sm:$0xff]
      %v366 = vld [vmem:[%s273 + $0x109] sm:$0xff]
      %v367 = vld [vmem:[%s273 + $0x111] sm:$0xff]
      %v368 = vld [vmem:[%s273 + $0x121] sm:$0xff]
      %v369 = vld [vmem:[%s273 + $0x129] sm:$0xff]
      %v370 = vld [vmem:[%s273 + $0x139] sm:$0xff]
      %v371 = vld [vmem:[%s273 + $0x141] sm:$0xff]
      %v372 = vld [vmem:[%s273 + $0x151] sm:$0xff]
      %v373 = vld [vmem:[%s273 + $0x159] sm:$0xff]
      %v374 = vld [vmem:[%s273 + $0x169] sm:$0xff]
      %v375 = vld [vmem:[%s273 + $0x171] sm:$0xff]
      %408 = vrot.lane.b32.xlu0 %v344, 8
      %v409 = vpop.permute.xlu0 %408
      %410 = vrot.lane.b32.xlu0 %v345, 8
      %v411 = vpop.permute.xlu0 %410
      %412 = vrot.lane.b32.xlu0 %v346, 8
      %v413 = vpop.permute.xlu0 %412
      %414 = vrot.lane.b32.xlu0 %v347, 8
      %v415 = vpop.permute.xlu0 %414
      %416 = vrot.lane.b32.xlu0 %v348, 8
      %v417 = vpop.permute.xlu0 %416
      %418 = vrot.lane.b32.xlu0 %v349, 8
      %v419 = vpop.permute.xlu0 %418
      %420 = vrot.lane.b32.xlu0 %v350, 8
      %v421 = vpop.permute.xlu0 %420
      %422 = vrot.lane.b32.xlu0 %v351, 8
      %v423 = vpop.permute.xlu0 %422
      %424 = vrot.lane.b32.xlu0 %v352, 8
      %v425 = vpop.permute.xlu0 %424
      %426 = vrot.lane.b32.xlu0 %v353, 8
      %v427 = vpop.permute.xlu0 %426
      %428 = vrot.lane.b32.xlu0 %v354, 8
      %v429 = vpop.permute.xlu0 %428
      %430 = vrot.lane.b32.xlu0 %v355, 8
      %v431 = vpop.permute.xlu0 %430
      %432 = vrot.lane.b32.xlu0 %v356, 8
      %v433 = vpop.permute.xlu0 %432
      %434 = vrot.lane.b32.xlu0 %v357, 8
      %v435 = vpop.permute.xlu0 %434
      %436 = vrot.lane.b32.xlu0 %v358, 8
      %v437 = vpop.permute.xlu0 %436
      %438 = vrot.lane.b32.xlu0 %v359, 8
      %v439 = vpop.permute.xlu0 %438
      %440 = vrot.lane.b32.xlu0 %v360, 8
      %v441 = vpop.permute.xlu0 %440
      %442 = vrot.lane.b32.xlu0 %v361, 8
      %v443 = vpop.permute.xlu0 %442
      %444 = vrot.lane.b32.xlu0 %v362, 8
      %v445 = vpop.permute.xlu0 %444
      %446 = vrot.lane.b32.xlu0 %v363, 8
      %v447 = vpop.permute.xlu0 %446
      %448 = vrot.lane.b32.xlu0 %v364, 8
      %v449 = vpop.permute.xlu0 %448
      %450 = vrot.lane.b32.xlu0 %v365, 8
      %v451 = vpop.permute.xlu0 %450
      %452 = vrot.lane.b32.xlu0 %v366, 8
      %v453 = vpop.permute.xlu0 %452
      %454 = vrot.lane.b32.xlu0 %v367, 8
      %v455 = vpop.permute.xlu0 %454
      %456 = vrot.lane.b32.xlu0 %v368, 8
      %v457 = vpop.permute.xlu0 %456
      %458 = vrot.lane.b32.xlu0 %v369, 8
      %v459 = vpop.permute.xlu0 %458
      %460 = vrot.lane.b32.xlu0 %v370, 8
      %v461 = vpop.permute.xlu0 %460
      %462 = vrot.lane.b32.xlu0 %v371, 8
      %v463 = vpop.permute.xlu0 %462
      %464 = vrot.lane.b32.xlu0 %v372, 8
      %v465 = vpop.permute.xlu0 %464
      %466 = vrot.lane.b32.xlu0 %v373, 8
      %v467 = vpop.permute.xlu0 %466
      %468 = vrot.lane.b32.xlu0 %v374, 8
      %v469 = vpop.permute.xlu0 %468
      %470 = vrot.lane.b32.xlu0 %v375, 8
      %v471 = vpop.permute.xlu0 %470
      %vm504 = vcmask 130112
      %505 = vst.msk [vmem:[#allocation2] sm:$0xff] %vm504, %v409
      %506 = vst.msk [vmem:[#allocation2 + $0x8] sm:$0xff] %vm504, %v411
      %507 = vst.msk [vmem:[#allocation2 + $0x10] sm:$0xff] %vm504, %v413
      %508 = vst.msk [vmem:[#allocation2 + $0x18] sm:$0xff] %vm504, %v415
      %509 = vst.msk [vmem:[#allocation2 + $0x20] sm:$0xff] %vm504, %v417
      %510 = vst.msk [vmem:[#allocation2 + $0x28] sm:$0xff] %vm504, %v419
      %511 = vst.msk [vmem:[#allocation2 + $0x30] sm:$0xff] %vm504, %v421
      %512 = vst.msk [vmem:[#allocation2 + $0x38] sm:$0xff] %vm504, %v423
      %513 = vst.msk [vmem:[#allocation2 + $0x40] sm:$0xff] %vm504, %v425
      %514 = vst.msk [vmem:[#allocation2 + $0x48] sm:$0xff] %vm504, %v427
      %515 = vst.msk [vmem:[#allocation2 + $0x50] sm:$0xff] %vm504, %v429
      %516 = vst.msk [vmem:[#allocation2 + $0x58] sm:$0xff] %vm504, %v431
      %517 = vst.msk [vmem:[#allocation2 + $0x60] sm:$0xff] %vm504, %v433
      %518 = vst.msk [vmem:[#allocation2 + $0x68] sm:$0xff] %vm504, %v435
      %519 = vst.msk [vmem:[#allocation2 + $0x70] sm:$0xff] %vm504, %v437
      %520 = vst.msk [vmem:[#allocation2 + $0x78] sm:$0xff] %vm504, %v439
      %521 = vst.msk [vmem:[#allocation2 + $0x80] sm:$0xff] %vm504, %v441
      %522 = vst.msk [vmem:[#allocation2 + $0x88] sm:$0xff] %vm504, %v443
      %523 = vst.msk [vmem:[#allocation2 + $0x90] sm:$0xff] %vm504, %v445
      %524 = vst.msk [vmem:[#allocation2 + $0x98] sm:$0xff] %vm504, %v447
      %525 = vst.msk [vmem:[#allocation2 + $0xa0] sm:$0xff] %vm504, %v449
      %526 = vst.msk [vmem:[#allocation2 + $0xa8] sm:$0xff] %vm504, %v451
      %527 = vst.msk [vmem:[#allocation2 + $0xb0] sm:$0xff] %vm504, %v453
      %528 = vst.msk [vmem:[#allocation2 + $0xb8] sm:$0xff] %vm504, %v455
      %529 = vst.msk [vmem:[#allocation2 + $0xc0] sm:$0xff] %vm504, %v457
      %530 = vst.msk [vmem:[#allocation2 + $0xc8] sm:$0xff] %vm504, %v459
      %531 = vst.msk [vmem:[#allocation2 + $0xd0] sm:$0xff] %vm504, %v461
      %532 = vst.msk [vmem:[#allocation2 + $0xd8] sm:$0xff] %vm504, %v463
      %533 = vst.msk [vmem:[#allocation2 + $0xe0] sm:$0xff] %vm504, %v465
      %534 = vst.msk [vmem:[#allocation2 + $0xe8] sm:$0xff] %vm504, %v467
      %535 = vst.msk [vmem:[#allocation2 + $0xf0] sm:$0xff] %vm504, %v469
      %536 = vst.msk [vmem:[#allocation2 + $0xf8] sm:$0xff] %vm504, %v471
      %v537 = vld [vmem:[%s273 + $0x2] sm:$0xff]
      %v538 = vld [vmem:[%s273 + $0xa] sm:$0xff]
      %v539 = vld [vmem:[%s273 + $0x1a] sm:$0xff]
      %v540 = vld [vmem:[%s273 + $0x22] sm:$0xff]
      %v541 = vld [vmem:[%s273 + $0x32] sm:$0xff]
      %v542 = vld [vmem:[%s273 + $0x3a] sm:$0xff]
      %v543 = vld [vmem:[%s273 + $0x4a] sm:$0xff]
      %v544 = vld [vmem:[%s273 + $0x52] sm:$0xff]
      %v545 = vld [vmem:[%s273 + $0x62] sm:$0xff]
      %v546 = vld [vmem:[%s273 + $0x6a] sm:$0xff]
      %v547 = vld [vmem:[%s273 + $0x7a] sm:$0xff]
      %v548 = vld [vmem:[%s273 + $0x82] sm:$0xff]
      %v549 = vld [vmem:[%s273 + $0x92] sm:$0xff]
      %v550 = vld [vmem:[%s273 + $0x9a] sm:$0xff]
      %v551 = vld [vmem:[%s273 + $0xaa] sm:$0xff]
      %v552 = vld [vmem:[%s273 + $0xb2] sm:$0xff]
      %v553 = vld [vmem:[%s273 + $0xc2] sm:$0xff]
      %v554 = vld [vmem:[%s273 + $0xca] sm:$0xff]
      %v555 = vld [vmem:[%s273 + $0xda] sm:$0xff]
      %v556 = vld [vmem:[%s273 + $0xe2] sm:$0xff]
      %v557 = vld [vmem:[%s273 + $0xf2] sm:$0xff]
      %v558 = vld [vmem:[%s273 + $0xfa] sm:$0xff]
      %v559 = vld [vmem:[%s273 + $0x10a] sm:$0xff]
      %v560 = vld [vmem:[%s273 + $0x112] sm:$0xff]
      %v561 = vld [vmem:[%s273 + $0x122] sm:$0xff]
      %v562 = vld [vmem:[%s273 + $0x12a] sm:$0xff]
      %v563 = vld [vmem:[%s273 + $0x13a] sm:$0xff]
      %v564 = vld [vmem:[%s273 + $0x142] sm:$0xff]
      %v565 = vld [vmem:[%s273 + $0x152] sm:$0xff]
      %v566 = vld [vmem:[%s273 + $0x15a] sm:$0xff]
      %v567 = vld [vmem:[%s273 + $0x16a] sm:$0xff]
      %v568 = vld [vmem:[%s273 + $0x172] sm:$0xff]
      %601 = vrot.lane.b32.xlu0 %v537, 16
      %v602 = vpop.permute.xlu0 %601
      %603 = vrot.lane.b32.xlu0 %v538, 16
      %v604 = vpop.permute.xlu0 %603
      %605 = vrot.lane.b32.xlu0 %v539, 16
      %v606 = vpop.permute.xlu0 %605
      %607 = vrot.lane.b32.xlu0 %v540, 16
      %v608 = vpop.permute.xlu0 %607
      %609 = vrot.lane.b32.xlu0 %v541, 16
      %v610 = vpop.permute.xlu0 %609
      %611 = vrot.lane.b32.xlu0 %v542, 16
      %v612 = vpop.permute.xlu0 %611
      %613 = vrot.lane.b32.xlu0 %v543, 16
      %v614 = vpop.permute.xlu0 %613
      %615 = vrot.lane.b32.xlu0 %v544, 16
      %v616 = vpop.permute.xlu0 %615
      %617 = vrot.lane.b32.xlu0 %v545, 16
      %v618 = vpop.permute.xlu0 %617
      %619 = vrot.lane.b32.xlu0 %v546, 16
      %v620 = vpop.permute.xlu0 %619
      %621 = vrot.lane.b32.xlu0 %v547, 16
      %v622 = vpop.permute.xlu0 %621
      %623 = vrot.lane.b32.xlu0 %v548, 16
      %v624 = vpop.permute.xlu0 %623
      %625 = vrot.lane.b32.xlu0 %v549, 16
      %v626 = vpop.permute.xlu0 %625
      %627 = vrot.lane.b32.xlu0 %v550, 16
      %v628 = vpop.permute.xlu0 %627
      %629 = vrot.lane.b32.xlu0 %v551, 16
      %v630 = vpop.permute.xlu0 %629
      %631 = vrot.lane.b32.xlu0 %v552, 16
      %v632 = vpop.permute.xlu0 %631
      %633 = vrot.lane.b32.xlu0 %v553, 16
      %v634 = vpop.permute.xlu0 %633
      %635 = vrot.lane.b32.xlu0 %v554, 16
      %v636 = vpop.permute.xlu0 %635
      %637 = vrot.lane.b32.xlu0 %v555, 16
      %v638 = vpop.permute.xlu0 %637
      %639 = vrot.lane.b32.xlu0 %v556, 16
      %v640 = vpop.permute.xlu0 %639
      %641 = vrot.lane.b32.xlu0 %v557, 16
      %v642 = vpop.permute.xlu0 %641
      %643 = vrot.lane.b32.xlu0 %v558, 16
      %v644 = vpop.permute.xlu0 %643
      %645 = vrot.lane.b32.xlu0 %v559, 16
      %v646 = vpop.permute.xlu0 %645
      %647 = vrot.lane.b32.xlu0 %v560, 16
      %v648 = vpop.permute.xlu0 %647
      %649 = vrot.lane.b32.xlu0 %v561, 16
      %v650 = vpop.permute.xlu0 %649
      %651 = vrot.lane.b32.xlu0 %v562, 16
      %v652 = vpop.permute.xlu0 %651
      %653 = vrot.lane.b32.xlu0 %v563, 16
      %v654 = vpop.permute.xlu0 %653
      %655 = vrot.lane.b32.xlu0 %v564, 16
      %v656 = vpop.permute.xlu0 %655
      %657 = vrot.lane.b32.xlu0 %v565, 16
      %v658 = vpop.permute.xlu0 %657
      %659 = vrot.lane.b32.xlu0 %v566, 16
      %v660 = vpop.permute.xlu0 %659
      %661 = vrot.lane.b32.xlu0 %v567, 16
      %v662 = vpop.permute.xlu0 %661
      %663 = vrot.lane.b32.xlu0 %v568, 16
      %v664 = vpop.permute.xlu0 %663
      %vm697 = vcmask 195712
      %698 = vst.msk [vmem:[#allocation2] sm:$0xff] %vm697, %v602
      %699 = vst.msk [vmem:[#allocation2 + $0x8] sm:$0xff] %vm697, %v604
      %700 = vst.msk [vmem:[#allocation2 + $0x10] sm:$0xff] %vm697, %v606
      %701 = vst.msk [vmem:[#allocation2 + $0x18] sm:$0xff] %vm697, %v608
      %702 = vst.msk [vmem:[#allocation2 + $0x20] sm:$0xff] %vm697, %v610
      %703 = vst.msk [vmem:[#allocation2 + $0x28] sm:$0xff] %vm697, %v612
      %704 = vst.msk [vmem:[#allocation2 + $0x30] sm:$0xff] %vm697, %v614
      %705 = vst.msk [vmem:[#allocation2 + $0x38] sm:$0xff] %vm697, %v616
      %706 = vst.msk [vmem:[#allocation2 + $0x40] sm:$0xff] %vm697, %v618
      %707 = vst.msk [vmem:[#allocation2 + $0x48] sm:$0xff] %vm697, %v620
      %708 = vst.msk [vmem:[#allocation2 + $0x50] sm:$0xff] %vm697, %v622
      %709 = vst.msk [vmem:[#allocation2 + $0x58] sm:$0xff] %vm697, %v624
      %710 = vst.msk [vmem:[#allocation2 + $0x60] sm:$0xff] %vm697, %v626
      %711 = vst.msk [vmem:[#allocation2 + $0x68] sm:$0xff] %vm697, %v628
      %712 = vst.msk [vmem:[#allocation2 + $0x70] sm:$0xff] %vm697, %v630
      %713 = vst.msk [vmem:[#allocation2 + $0x78] sm:$0xff] %vm697, %v632
      %714 = vst.msk [vmem:[#allocation2 + $0x80] sm:$0xff] %vm697, %v634
      %715 = vst.msk [vmem:[#allocation2 + $0x88] sm:$0xff] %vm697, %v636
      %716 = vst.msk [vmem:[#allocation2 + $0x90] sm:$0xff] %vm697, %v638
      %717 = vst.msk [vmem:[#allocation2 + $0x98] sm:$0xff] %vm697, %v640
      %718 = vst.msk [vmem:[#allocation2 + $0xa0] sm:$0xff] %vm697, %v642
      %719 = vst.msk [vmem:[#allocation2 + $0xa8] sm:$0xff] %vm697, %v644
      %720 = vst.msk [vmem:[#allocation2 + $0xb0] sm:$0xff] %vm697, %v646
      %721 = vst.msk [vmem:[#allocation2 + $0xb8] sm:$0xff] %vm697, %v648
      %722 = vst.msk [vmem:[#allocation2 + $0xc0] sm:$0xff] %vm697, %v650
      %723 = vst.msk [vmem:[#allocation2 + $0xc8] sm:$0xff] %vm697, %v652
      %724 = vst.msk [vmem:[#allocation2 + $0xd0] sm:$0xff] %vm697, %v654
      %725 = vst.msk [vmem:[#allocation2 + $0xd8] sm:$0xff] %vm697, %v656
      %726 = vst.msk [vmem:[#allocation2 + $0xe0] sm:$0xff] %vm697, %v658
      %727 = vst.msk [vmem:[#allocation2 + $0xe8] sm:$0xff] %vm697, %v660
      %728 = vst.msk [vmem:[#allocation2 + $0xf0] sm:$0xff] %vm697, %v662
      %729 = vst.msk [vmem:[#allocation2 + $0xf8] sm:$0xff] %vm697, %v664
      %s730 = scalar_lea.vmem %s273, 24
      %v731 = vld [vmem:[%s730] sm:$0xff]
      %v732 = vld [vmem:[%s730 + $0x8] sm:$0xff]
      %v733 = vld [vmem:[%s730 + $0x18] sm:$0xff]
      %v734 = vld [vmem:[%s730 + $0x20] sm:$0xff]
      %v735 = vld [vmem:[%s730 + $0x30] sm:$0xff]
      %v736 = vld [vmem:[%s730 + $0x38] sm:$0xff]
      %v737 = vld [vmem:[%s730 + $0x48] sm:$0xff]
      %v738 = vld [vmem:[%s730 + $0x50] sm:$0xff]
      %v739 = vld [vmem:[%s730 + $0x60] sm:$0xff]
      %v740 = vld [vmem:[%s730 + $0x68] sm:$0xff]
      %v741 = vld [vmem:[%s730 + $0x78] sm:$0xff]
      %v742 = vld [vmem:[%s730 + $0x80] sm:$0xff]
      %v743 = vld [vmem:[%s730 + $0x90] sm:$0xff]
      %v744 = vld [vmem:[%s730 + $0x98] sm:$0xff]
      %v745 = vld [vmem:[%s730 + $0xa8] sm:$0xff]
      %v746 = vld [vmem:[%s730 + $0xb0] sm:$0xff]
      %v747 = vld [vmem:[%s730 + $0xc0] sm:$0xff]
      %v748 = vld [vmem:[%s730 + $0xc8] sm:$0xff]
      %v749 = vld [vmem:[%s730 + $0xd8] sm:$0xff]
      %v750 = vld [vmem:[%s730 + $0xe0] sm:$0xff]
      %v751 = vld [vmem:[%s730 + $0xf0] sm:$0xff]
      %v752 = vld [vmem:[%s730 + $0xf8] sm:$0xff]
      %v753 = vld [vmem:[%s730 + $0x108] sm:$0xff]
      %v754 = vld [vmem:[%s730 + $0x110] sm:$0xff]
      %v755 = vld [vmem:[%s730 + $0x120] sm:$0xff]
      %v756 = vld [vmem:[%s730 + $0x128] sm:$0xff]
      %v757 = vld [vmem:[%s730 + $0x138] sm:$0xff]
      %v758 = vld [vmem:[%s730 + $0x140] sm:$0xff]
      %v759 = vld [vmem:[%s730 + $0x150] sm:$0xff]
      %v760 = vld [vmem:[%s730 + $0x158] sm:$0xff]
      %v761 = vld [vmem:[%s730 + $0x168] sm:$0xff]
      %v762 = vld [vmem:[%s730 + $0x170] sm:$0xff]
      %795 = vrot.lane.b32.xlu0 %v731, 24
      %v796 = vpop.permute.xlu0 %795
      %797 = vrot.lane.b32.xlu0 %v732, 24
      %v798 = vpop.permute.xlu0 %797
      %799 = vrot.lane.b32.xlu0 %v733, 24
      %v800 = vpop.permute.xlu0 %799
      %801 = vrot.lane.b32.xlu0 %v734, 24
      %v802 = vpop.permute.xlu0 %801
      %803 = vrot.lane.b32.xlu0 %v735, 24
      %v804 = vpop.permute.xlu0 %803
      %805 = vrot.lane.b32.xlu0 %v736, 24
      %v806 = vpop.permute.xlu0 %805
      %807 = vrot.lane.b32.xlu0 %v737, 24
      %v808 = vpop.permute.xlu0 %807
      %809 = vrot.lane.b32.xlu0 %v738, 24
      %v810 = vpop.permute.xlu0 %809
      %811 = vrot.lane.b32.xlu0 %v739, 24
      %v812 = vpop.permute.xlu0 %811
      %813 = vrot.lane.b32.xlu0 %v740, 24
      %v814 = vpop.permute.xlu0 %813
      %815 = vrot.lane.b32.xlu0 %v741, 24
      %v816 = vpop.permute.xlu0 %815
      %817 = vrot.lane.b32.xlu0 %v742, 24
      %v818 = vpop.permute.xlu0 %817
      %819 = vrot.lane.b32.xlu0 %v743, 24
      %v820 = vpop.permute.xlu0 %819
      %821 = vrot.lane.b32.xlu0 %v744, 24
      %v822 = vpop.permute.xlu0 %821
      %823 = vrot.lane.b32.xlu0 %v745, 24
      %v824 = vpop.permute.xlu0 %823
      %825 = vrot.lane.b32.xlu0 %v746, 24
      %v826 = vpop.permute.xlu0 %825
      %827 = vrot.lane.b32.xlu0 %v747, 24
      %v828 = vpop.permute.xlu0 %827
      %829 = vrot.lane.b32.xlu0 %v748, 24
      %v830 = vpop.permute.xlu0 %829
      %831 = vrot.lane.b32.xlu0 %v749, 24
      %v832 = vpop.permute.xlu0 %831
      %833 = vrot.lane.b32.xlu0 %v750, 24
      %v834 = vpop.permute.xlu0 %833
      %835 = vrot.lane.b32.xlu0 %v751, 24
      %v836 = vpop.permute.xlu0 %835
      %837 = vrot.lane.b32.xlu0 %v752, 24
      %v838 = vpop.permute.xlu0 %837
      %839 = vrot.lane.b32.xlu0 %v753, 24
      %v840 = vpop.permute.xlu0 %839
      %841 = vrot.lane.b32.xlu0 %v754, 24
      %v842 = vpop.permute.xlu0 %841
      %843 = vrot.lane.b32.xlu0 %v755, 24
      %v844 = vpop.permute.xlu0 %843
      %845 = vrot.lane.b32.xlu0 %v756, 24
      %v846 = vpop.permute.xlu0 %845
      %847 = vrot.lane.b32.xlu0 %v757, 24
      %v848 = vpop.permute.xlu0 %847
      %849 = vrot.lane.b32.xlu0 %v758, 24
      %v850 = vpop.permute.xlu0 %849
      %851 = vrot.lane.b32.xlu0 %v759, 24
      %v852 = vpop.permute.xlu0 %851
      %853 = vrot.lane.b32.xlu0 %v760, 24
      %v854 = vpop.permute.xlu0 %853
      %855 = vrot.lane.b32.xlu0 %v761, 24
      %v856 = vpop.permute.xlu0 %855
      %857 = vrot.lane.b32.xlu0 %v762, 24
      %v858 = vpop.permute.xlu0 %857
      %vm891 = vcmask 261312
      %892 = vst.msk [vmem:[#allocation2] sm:$0xff] %vm891, %v796
      %893 = vst.msk [vmem:[#allocation2 + $0x8] sm:$0xff] %vm891, %v798
      %894 = vst.msk [vmem:[#allocation2 + $0x10] sm:$0xff] %vm891, %v800
      %895 = vst.msk [vmem:[#allocation2 + $0x18] sm:$0xff] %vm891, %v802
      %896 = vst.msk [vmem:[#allocation2 + $0x20] sm:$0xff] %vm891, %v804
      %897 = vst.msk [vmem:[#allocation2 + $0x28] sm:$0xff] %vm891, %v806
      %898 = vst.msk [vmem:[#allocation2 + $0x30] sm:$0xff] %vm891, %v808
      %899 = vst.msk [vmem:[#allocation2 + $0x38] sm:$0xff] %vm891, %v810
      %900 = vst.msk [vmem:[#allocation2 + $0x40] sm:$0xff] %vm891, %v812
      %901 = vst.msk [vmem:[#allocation2 + $0x48] sm:$0xff] %vm891, %v814
      %902 = vst.msk [vmem:[#allocation2 + $0x50] sm:$0xff] %vm891, %v816
      %903 = vst.msk [vmem:[#allocation2 + $0x58] sm:$0xff] %vm891, %v818
      %904 = vst.msk [vmem:[#allocation2 + $0x60] sm:$0xff] %vm891, %v820
      %905 = vst.msk [vmem:[#allocation2 + $0x68] sm:$0xff] %vm891, %v822
      %906 = vst.msk [vmem:[#allocation2 + $0x70] sm:$0xff] %vm891, %v824
      %907 = vst.msk [vmem:[#allocation2 + $0x78] sm:$0xff] %vm891, %v826
      %908 = vst.msk [vmem:[#allocation2 + $0x80] sm:$0xff] %vm891, %v828
      %909 = vst.msk [vmem:[#allocation2 + $0x88] sm:$0xff] %vm891, %v830
      %910 = vst.msk [vmem:[#allocation2 + $0x90] sm:$0xff] %vm891, %v832
      %911 = vst.msk [vmem:[#allocation2 + $0x98] sm:$0xff] %vm891, %v834
      %912 = vst.msk [vmem:[#allocation2 + $0xa0] sm:$0xff] %vm891, %v836
      %913 = vst.msk [vmem:[#allocation2 + $0xa8] sm:$0xff] %vm891, %v838
      %914 = vst.msk [vmem:[#allocation2 + $0xb0] sm:$0xff] %vm891, %v840
      %915 = vst.msk [vmem:[#allocation2 + $0xb8] sm:$0xff] %vm891, %v842
      %916 = vst.msk [vmem:[#allocation2 + $0xc0] sm:$0xff] %vm891, %v844
      %917 = vst.msk [vmem:[#allocation2 + $0xc8] sm:$0xff] %vm891, %v846
      %918 = vst.msk [vmem:[#allocation2 + $0xd0] sm:$0xff] %vm891, %v848
      %919 = vst.msk [vmem:[#allocation2 + $0xd8] sm:$0xff] %vm891, %v850
      %920 = vst.msk [vmem:[#allocation2 + $0xe0] sm:$0xff] %vm891, %v852
      %921 = vst.msk [vmem:[#allocation2 + $0xe8] sm:$0xff] %vm891, %v854
      %922 = vst.msk [vmem:[#allocation2 + $0xf0] sm:$0xff] %vm891, %v856
      %923 = vst.msk [vmem:[#allocation2 + $0xf8] sm:$0xff] %vm891, %v858
      %v924 = vld [vmem:[%s730 + $0x1] sm:$0xff]
      %v925 = vld [vmem:[%s730 + $0x9] sm:$0xff]
      %v926 = vld [vmem:[%s730 + $0x19] sm:$0xff]
      %v927 = vld [vmem:[%s730 + $0x21] sm:$0xff]
      %v928 = vld [vmem:[%s730 + $0x31] sm:$0xff]
      %v929 = vld [vmem:[%s730 + $0x39] sm:$0xff]
      %v930 = vld [vmem:[%s730 + $0x49] sm:$0xff]
      %v931 = vld [vmem:[%s730 + $0x51] sm:$0xff]
      %v932 = vld [vmem:[%s730 + $0x61] sm:$0xff]
      %v933 = vld [vmem:[%s730 + $0x69] sm:$0xff]
      %v934 = vld [vmem:[%s730 + $0x79] sm:$0xff]
      %v935 = vld [vmem:[%s730 + $0x81] sm:$0xff]
      %v936 = vld [vmem:[%s730 + $0x91] sm:$0xff]
      %v937 = vld [vmem:[%s730 + $0x99] sm:$0xff]
      %v938 = vld [vmem:[%s730 + $0xa9] sm:$0xff]
      %v939 = vld [vmem:[%s730 + $0xb1] sm:$0xff]
      %v940 = vld [vmem:[%s730 + $0xc1] sm:$0xff]
      %v941 = vld [vmem:[%s730 + $0xc9] sm:$0xff]
      %v942 = vld [vmem:[%s730 + $0xd9] sm:$0xff]
      %v943 = vld [vmem:[%s730 + $0xe1] sm:$0xff]
      %v944 = vld [vmem:[%s730 + $0xf1] sm:$0xff]
      %v945 = vld [vmem:[%s730 + $0xf9] sm:$0xff]
      %v946 = vld [vmem:[%s730 + $0x109] sm:$0xff]
      %v947 = vld [vmem:[%s730 + $0x111] sm:$0xff]
      %v948 = vld [vmem:[%s730 + $0x121] sm:$0xff]
      %v949 = vld [vmem:[%s730 + $0x129] sm:$0xff]
      %v950 = vld [vmem:[%s730 + $0x139] sm:$0xff]
      %v951 = vld [vmem:[%s730 + $0x141] sm:$0xff]
      %v952 = vld [vmem:[%s730 + $0x151] sm:$0xff]
      %v953 = vld [vmem:[%s730 + $0x159] sm:$0xff]
      %v954 = vld [vmem:[%s730 + $0x169] sm:$0xff]
      %v955 = vld [vmem:[%s730 + $0x171] sm:$0xff]
      %988 = vrot.lane.b32.xlu0 %v924, 32
      %v989 = vpop.permute.xlu0 %988
      %990 = vrot.lane.b32.xlu0 %v925, 32
      %v991 = vpop.permute.xlu0 %990
      %992 = vrot.lane.b32.xlu0 %v926, 32
      %v993 = vpop.permute.xlu0 %992
      %994 = vrot.lane.b32.xlu0 %v927, 32
      %v995 = vpop.permute.xlu0 %994
      %996 = vrot.lane.b32.xlu0 %v928, 32
      %v997 = vpop.permute.xlu0 %996
      %998 = vrot.lane.b32.xlu0 %v929, 32
      %v999 = vpop.permute.xlu0 %998
      %1000 = vrot.lane.b32.xlu0 %v930, 32
      %v1001 = vpop.permute.xlu0 %1000
      %1002 = vrot.lane.b32.xlu0 %v931, 32
      %v1003 = vpop.permute.xlu0 %1002
      %1004 = vrot.lane.b32.xlu0 %v932, 32
      %v1005 = vpop.permute.xlu0 %1004
      %1006 = vrot.lane.b32.xlu0 %v933, 32
      %v1007 = vpop.permute.xlu0 %1006
      %1008 = vrot.lane.b32.xlu0 %v934, 32
      %v1009 = vpop.permute.xlu0 %1008
      %1010 = vrot.lane.b32.xlu0 %v935, 32
      %v1011 = vpop.permute.xlu0 %1010
      %1012 = vrot.lane.b32.xlu0 %v936, 32
      %v1013 = vpop.permute.xlu0 %1012
      %1014 = vrot.lane.b32.xlu0 %v937, 32
      %v1015 = vpop.permute.xlu0 %1014
      %1016 = vrot.lane.b32.xlu0 %v938, 32
      %v1017 = vpop.permute.xlu0 %1016
      %1018 = vrot.lane.b32.xlu0 %v939, 32
      %v1019 = vpop.permute.xlu0 %1018
      %1020 = vrot.lane.b32.xlu0 %v940, 32
      %v1021 = vpop.permute.xlu0 %1020
      %1022 = vrot.lane.b32.xlu0 %v941, 32
      %v1023 = vpop.permute.xlu0 %1022
      %1024 = vrot.lane.b32.xlu0 %v942, 32
      %v1025 = vpop.permute.xlu0 %1024
      %1026 = vrot.lane.b32.xlu0 %v943, 32
      %v1027 = vpop.permute.xlu0 %1026
      %1028 = vrot.lane.b32.xlu0 %v944, 32
      %v1029 = vpop.permute.xlu0 %1028
      %1030 = vrot.lane.b32.xlu0 %v945, 32
      %v1031 = vpop.permute.xlu0 %1030
      %1032 = vrot.lane.b32.xlu0 %v946, 32
      %v1033 = vpop.permute.xlu0 %1032
      %1034 = vrot.lane.b32.xlu0 %v947, 32
      %v1035 = vpop.permute.xlu0 %1034
      %1036 = vrot.lane.b32.xlu0 %v948, 32
      %v1037 = vpop.permute.xlu0 %1036
      %1038 = vrot.lane.b32.xlu0 %v949, 32
      %v1039 = vpop.permute.xlu0 %1038
      %1040 = vrot.lane.b32.xlu0 %v950, 32
      %v1041 = vpop.permute.xlu0 %1040
      %1042 = vrot.lane.b32.xlu0 %v951, 32
      %v1043 = vpop.permute.xlu0 %1042
      %1044 = vrot.lane.b32.xlu0 %v952, 32
      %v1045 = vpop.permute.xlu0 %1044
      %1046 = vrot.lane.b32.xlu0 %v953, 32
      %v1047 = vpop.permute.xlu0 %1046
      %1048 = vrot.lane.b32.xlu0 %v954, 32
      %v1049 = vpop.permute.xlu0 %1048
      %1050 = vrot.lane.b32.xlu0 %v955, 32
      %v1051 = vpop.permute.xlu0 %1050
      %vm1084 = vcmask 326912
      %1085 = vst.msk [vmem:[#allocation2] sm:$0xff] %vm1084, %v989
      %1086 = vst.msk [vmem:[#allocation2 + $0x8] sm:$0xff] %vm1084, %v991
      %1087 = vst.msk [vmem:[#allocation2 + $0x10] sm:$0xff] %vm1084, %v993
      %1088 = vst.msk [vmem:[#allocation2 + $0x18] sm:$0xff] %vm1084, %v995
      %1089 = vst.msk [vmem:[#allocation2 + $0x20] sm:$0xff] %vm1084, %v997
      %1090 = vst.msk [vmem:[#allocation2 + $0x28] sm:$0xff] %vm1084, %v999
      %1091 = vst.msk [vmem:[#allocation2 + $0x30] sm:$0xff] %vm1084, %v1001
      %1092 = vst.msk [vmem:[#allocation2 + $0x38] sm:$0xff] %vm1084, %v1003
      %1093 = vst.msk [vmem:[#allocation2 + $0x40] sm:$0xff] %vm1084, %v1005
      %1094 = vst.msk [vmem:[#allocation2 + $0x48] sm:$0xff] %vm1084, %v1007
      %1095 = vst.msk [vmem:[#allocation2 + $0x50] sm:$0xff] %vm1084, %v1009
      %1096 = vst.msk [vmem:[#allocation2 + $0x58] sm:$0xff] %vm1084, %v1011
      %1097 = vst.msk [vmem:[#allocation2 + $0x60] sm:$0xff] %vm1084, %v1013
      %1098 = vst.msk [vmem:[#allocation2 + $0x68] sm:$0xff] %vm1084, %v1015
      %1099 = vst.msk [vmem:[#allocation2 + $0x70] sm:$0xff] %vm1084, %v1017
      %1100 = vst.msk [vmem:[#allocation2 + $0x78] sm:$0xff] %vm1084, %v1019
      %1101 = vst.msk [vmem:[#allocation2 + $0x80] sm:$0xff] %vm1084, %v1021
      %1102 = vst.msk [vmem:[#allocation2 + $0x88] sm:$0xff] %vm1084, %v1023
      %1103 = vst.msk [vmem:[#allocation2 + $0x90] sm:$0xff] %vm1084, %v1025
      %1104 = vst.msk [vmem:[#allocation2 + $0x98] sm:$0xff] %vm1084, %v1027
      %1105 = vst.msk [vmem:[#allocation2 + $0xa0] sm:$0xff] %vm1084, %v1029
      %1106 = vst.msk [vmem:[#allocation2 + $0xa8] sm:$0xff] %vm1084, %v1031
      %1107 = vst.msk [vmem:[#allocation2 + $0xb0] sm:$0xff] %vm1084, %v1033
      %1108 = vst.msk [vmem:[#allocation2 + $0xb8] sm:$0xff] %vm1084, %v1035
      %1109 = vst.msk [vmem:[#allocation2 + $0xc0] sm:$0xff] %vm1084, %v1037
      %1110 = vst.msk [vmem:[#allocation2 + $0xc8] sm:$0xff] %vm1084, %v1039
      %1111 = vst.msk [vmem:[#allocation2 + $0xd0] sm:$0xff] %vm1084, %v1041
      %1112 = vst.msk [vmem:[#allocation2 + $0xd8] sm:$0xff] %vm1084, %v1043
      %1113 = vst.msk [vmem:[#allocation2 + $0xe0] sm:$0xff] %vm1084, %v1045
      %1114 = vst.msk [vmem:[#allocation2 + $0xe8] sm:$0xff] %vm1084, %v1047
      %1115 = vst.msk [vmem:[#allocation2 + $0xf0] sm:$0xff] %vm1084, %v1049
      %1116 = vst.msk [vmem:[#allocation2 + $0xf8] sm:$0xff] %vm1084, %v1051
      %v1117 = vld [vmem:[%s730 + $0x2] sm:$0xff]
      %v1118 = vld [vmem:[%s730 + $0xa] sm:$0xff]
      %v1119 = vld [vmem:[%s730 + $0x1a] sm:$0xff]
      %v1120 = vld [vmem:[%s730 + $0x22] sm:$0xff]
      %v1121 = vld [vmem:[%s730 + $0x32] sm:$0xff]
      %v1122 = vld [vmem:[%s730 + $0x3a] sm:$0xff]
      %v1123 = vld [vmem:[%s730 + $0x4a] sm:$0xff]
      %v1124 = vld [vmem:[%s730 + $0x52] sm:$0xff]
      %v1125 = vld [vmem:[%s730 + $0x62] sm:$0xff]
      %v1126 = vld [vmem:[%s730 + $0x6a] sm:$0xff]
      %v1127 = vld [vmem:[%s730 + $0x7a] sm:$0xff]
      %v1128 = vld [vmem:[%s730 + $0x82] sm:$0xff]
      %v1129 = vld [vmem:[%s730 + $0x92] sm:$0xff]
      %v1130 = vld [vmem:[%s730 + $0x9a] sm:$0xff]
      %v1131 = vld [vmem:[%s730 + $0xaa] sm:$0xff]
      %v1132 = vld [vmem:[%s730 + $0xb2] sm:$0xff]
      %v1133 = vld [vmem:[%s730 + $0xc2] sm:$0xff]
      %v1134 = vld [vmem:[%s730 + $0xca] sm:$0xff]
      %v1135 = vld [vmem:[%s730 + $0xda] sm:$0xff]
      %v1136 = vld [vmem:[%s730 + $0xe2] sm:$0xff]
      %v1137 = vld [vmem:[%s730 + $0xf2] sm:$0xff]
      %v1138 = vld [vmem:[%s730 + $0xfa] sm:$0xff]
      %v1139 = vld [vmem:[%s730 + $0x10a] sm:$0xff]
      %v1140 = vld [vmem:[%s730 + $0x112] sm:$0xff]
      %v1141 = vld [vmem:[%s730 + $0x122] sm:$0xff]
      %v1142 = vld [vmem:[%s730 + $0x12a] sm:$0xff]
      %v1143 = vld [vmem:[%s730 + $0x13a] sm:$0xff]
      %v1144 = vld [vmem:[%s730 + $0x142] sm:$0xff]
      %v1145 = vld [vmem:[%s730 + $0x152] sm:$0xff]
      %v1146 = vld [vmem:[%s730 + $0x15a] sm:$0xff]
      %v1147 = vld [vmem:[%s730 + $0x16a] sm:$0xff]
      %v1148 = vld [vmem:[%s730 + $0x172] sm:$0xff]
      %1181 = vrot.lane.b32.xlu0 %v1117, 40
      %v1182 = vpop.permute.xlu0 %1181
      %1183 = vrot.lane.b32.xlu0 %v1118, 40
      %v1184 = vpop.permute.xlu0 %1183
      %1185 = vrot.lane.b32.xlu0 %v1119, 40
      %v1186 = vpop.permute.xlu0 %1185
      %1187 = vrot.lane.b32.xlu0 %v1120, 40
      %v1188 = vpop.permute.xlu0 %1187
      %1189 = vrot.lane.b32.xlu0 %v1121, 40
      %v1190 = vpop.permute.xlu0 %1189
      %1191 = vrot.lane.b32.xlu0 %v1122, 40
      %v1192 = vpop.permute.xlu0 %1191
      %1193 = vrot.lane.b32.xlu0 %v1123, 40
      %v1194 = vpop.permute.xlu0 %1193
      %1195 = vrot.lane.b32.xlu0 %v1124, 40
      %v1196 = vpop.permute.xlu0 %1195
      %1197 = vrot.lane.b32.xlu0 %v1125, 40
      %v1198 = vpop.permute.xlu0 %1197
      %1199 = vrot.lane.b32.xlu0 %v1126, 40
      %v1200 = vpop.permute.xlu0 %1199
      %1201 = vrot.lane.b32.xlu0 %v1127, 40
      %v1202 = vpop.permute.xlu0 %1201
      %1203 = vrot.lane.b32.xlu0 %v1128, 40
      %v1204 = vpop.permute.xlu0 %1203
      %1205 = vrot.lane.b32.xlu0 %v1129, 40
      %v1206 = vpop.permute.xlu0 %1205
      %1207 = vrot.lane.b32.xlu0 %v1130, 40
      %v1208 = vpop.permute.xlu0 %1207
      %1209 = vrot.lane.b32.xlu0 %v1131, 40
      %v1210 = vpop.permute.xlu0 %1209
      %1211 = vrot.lane.b32.xlu0 %v1132, 40
      %v1212 = vpop.permute.xlu0 %1211
      %1213 = vrot.lane.b32.xlu0 %v1133, 40
      %v1214 = vpop.permute.xlu0 %1213
      %1215 = vrot.lane.b32.xlu0 %v1134, 40
      %v1216 = vpop.permute.xlu0 %1215
      %1217 = vrot.lane.b32.xlu0 %v1135, 40
      %v1218 = vpop.permute.xlu0 %1217
      %1219 = vrot.lane.b32.xlu0 %v1136, 40
      %v1220 = vpop.permute.xlu0 %1219
      %1221 = vrot.lane.b32.xlu0 %v1137, 40
      %v1222 = vpop.permute.xlu0 %1221
      %1223 = vrot.lane.b32.xlu0 %v1138, 40
      %v1224 = vpop.permute.xlu0 %1223
      %1225 = vrot.lane.b32.xlu0 %v1139, 40
      %v1226 = vpop.permute.xlu0 %1225
      %1227 = vrot.lane.b32.xlu0 %v1140, 40
      %v1228 = vpop.permute.xlu0 %1227
      %1229 = vrot.lane.b32.xlu0 %v1141, 40
      %v1230 = vpop.permute.xlu0 %1229
      %1231 = vrot.lane.b32.xlu0 %v1142, 40
      %v1232 = vpop.permute.xlu0 %1231
      %1233 = vrot.lane.b32.xlu0 %v1143, 40
      %v1234 = vpop.permute.xlu0 %1233
      %1235 = vrot.lane.b32.xlu0 %v1144, 40
      %v1236 = vpop.permute.xlu0 %1235
      %1237 = vrot.lane.b32.xlu0 %v1145, 40
      %v1238 = vpop.permute.xlu0 %1237
      %1239 = vrot.lane.b32.xlu0 %v1146, 40
      %v1240 = vpop.permute.xlu0 %1239
      %1241 = vrot.lane.b32.xlu0 %v1147, 40
      %v1242 = vpop.permute.xlu0 %1241
      %1243 = vrot.lane.b32.xlu0 %v1148, 40
      %v1244 = vpop.permute.xlu0 %1243
      %vm1277 = vcmask 392512
      %1278 = vst.msk [vmem:[#allocation2] sm:$0xff] %vm1277, %v1182
      %1279 = vst.msk [vmem:[#allocation2 + $0x8] sm:$0xff] %vm1277, %v1184
      %1280 = vst.msk [vmem:[#allocation2 + $0x10] sm:$0xff] %vm1277, %v1186
      %1281 = vst.msk [vmem:[#allocation2 + $0x18] sm:$0xff] %vm1277, %v1188
      %1282 = vst.msk [vmem:[#allocation2 + $0x20] sm:$0xff] %vm1277, %v1190
      %1283 = vst.msk [vmem:[#allocation2 + $0x28] sm:$0xff] %vm1277, %v1192
      %1284 = vst.msk [vmem:[#allocation2 + $0x30] sm:$0xff] %vm1277, %v1194
      %1285 = vst.msk [vmem:[#allocation2 + $0x38] sm:$0xff] %vm1277, %v1196
      %1286 = vst.msk [vmem:[#allocation2 + $0x40] sm:$0xff] %vm1277, %v1198
      %1287 = vst.msk [vmem:[#allocation2 + $0x48] sm:$0xff] %vm1277, %v1200
      %1288 = vst.msk [vmem:[#allocation2 + $0x50] sm:$0xff] %vm1277, %v1202
      %1289 = vst.msk [vmem:[#allocation2 + $0x58] sm:$0xff] %vm1277, %v1204
      %1290 = vst.msk [vmem:[#allocation2 + $0x60] sm:$0xff] %vm1277, %v1206
      %1291 = vst.msk [vmem:[#allocation2 + $0x68] sm:$0xff] %vm1277, %v1208
      %1292 = vst.msk [vmem:[#allocation2 + $0x70] sm:$0xff] %vm1277, %v1210
      %1293 = vst.msk [vmem:[#allocation2 + $0x78] sm:$0xff] %vm1277, %v1212
      %1294 = vst.msk [vmem:[#allocation2 + $0x80] sm:$0xff] %vm1277, %v1214
      %1295 = vst.msk [vmem:[#allocation2 + $0x88] sm:$0xff] %vm1277, %v1216
      %1296 = vst.msk [vmem:[#allocation2 + $0x90] sm:$0xff] %vm1277, %v1218
      %1297 = vst.msk [vmem:[#allocation2 + $0x98] sm:$0xff] %vm1277, %v1220
      %1298 = vst.msk [vmem:[#allocation2 + $0xa0] sm:$0xff] %vm1277, %v1222
      %1299 = vst.msk [vmem:[#allocation2 + $0xa8] sm:$0xff] %vm1277, %v1224
      %1300 = vst.msk [vmem:[#allocation2 + $0xb0] sm:$0xff] %vm1277, %v1226
      %1301 = vst.msk [vmem:[#allocation2 + $0xb8] sm:$0xff] %vm1277, %v1228
      %1302 = vst.msk [vmem:[#allocation2 + $0xc0] sm:$0xff] %vm1277, %v1230
      %1303 = vst.msk [vmem:[#allocation2 + $0xc8] sm:$0xff] %vm1277, %v1232
      %1304 = vst.msk [vmem:[#allocation2 + $0xd0] sm:$0xff] %vm1277, %v1234
      %1305 = vst.msk [vmem:[#allocation2 + $0xd8] sm:$0xff] %vm1277, %v1236
      %1306 = vst.msk [vmem:[#allocation2 + $0xe0] sm:$0xff] %vm1277, %v1238
      %1307 = vst.msk [vmem:[#allocation2 + $0xe8] sm:$0xff] %vm1277, %v1240
      %1308 = vst.msk [vmem:[#allocation2 + $0xf0] sm:$0xff] %vm1277, %v1242
      %1309 = vst.msk [vmem:[#allocation2 + $0xf8] sm:$0xff] %vm1277, %v1244
      %s1310 = scalar_lea.vmem %s273, 48
      %v1311 = vld [vmem:[%s1310] sm:$0xff]
      %v1312 = vld [vmem:[%s1310 + $0x8] sm:$0xff]
      %v1313 = vld [vmem:[%s1310 + $0x18] sm:$0xff]
      %v1314 = vld [vmem:[%s1310 + $0x20] sm:$0xff]
      %v1315 = vld [vmem:[%s1310 + $0x30] sm:$0xff]
      %v1316 = vld [vmem:[%s1310 + $0x38] sm:$0xff]
      %v1317 = vld [vmem:[%s1310 + $0x48] sm:$0xff]
      %v1318 = vld [vmem:[%s1310 + $0x50] sm:$0xff]
      %v1319 = vld [vmem:[%s1310 + $0x60] sm:$0xff]
      %v1320 = vld [vmem:[%s1310 + $0x68] sm:$0xff]
      %v1321 = vld [vmem:[%s1310 + $0x78] sm:$0xff]
      %v1322 = vld [vmem:[%s1310 + $0x80] sm:$0xff]
      %v1323 = vld [vmem:[%s1310 + $0x90] sm:$0xff]
      %v1324 = vld [vmem:[%s1310 + $0x98] sm:$0xff]
      %v1325 = vld [vmem:[%s1310 + $0xa8] sm:$0xff]
      %v1326 = vld [vmem:[%s1310 + $0xb0] sm:$0xff]
      %v1327 = vld [vmem:[%s1310 + $0xc0] sm:$0xff]
      %v1328 = vld [vmem:[%s1310 + $0xc8] sm:$0xff]
      %v1329 = vld [vmem:[%s1310 + $0xd8] sm:$0xff]
      %v1330 = vld [vmem:[%s1310 + $0xe0] sm:$0xff]
      %v1331 = vld [vmem:[%s1310 + $0xf0] sm:$0xff]
      %v1332 = vld [vmem:[%s1310 + $0xf8] sm:$0xff]
      %v1333 = vld [vmem:[%s1310 + $0x108] sm:$0xff]
      %v1334 = vld [vmem:[%s1310 + $0x110] sm:$0xff]
      %v1335 = vld [vmem:[%s1310 + $0x120] sm:$0xff]
      %v1336 = vld [vmem:[%s1310 + $0x128] sm:$0xff]
      %v1337 = vld [vmem:[%s1310 + $0x138] sm:$0xff]
      %v1338 = vld [vmem:[%s1310 + $0x140] sm:$0xff]
      %v1339 = vld [vmem:[%s1310 + $0x150] sm:$0xff]
      %v1340 = vld [vmem:[%s1310 + $0x158] sm:$0xff]
      %v1341 = vld [vmem:[%s1310 + $0x168] sm:$0xff]
      %v1342 = vld [vmem:[%s1310 + $0x170] sm:$0xff]
      %1375 = vrot.lane.b32.xlu0 %v1311, 48
      %v1376 = vpop.permute.xlu0 %1375
      %1377 = vrot.lane.b32.xlu0 %v1312, 48
      %v1378 = vpop.permute.xlu0 %1377
      %1379 = vrot.lane.b32.xlu0 %v1313, 48
      %v1380 = vpop.permute.xlu0 %1379
      %1381 = vrot.lane.b32.xlu0 %v1314, 48
      %v1382 = vpop.permute.xlu0 %1381
      %1383 = vrot.lane.b32.xlu0 %v1315, 48
      %v1384 = vpop.permute.xlu0 %1383
      %1385 = vrot.lane.b32.xlu0 %v1316, 48
      %v1386 = vpop.permute.xlu0 %1385
      %1387 = vrot.lane.b32.xlu0 %v1317, 48
      %v1388 = vpop.permute.xlu0 %1387
      %1389 = vrot.lane.b32.xlu0 %v1318, 48
      %v1390 = vpop.permute.xlu0 %1389
      %1391 = vrot.lane.b32.xlu0 %v1319, 48
      %v1392 = vpop.permute.xlu0 %1391
      %1393 = vrot.lane.b32.xlu0 %v1320, 48
      %v1394 = vpop.permute.xlu0 %1393
      %1395 = vrot.lane.b32.xlu0 %v1321, 48
      %v1396 = vpop.permute.xlu0 %1395
      %1397 = vrot.lane.b32.xlu0 %v1322, 48
      %v1398 = vpop.permute.xlu0 %1397
      %1399 = vrot.lane.b32.xlu0 %v1323, 48
      %v1400 = vpop.permute.xlu0 %1399
      %1401 = vrot.lane.b32.xlu0 %v1324, 48
      %v1402 = vpop.permute.xlu0 %1401
      %1403 = vrot.lane.b32.xlu0 %v1325, 48
      %v1404 = vpop.permute.xlu0 %1403
      %1405 = vrot.lane.b32.xlu0 %v1326, 48
      %v1406 = vpop.permute.xlu0 %1405
      %1407 = vrot.lane.b32.xlu0 %v1327, 48
      %v1408 = vpop.permute.xlu0 %1407
      %1409 = vrot.lane.b32.xlu0 %v1328, 48
      %v1410 = vpop.permute.xlu0 %1409
      %1411 = vrot.lane.b32.xlu0 %v1329, 48
      %v1412 = vpop.permute.xlu0 %1411
      %1413 = vrot.lane.b32.xlu0 %v1330, 48
      %v1414 = vpop.permute.xlu0 %1413
      %1415 = vrot.lane.b32.xlu0 %v1331, 48
      %v1416 = vpop.permute.xlu0 %1415
      %1417 = vrot.lane.b32.xlu0 %v1332, 48
      %v1418 = vpop.permute.xlu0 %1417
      %1419 = vrot.lane.b32.xlu0 %v1333, 48
      %v1420 = vpop.permute.xlu0 %1419
      %1421 = vrot.lane.b32.xlu0 %v1334, 48
      %v1422 = vpop.permute.xlu0 %1421
      %1423 = vrot.lane.b32.xlu0 %v1335, 48
      %v1424 = vpop.permute.xlu0 %1423
      %1425 = vrot.lane.b32.xlu0 %v1336, 48
      %v1426 = vpop.permute.xlu0 %1425
      %1427 = vrot.lane.b32.xlu0 %v1337, 48
      %v1428 = vpop.permute.xlu0 %1427
      %1429 = vrot.lane.b32.xlu0 %v1338, 48
      %v1430 = vpop.permute.xlu0 %1429
      %1431 = vrot.lane.b32.xlu0 %v1339, 48
      %v1432 = vpop.permute.xlu0 %1431
      %1433 = vrot.lane.b32.xlu0 %v1340, 48
      %v1434 = vpop.permute.xlu0 %1433
      %1435 = vrot.lane.b32.xlu0 %v1341, 48
      %v1436 = vpop.permute.xlu0 %1435
      %1437 = vrot.lane.b32.xlu0 %v1342, 48
      %v1438 = vpop.permute.xlu0 %1437
      %vm1471 = vcmask 458112
      %1472 = vst.msk [vmem:[#allocation2] sm:$0xff] %vm1471, %v1376
      %1473 = vst.msk [vmem:[#allocation2 + $0x8] sm:$0xff] %vm1471, %v1378
      %1474 = vst.msk [vmem:[#allocation2 + $0x10] sm:$0xff] %vm1471, %v1380
      %1475 = vst.msk [vmem:[#allocation2 + $0x18] sm:$0xff] %vm1471, %v1382
      %1476 = vst.msk [vmem:[#allocation2 + $0x20] sm:$0xff] %vm1471, %v1384
      %1477 = vst.msk [vmem:[#allocation2 + $0x28] sm:$0xff] %vm1471, %v1386
      %1478 = vst.msk [vmem:[#allocation2 + $0x30] sm:$0xff] %vm1471, %v1388
      %1479 = vst.msk [vmem:[#allocation2 + $0x38] sm:$0xff] %vm1471, %v1390
      %1480 = vst.msk [vmem:[#allocation2 + $0x40] sm:$0xff] %vm1471, %v1392
      %1481 = vst.msk [vmem:[#allocation2 + $0x48] sm:$0xff] %vm1471, %v1394
      %1482 = vst.msk [vmem:[#allocation2 + $0x50] sm:$0xff] %vm1471, %v1396
      %1483 = vst.msk [vmem:[#allocation2 + $0x58] sm:$0xff] %vm1471, %v1398
      %1484 = vst.msk [vmem:[#allocation2 + $0x60] sm:$0xff] %vm1471, %v1400
      %1485 = vst.msk [vmem:[#allocation2 + $0x68] sm:$0xff] %vm1471, %v1402
      %1486 = vst.msk [vmem:[#allocation2 + $0x70] sm:$0xff] %vm1471, %v1404
      %1487 = vst.msk [vmem:[#allocation2 + $0x78] sm:$0xff] %vm1471, %v1406
      %1488 = vst.msk [vmem:[#allocation2 + $0x80] sm:$0xff] %vm1471, %v1408
      %1489 = vst.msk [vmem:[#allocation2 + $0x88] sm:$0xff] %vm1471, %v1410
      %1490 = vst.msk [vmem:[#allocation2 + $0x90] sm:$0xff] %vm1471, %v1412
      %1491 = vst.msk [vmem:[#allocation2 + $0x98] sm:$0xff] %vm1471, %v1414
      %1492 = vst.msk [vmem:[#allocation2 + $0xa0] sm:$0xff] %vm1471, %v1416
      %1493 = vst.msk [vmem:[#allocation2 + $0xa8] sm:$0xff] %vm1471, %v1418
      %1494 = vst.msk [vmem:[#allocation2 + $0xb0] sm:$0xff] %vm1471, %v1420
      %1495 = vst.msk [vmem:[#allocation2 + $0xb8] sm:$0xff] %vm1471, %v1422
      %1496 = vst.msk [vmem:[#allocation2 + $0xc0] sm:$0xff] %vm1471, %v1424
      %1497 = vst.msk [vmem:[#allocation2 + $0xc8] sm:$0xff] %vm1471, %v1426
      %1498 = vst.msk [vmem:[#allocation2 + $0xd0] sm:$0xff] %vm1471, %v1428
      %1499 = vst.msk [vmem:[#allocation2 + $0xd8] sm:$0xff] %vm1471, %v1430
      %1500 = vst.msk [vmem:[#allocation2 + $0xe0] sm:$0xff] %vm1471, %v1432
      %1501 = vst.msk [vmem:[#allocation2 + $0xe8] sm:$0xff] %vm1471, %v1434
      %1502 = vst.msk [vmem:[#allocation2 + $0xf0] sm:$0xff] %vm1471, %v1436
      %1503 = vst.msk [vmem:[#allocation2 + $0xf8] sm:$0xff] %vm1471, %v1438
      %v1504 = vld [vmem:[%s1310 + $0x1] sm:$0xff]
      %v1505 = vld [vmem:[%s1310 + $0x9] sm:$0xff]
      %v1506 = vld [vmem:[%s1310 + $0x19] sm:$0xff]
      %v1507 = vld [vmem:[%s1310 + $0x21] sm:$0xff]
      %v1508 = vld [vmem:[%s1310 + $0x31] sm:$0xff]
      %v1509 = vld [vmem:[%s1310 + $0x39] sm:$0xff]
      %v1510 = vld [vmem:[%s1310 + $0x49] sm:$0xff]
      %v1511 = vld [vmem:[%s1310 + $0x51] sm:$0xff]
      %v1512 = vld [vmem:[%s1310 + $0x61] sm:$0xff]
      %v1513 = vld [vmem:[%s1310 + $0x69] sm:$0xff]
      %v1514 = vld [vmem:[%s1310 + $0x79] sm:$0xff]
      %v1515 = vld [vmem:[%s1310 + $0x81] sm:$0xff]
      %v1516 = vld [vmem:[%s1310 + $0x91] sm:$0xff]
      %v1517 = vld [vmem:[%s1310 + $0x99] sm:$0xff]
      %v1518 = vld [vmem:[%s1310 + $0xa9] sm:$0xff]
      %v1519 = vld [vmem:[%s1310 + $0xb1] sm:$0xff]
      %v1520 = vld [vmem:[%s1310 + $0xc1] sm:$0xff]
      %v1521 = vld [vmem:[%s1310 + $0xc9] sm:$0xff]
      %v1522 = vld [vmem:[%s1310 + $0xd9] sm:$0xff]
      %v1523 = vld [vmem:[%s1310 + $0xe1] sm:$0xff]
      %v1524 = vld [vmem:[%s1310 + $0xf1] sm:$0xff]
      %v1525 = vld [vmem:[%s1310 + $0xf9] sm:$0xff]
      %v1526 = vld [vmem:[%s1310 + $0x109] sm:$0xff]
      %v1527 = vld [vmem:[%s1310 + $0x111] sm:$0xff]
      %v1528 = vld [vmem:[%s1310 + $0x121] sm:$0xff]
      %v1529 = vld [vmem:[%s1310 + $0x129] sm:$0xff]
      %v1530 = vld [vmem:[%s1310 + $0x139] sm:$0xff]
      %v1531 = vld [vmem:[%s1310 + $0x141] sm:$0xff]
      %v1532 = vld [vmem:[%s1310 + $0x151] sm:$0xff]
      %v1533 = vld [vmem:[%s1310 + $0x159] sm:$0xff]
      %v1534 = vld [vmem:[%s1310 + $0x169] sm:$0xff]
      %v1535 = vld [vmem:[%s1310 + $0x171] sm:$0xff]
      %1568 = vrot.lane.b32.xlu0 %v1504, 56
      %v1569 = vpop.permute.xlu0 %1568
      %1570 = vrot.lane.b32.xlu0 %v1505, 56
      %v1571 = vpop.permute.xlu0 %1570
      %1572 = vrot.lane.b32.xlu0 %v1506, 56
      %v1573 = vpop.permute.xlu0 %1572
      %1574 = vrot.lane.b32.xlu0 %v1507, 56
      %v1575 = vpop.permute.xlu0 %1574
      %1576 = vrot.lane.b32.xlu0 %v1508, 56
      %v1577 = vpop.permute.xlu0 %1576
      %1578 = vrot.lane.b32.xlu0 %v1509, 56
      %v1579 = vpop.permute.xlu0 %1578
      %1580 = vrot.lane.b32.xlu0 %v1510, 56
      %v1581 = vpop.permute.xlu0 %1580
      %1582 = vrot.lane.b32.xlu0 %v1511, 56
      %v1583 = vpop.permute.xlu0 %1582
      %1584 = vrot.lane.b32.xlu0 %v1512, 56
      %v1585 = vpop.permute.xlu0 %1584
      %1586 = vrot.lane.b32.xlu0 %v1513, 56
      %v1587 = vpop.permute.xlu0 %1586
      %1588 = vrot.lane.b32.xlu0 %v1514, 56
      %v1589 = vpop.permute.xlu0 %1588
      %1590 = vrot.lane.b32.xlu0 %v1515, 56
      %v1591 = vpop.permute.xlu0 %1590
      %1592 = vrot.lane.b32.xlu0 %v1516, 56
      %v1593 = vpop.permute.xlu0 %1592
      %1594 = vrot.lane.b32.xlu0 %v1517, 56
      %v1595 = vpop.permute.xlu0 %1594
      %1596 = vrot.lane.b32.xlu0 %v1518, 56
      %v1597 = vpop.permute.xlu0 %1596
      %1598 = vrot.lane.b32.xlu0 %v1519, 56
      %v1599 = vpop.permute.xlu0 %1598
      %1600 = vrot.lane.b32.xlu0 %v1520, 56
      %v1601 = vpop.permute.xlu0 %1600
      %1602 = vrot.lane.b32.xlu0 %v1521, 56
      %v1603 = vpop.permute.xlu0 %1602
      %1604 = vrot.lane.b32.xlu0 %v1522, 56
      %v1605 = vpop.permute.xlu0 %1604
      %1606 = vrot.lane.b32.xlu0 %v1523, 56
      %v1607 = vpop.permute.xlu0 %1606
      %1608 = vrot.lane.b32.xlu0 %v1524, 56
      %v1609 = vpop.permute.xlu0 %1608
      %1610 = vrot.lane.b32.xlu0 %v1525, 56
      %v1611 = vpop.permute.xlu0 %1610
      %1612 = vrot.lane.b32.xlu0 %v1526, 56
      %v1613 = vpop.permute.xlu0 %1612
      %1614 = vrot.lane.b32.xlu0 %v1527, 56
      %v1615 = vpop.permute.xlu0 %1614
      %1616 = vrot.lane.b32.xlu0 %v1528, 56
      %v1617 = vpop.permute.xlu0 %1616
      %1618 = vrot.lane.b32.xlu0 %v1529, 56
      %v1619 = vpop.permute.xlu0 %1618
      %1620 = vrot.lane.b32.xlu0 %v1530, 56
      %v1621 = vpop.permute.xlu0 %1620
      %1622 = vrot.lane.b32.xlu0 %v1531, 56
      %v1623 = vpop.permute.xlu0 %1622
      %1624 = vrot.lane.b32.xlu0 %v1532, 56
      %v1625 = vpop.permute.xlu0 %1624
      %1626 = vrot.lane.b32.xlu0 %v1533, 56
      %v1627 = vpop.permute.xlu0 %1626
      %1628 = vrot.lane.b32.xlu0 %v1534, 56
      %v1629 = vpop.permute.xlu0 %1628
      %1630 = vrot.lane.b32.xlu0 %v1535, 56
      %v1631 = vpop.permute.xlu0 %1630
      %vm1664 = vcmask 523712
      %1665 = vst.msk [vmem:[#allocation2] sm:$0xff] %vm1664, %v1569
      %1666 = vst.msk [vmem:[#allocation2 + $0x8] sm:$0xff] %vm1664, %v1571
      %1667 = vst.msk [vmem:[#allocation2 + $0x10] sm:$0xff] %vm1664, %v1573
      %1668 = vst.msk [vmem:[#allocation2 + $0x18] sm:$0xff] %vm1664, %v1575
      %1669 = vst.msk [vmem:[#allocation2 + $0x20] sm:$0xff] %vm1664, %v1577
      %1670 = vst.msk [vmem:[#allocation2 + $0x28] sm:$0xff] %vm1664, %v1579
      %1671 = vst.msk [vmem:[#allocation2 + $0x30] sm:$0xff] %vm1664, %v1581
      %1672 = vst.msk [vmem:[#allocation2 + $0x38] sm:$0xff] %vm1664, %v1583
      %1673 = vst.msk [vmem:[#allocation2 + $0x40] sm:$0xff] %vm1664, %v1585
      %1674 = vst.msk [vmem:[#allocation2 + $0x48] sm:$0xff] %vm1664, %v1587
      %1675 = vst.msk [vmem:[#allocation2 + $0x50] sm:$0xff] %vm1664, %v1589
      %1676 = vst.msk [vmem:[#allocation2 + $0x58] sm:$0xff] %vm1664, %v1591
      %1677 = vst.msk [vmem:[#allocation2 + $0x60] sm:$0xff] %vm1664, %v1593
      %1678 = vst.msk [vmem:[#allocation2 + $0x68] sm:$0xff] %vm1664, %v1595
      %1679 = vst.msk [vmem:[#allocation2 + $0x70] sm:$0xff] %vm1664, %v1597
      %1680 = vst.msk [vmem:[#allocation2 + $0x78] sm:$0xff] %vm1664, %v1599
      %1681 = vst.msk [vmem:[#allocation2 + $0x80] sm:$0xff] %vm1664, %v1601
      %1682 = vst.msk [vmem:[#allocation2 + $0x88] sm:$0xff] %vm1664, %v1603
      %1683 = vst.msk [vmem:[#allocation2 + $0x90] sm:$0xff] %vm1664, %v1605
      %1684 = vst.msk [vmem:[#allocation2 + $0x98] sm:$0xff] %vm1664, %v1607
      %1685 = vst.msk [vmem:[#allocation2 + $0xa0] sm:$0xff] %vm1664, %v1609
      %1686 = vst.msk [vmem:[#allocation2 + $0xa8] sm:$0xff] %vm1664, %v1611
      %1687 = vst.msk [vmem:[#allocation2 + $0xb0] sm:$0xff] %vm1664, %v1613
      %1688 = vst.msk [vmem:[#allocation2 + $0xb8] sm:$0xff] %vm1664, %v1615
      %1689 = vst.msk [vmem:[#allocation2 + $0xc0] sm:$0xff] %vm1664, %v1617
      %1690 = vst.msk [vmem:[#allocation2 + $0xc8] sm:$0xff] %vm1664, %v1619
      %1691 = vst.msk [vmem:[#allocation2 + $0xd0] sm:$0xff] %vm1664, %v1621
      %1692 = vst.msk [vmem:[#allocation2 + $0xd8] sm:$0xff] %vm1664, %v1623
      %1693 = vst.msk [vmem:[#allocation2 + $0xe0] sm:$0xff] %vm1664, %v1625
      %1694 = vst.msk [vmem:[#allocation2 + $0xe8] sm:$0xff] %vm1664, %v1627
      %1695 = vst.msk [vmem:[#allocation2 + $0xf0] sm:$0xff] %vm1664, %v1629
      %1696 = vst.msk [vmem:[#allocation2 + $0xf8] sm:$0xff] %vm1664, %v1631
      %v1697 = vld [vmem:[%s1310 + $0x2] sm:$0xff]
      %v1698 = vld [vmem:[%s1310 + $0xa] sm:$0xff]
      %v1699 = vld [vmem:[%s1310 + $0x1a] sm:$0xff]
      %v1700 = vld [vmem:[%s1310 + $0x22] sm:$0xff]
      %v1701 = vld [vmem:[%s1310 + $0x32] sm:$0xff]
      %v1702 = vld [vmem:[%s1310 + $0x3a] sm:$0xff]
      %v1703 = vld [vmem:[%s1310 + $0x4a] sm:$0xff]
      %v1704 = vld [vmem:[%s1310 + $0x52] sm:$0xff]
      %v1705 = vld [vmem:[%s1310 + $0x62] sm:$0xff]
      %v1706 = vld [vmem:[%s1310 + $0x6a] sm:$0xff]
      %v1707 = vld [vmem:[%s1310 + $0x7a] sm:$0xff]
      %v1708 = vld [vmem:[%s1310 + $0x82] sm:$0xff]
      %v1709 = vld [vmem:[%s1310 + $0x92] sm:$0xff]
      %v1710 = vld [vmem:[%s1310 + $0x9a] sm:$0xff]
      %v1711 = vld [vmem:[%s1310 + $0xaa] sm:$0xff]
      %v1712 = vld [vmem:[%s1310 + $0xb2] sm:$0xff]
      %v1713 = vld [vmem:[%s1310 + $0xc2] sm:$0xff]
      %v1714 = vld [vmem:[%s1310 + $0xca] sm:$0xff]
      %v1715 = vld [vmem:[%s1310 + $0xda] sm:$0xff]
      %v1716 = vld [vmem:[%s1310 + $0xe2] sm:$0xff]
      %v1717 = vld [vmem:[%s1310 + $0xf2] sm:$0xff]
      %v1718 = vld [vmem:[%s1310 + $0xfa] sm:$0xff]
      %v1719 = vld [vmem:[%s1310 + $0x10a] sm:$0xff]
      %v1720 = vld [vmem:[%s1310 + $0x112] sm:$0xff]
      %v1721 = vld [vmem:[%s1310 + $0x122] sm:$0xff]
      %v1722 = vld [vmem:[%s1310 + $0x12a] sm:$0xff]
      %v1723 = vld [vmem:[%s1310 + $0x13a] sm:$0xff]
      %v1724 = vld [vmem:[%s1310 + $0x142] sm:$0xff]
      %v1725 = vld [vmem:[%s1310 + $0x152] sm:$0xff]
      %v1726 = vld [vmem:[%s1310 + $0x15a] sm:$0xff]
      %v1727 = vld [vmem:[%s1310 + $0x16a] sm:$0xff]
      %v1728 = vld [vmem:[%s1310 + $0x172] sm:$0xff]
      %1761 = vrot.lane.b32.xlu0 %v1697, 64
      %v1762 = vpop.permute.xlu0 %1761
      %1763 = vrot.lane.b32.xlu0 %v1698, 64
      %v1764 = vpop.permute.xlu0 %1763
      %1765 = vrot.lane.b32.xlu0 %v1699, 64
      %v1766 = vpop.permute.xlu0 %1765
      %1767 = vrot.lane.b32.xlu0 %v1700, 64
      %v1768 = vpop.permute.xlu0 %1767
      %1769 = vrot.lane.b32.xlu0 %v1701, 64
      %v1770 = vpop.permute.xlu0 %1769
      %1771 = vrot.lane.b32.xlu0 %v1702, 64
      %v1772 = vpop.permute.xlu0 %1771
      %1773 = vrot.lane.b32.xlu0 %v1703, 64
      %v1774 = vpop.permute.xlu0 %1773
      %1775 = vrot.lane.b32.xlu0 %v1704, 64
      %v1776 = vpop.permute.xlu0 %1775
      %1777 = vrot.lane.b32.xlu0 %v1705, 64
      %v1778 = vpop.permute.xlu0 %1777
      %1779 = vrot.lane.b32.xlu0 %v1706, 64
      %v1780 = vpop.permute.xlu0 %1779
      %1781 = vrot.lane.b32.xlu0 %v1707, 64
      %v1782 = vpop.permute.xlu0 %1781
      %1783 = vrot.lane.b32.xlu0 %v1708, 64
      %v1784 = vpop.permute.xlu0 %1783
      %1785 = vrot.lane.b32.xlu0 %v1709, 64
      %v1786 = vpop.permute.xlu0 %1785
      %1787 = vrot.lane.b32.xlu0 %v1710, 64
      %v1788 = vpop.permute.xlu0 %1787
      %1789 = vrot.lane.b32.xlu0 %v1711, 64
      %v1790 = vpop.permute.xlu0 %1789
      %1791 = vrot.lane.b32.xlu0 %v1712, 64
      %v1792 = vpop.permute.xlu0 %1791
      %1793 = vrot.lane.b32.xlu0 %v1713, 64
      %v1794 = vpop.permute.xlu0 %1793
      %1795 = vrot.lane.b32.xlu0 %v1714, 64
      %v1796 = vpop.permute.xlu0 %1795
      %1797 = vrot.lane.b32.xlu0 %v1715, 64
      %v1798 = vpop.permute.xlu0 %1797
      %1799 = vrot.lane.b32.xlu0 %v1716, 64
      %v1800 = vpop.permute.xlu0 %1799
      %1801 = vrot.lane.b32.xlu0 %v1717, 64
      %v1802 = vpop.permute.xlu0 %1801
      %1803 = vrot.lane.b32.xlu0 %v1718, 64
      %v1804 = vpop.permute.xlu0 %1803
      %1805 = vrot.lane.b32.xlu0 %v1719, 64
      %v1806 = vpop.permute.xlu0 %1805
      %1807 = vrot.lane.b32.xlu0 %v1720, 64
      %v1808 = vpop.permute.xlu0 %1807
      %1809 = vrot.lane.b32.xlu0 %v1721, 64
      %v1810 = vpop.permute.xlu0 %1809
      %1811 = vrot.lane.b32.xlu0 %v1722, 64
      %v1812 = vpop.permute.xlu0 %1811
      %1813 = vrot.lane.b32.xlu0 %v1723, 64
      %v1814 = vpop.permute.xlu0 %1813
      %1815 = vrot.lane.b32.xlu0 %v1724, 64
      %v1816 = vpop.permute.xlu0 %1815
      %1817 = vrot.lane.b32.xlu0 %v1725, 64
      %v1818 = vpop.permute.xlu0 %1817
      %1819 = vrot.lane.b32.xlu0 %v1726, 64
      %v1820 = vpop.permute.xlu0 %1819
      %1821 = vrot.lane.b32.xlu0 %v1727, 64
      %v1822 = vpop.permute.xlu0 %1821
      %1823 = vrot.lane.b32.xlu0 %v1728, 64
      %v1824 = vpop.permute.xlu0 %1823
      %vm1857 = vcmask 589312
      %1858 = vst.msk [vmem:[#allocation2] sm:$0xff] %vm1857, %v1762
      %1859 = vst.msk [vmem:[#allocation2 + $0x8] sm:$0xff] %vm1857, %v1764
      %1860 = vst.msk [vmem:[#allocation2 + $0x10] sm:$0xff] %vm1857, %v1766
      %1861 = vst.msk [vmem:[#allocation2 + $0x18] sm:$0xff] %vm1857, %v1768
      %1862 = vst.msk [vmem:[#allocation2 + $0x20] sm:$0xff] %vm1857, %v1770
      %1863 = vst.msk [vmem:[#allocation2 + $0x28] sm:$0xff] %vm1857, %v1772
      %1864 = vst.msk [vmem:[#allocation2 + $0x30] sm:$0xff] %vm1857, %v1774
      %1865 = vst.msk [vmem:[#allocation2 + $0x38] sm:$0xff] %vm1857, %v1776
      %1866 = vst.msk [vmem:[#allocation2 + $0x40] sm:$0xff] %vm1857, %v1778
      %1867 = vst.msk [vmem:[#allocation2 + $0x48] sm:$0xff] %vm1857, %v1780
      %1868 = vst.msk [vmem:[#allocation2 + $0x50] sm:$0xff] %vm1857, %v1782
      %1869 = vst.msk [vmem:[#allocation2 + $0x58] sm:$0xff] %vm1857, %v1784
      %1870 = vst.msk [vmem:[#allocation2 + $0x60] sm:$0xff] %vm1857, %v1786
      %1871 = vst.msk [vmem:[#allocation2 + $0x68] sm:$0xff] %vm1857, %v1788
      %1872 = vst.msk [vmem:[#allocation2 + $0x70] sm:$0xff] %vm1857, %v1790
      %1873 = vst.msk [vmem:[#allocation2 + $0x78] sm:$0xff] %vm1857, %v1792
      %1874 = vst.msk [vmem:[#allocation2 + $0x80] sm:$0xff] %vm1857, %v1794
      %1875 = vst.msk [vmem:[#allocation2 + $0x88] sm:$0xff] %vm1857, %v1796
      %1876 = vst.msk [vmem:[#allocation2 + $0x90] sm:$0xff] %vm1857, %v1798
      %1877 = vst.msk [vmem:[#allocation2 + $0x98] sm:$0xff] %vm1857, %v1800
      %1878 = vst.msk [vmem:[#allocation2 + $0xa0] sm:$0xff] %vm1857, %v1802
      %1879 = vst.msk [vmem:[#allocation2 + $0xa8] sm:$0xff] %vm1857, %v1804
      %1880 = vst.msk [vmem:[#allocation2 + $0xb0] sm:$0xff] %vm1857, %v1806
      %1881 = vst.msk [vmem:[#allocation2 + $0xb8] sm:$0xff] %vm1857, %v1808
      %1882 = vst.msk [vmem:[#allocation2 + $0xc0] sm:$0xff] %vm1857, %v1810
      %1883 = vst.msk [vmem:[#allocation2 + $0xc8] sm:$0xff] %vm1857, %v1812
      %1884 = vst.msk [vmem:[#allocation2 + $0xd0] sm:$0xff] %vm1857, %v1814
      %1885 = vst.msk [vmem:[#allocation2 + $0xd8] sm:$0xff] %vm1857, %v1816
      %1886 = vst.msk [vmem:[#allocation2 + $0xe0] sm:$0xff] %vm1857, %v1818
      %1887 = vst.msk [vmem:[#allocation2 + $0xe8] sm:$0xff] %vm1857, %v1820
      %1888 = vst.msk [vmem:[#allocation2 + $0xf0] sm:$0xff] %vm1857, %v1822
      %1889 = vst.msk [vmem:[#allocation2 + $0xf8] sm:$0xff] %vm1857, %v1824
      %v1890 = vld [vmem:[#allocation2] sm:$0xff]
      %v1891 = vld [vmem:[#allocation2 + $0x8] sm:$0xff]
      %v1892 = vld [vmem:[#allocation2 + $0x10] sm:$0xff]
      %v1893 = vld [vmem:[#allocation2 + $0x18] sm:$0xff]
      %v1894 = vld [vmem:[#allocation2 + $0x20] sm:$0xff]
      %v1895 = vld [vmem:[#allocation2 + $0x28] sm:$0xff]
      %v1896 = vld [vmem:[#allocation2 + $0x30] sm:$0xff]
      %v1897 = vld [vmem:[#allocation2 + $0x38] sm:$0xff]
      %v1898 = vld [vmem:[#allocation2 + $0x40] sm:$0xff]
      %v1899 = vld [vmem:[#allocation2 + $0x48] sm:$0xff]
      %v1900 = vld [vmem:[#allocation2 + $0x50] sm:$0xff]
      %v1901 = vld [vmem:[#allocation2 + $0x58] sm:$0xff]
      %v1902 = vld [vmem:[#allocation2 + $0x60] sm:$0xff]
      %v1903 = vld [vmem:[#allocation2 + $0x68] sm:$0xff]
      %v1904 = vld [vmem:[#allocation2 + $0x70] sm:$0xff]
      %v1905 = vld [vmem:[#allocation2 + $0x78] sm:$0xff]
      %v1906 = vld [vmem:[#allocation2 + $0x80] sm:$0xff]
      %v1907 = vld [vmem:[#allocation2 + $0x88] sm:$0xff]
      %v1908 = vld [vmem:[#allocation2 + $0x90] sm:$0xff]
      %v1909 = vld [vmem:[#allocation2 + $0x98] sm:$0xff]
      %v1910 = vld [vmem:[#allocation2 + $0xa0] sm:$0xff]
      %v1911 = vld [vmem:[#allocation2 + $0xa8] sm:$0xff]
      %v1912 = vld [vmem:[#allocation2 + $0xb0] sm:$0xff]
      %v1913 = vld [vmem:[#allocation2 + $0xb8] sm:$0xff]
      %v1914 = vld [vmem:[#allocation2 + $0xc0] sm:$0xff]
      %v1915 = vld [vmem:[#allocation2 + $0xc8] sm:$0xff]
      %v1916 = vld [vmem:[#allocation2 + $0xd0] sm:$0xff]
      %v1917 = vld [vmem:[#allocation2 + $0xd8] sm:$0xff]
      %v1918 = vld [vmem:[#allocation2 + $0xe0] sm:$0xff]
      %v1919 = vld [vmem:[#allocation2 + $0xe8] sm:$0xff]
      %v1920 = vld [vmem:[#allocation2 + $0xf0] sm:$0xff]
      %v1921 = vld [vmem:[#allocation2 + $0xf8] sm:$0xff]
      %v1922 = vld [vmem:[%s1] sm:$0xff]
      %v1923 = vld [vmem:[%s1 + $0x8] sm:$0xff]
      %v1924 = vld [vmem:[%s1 + $0x10] sm:$0xff]
      %v1925 = vld [vmem:[%s1 + $0x18] sm:$0xff]
      %v1926 = vld [vmem:[%s1 + $0x20] sm:$0xff]
      %v1927 = vld [vmem:[%s1 + $0x28] sm:$0xff]
      %v1928 = vld [vmem:[%s1 + $0x30] sm:$0xff]
      %v1929 = vld [vmem:[%s1 + $0x38] sm:$0xff]
      %v1930 = vld [vmem:[%s1 + $0x40] sm:$0xff]
      %v1931 = vld [vmem:[%s2] sm:$0x1]
      %v1933 = vperm.slane %v1931, 0
      %vm1935 = vcmask 588800
      %v1937 = vsel %vm1935, %v1890, 0
      %v1940 = vsel %vm1935, %v1891, 0
      %v1943 = vsel %vm1935, %v1892, 0
      %v1946 = vsel %vm1935, %v1893, 0
      %v1949 = vsel %vm1935, %v1894, 0
      %v1952 = vsel %vm1935, %v1895, 0
      %v1955 = vsel %vm1935, %v1896, 0
      %v1958 = vsel %vm1935, %v1897, 0
      %v1961 = vsel %vm1935, %v1898, 0
      %v1964 = vsel %vm1935, %v1899, 0
      %v1967 = vsel %vm1935, %v1900, 0
      %v1970 = vsel %vm1935, %v1901, 0
      %v1973 = vsel %vm1935, %v1902, 0
      %v1976 = vsel %vm1935, %v1903, 0
      %v1979 = vsel %vm1935, %v1904, 0
      %v1982 = vsel %vm1935, %v1905, 0
      %v1985 = vsel %vm1935, %v1906, 0
      %v1988 = vsel %vm1935, %v1907, 0
      %v1991 = vsel %vm1935, %v1908, 0
      %v1994 = vsel %vm1935, %v1909, 0
      %v1997 = vsel %vm1935, %v1910, 0
      %v2000 = vsel %vm1935, %v1911, 0
      %v2003 = vsel %vm1935, %v1912, 0
      %v2006 = vsel %vm1935, %v1913, 0
      %v2009 = vsel %vm1935, %v1914, 0
      %v2012 = vsel %vm1935, %v1915, 0
      %v2015 = vsel %vm1935, %v1916, 0
      %v2018 = vsel %vm1935, %v1917, 0
      %v2021 = vsel %vm1935, %v1918, 0
      %v2024 = vsel %vm1935, %v1919, 0
      %v2027 = vsel %vm1935, %v1920, 0
      %v2030 = vsel %vm1935, %v1921, 0
      %2032 = vmatpush.msra.mxu0 0.0
      %2033 = vmatpush.msra.mxu0 0.0
      %2034 = vmatpush.msra.mxu0 0.0
      %2035 = vmatpush.msra.mxu0 0.0
      %2036 = vmatpush.msra.mxu0 0.0
      %2037 = vmatpush.msra.mxu0 0.0
      %2038 = vmatpush.msra.mxu0 0.0
      %2039 = vmatpush.msra.mxu0 %v1930
      %2040 = vmatpush.msra.mxu0 %v1929
      %2041 = vmatpush.msra.mxu0 %v1928
      %2042 = vmatpush.msra.mxu0 %v1927
      %2043 = vmatpush.msra.mxu0 %v1926
      %2044 = vmatpush.msra.mxu0 %v1925
      %2045 = vmatpush.msra.mxu0 %v1924
      %2046 = vmatpush.msra.mxu0 %v1923
      %2047 = vmatpush.msra.mxu0 %v1922
      %2048 = vmatmul.f32.gmra.mxu0 %v1937
      %v2049 = vpop.f32.mrf.mxu0
      %v2050 = vadd.f32 %v1933, %v2049
      %2051 = vmatmul.f32.gmra.mxu0 %v1940
      %v2052 = vpop.f32.mrf.mxu0
      %v2053 = vadd.f32 %v1933, %v2052
      %2054 = vmatmul.f32.gmra.mxu0 %v1943
      %v2055 = vpop.f32.mrf.mxu0
      %v2056 = vadd.f32 %v1933, %v2055
      %2057 = vmatmul.f32.gmra.mxu0 %v1946
      %v2058 = vpop.f32.mrf.mxu0
      %v2059 = vadd.f32 %v1933, %v2058
      %2060 = vmatmul.f32.gmra.mxu0 %v1949
      %v2061 = vpop.f32.mrf.mxu0
      %v2062 = vadd.f32 %v1933, %v2061
      %2063 = vmatmul.f32.gmra.mxu0 %v1952
      %v2064 = vpop.f32.mrf.mxu0
      %v2065 = vadd.f32 %v1933, %v2064
      %2066 = vmatmul.f32.gmra.mxu0 %v1955
      %v2067 = vpop.f32.mrf.mxu0
      %v2068 = vadd.f32 %v1933, %v2067
      %2069 = vmatmul.f32.gmra.mxu0 %v1958
      %v2070 = vpop.f32.mrf.mxu0
      %v2071 = vadd.f32 %v1933, %v2070
      %2072 = vmatmul.f32.gmra.mxu0 %v1961
      %v2073 = vpop.f32.mrf.mxu0
      %v2074 = vadd.f32 %v1933, %v2073
      %2075 = vmatmul.f32.gmra.mxu0 %v1964
      %v2076 = vpop.f32.mrf.mxu0
      %v2077 = vadd.f32 %v1933, %v2076
      %2078 = vmatmul.f32.gmra.mxu0 %v1967
      %v2079 = vpop.f32.mrf.mxu0
      %v2080 = vadd.f32 %v1933, %v2079
      %2081 = vmatmul.f32.gmra.mxu0 %v1970
      %v2082 = vpop.f32.mrf.mxu0
      %v2083 = vadd.f32 %v1933, %v2082
      %2084 = vmatmul.f32.gmra.mxu0 %v1973
      %v2085 = vpop.f32.mrf.mxu0
      %v2086 = vadd.f32 %v1933, %v2085
      %2087 = vmatmul.f32.gmra.mxu0 %v1976
      %v2088 = vpop.f32.mrf.mxu0
      %v2089 = vadd.f32 %v1933, %v2088
      %2090 = vmatmul.f32.gmra.mxu0 %v1979
      %v2091 = vpop.f32.mrf.mxu0
      %v2092 = vadd.f32 %v1933, %v2091
      %2093 = vmatmul.f32.gmra.mxu0 %v1982
      %v2094 = vpop.f32.mrf.mxu0
      %v2095 = vadd.f32 %v1933, %v2094
      %2096 = vmatmul.f32.gmra.mxu0 %v1985
      %v2097 = vpop.f32.mrf.mxu0
      %v2098 = vadd.f32 %v1933, %v2097
      %2099 = vmatmul.f32.gmra.mxu0 %v1988
      %v2100 = vpop.f32.mrf.mxu0
      %v2101 = vadd.f32 %v1933, %v2100
      %2102 = vmatmul.f32.gmra.mxu0 %v1991
      %v2103 = vpop.f32.mrf.mxu0
      %v2104 = vadd.f32 %v1933, %v2103
      %2105 = vmatmul.f32.gmra.mxu0 %v1994
      %v2106 = vpop.f32.mrf.mxu0
      %v2107 = vadd.f32 %v1933, %v2106
      %2108 = vmatmul.f32.gmra.mxu0 %v1997
      %v2109 = vpop.f32.mrf.mxu0
      %v2110 = vadd.f32 %v1933, %v2109
      %2111 = vmatmul.f32.gmra.mxu0 %v2000
      %v2112 = vpop.f32.mrf.mxu0
      %v2113 = vadd.f32 %v1933, %v2112
      %2114 = vmatmul.f32.gmra.mxu0 %v2003
      %v2115 = vpop.f32.mrf.mxu0
      %v2116 = vadd.f32 %v1933, %v2115
      %2117 = vmatmul.f32.gmra.mxu0 %v2006
      %v2118 = vpop.f32.mrf.mxu0
      %v2119 = vadd.f32 %v1933, %v2118
      %2120 = vmatmul.f32.gmra.mxu0 %v2009
      %v2121 = vpop.f32.mrf.mxu0
      %v2122 = vadd.f32 %v1933, %v2121
      %2123 = vmatmul.f32.gmra.mxu0 %v2012
      %v2124 = vpop.f32.mrf.mxu0
      %v2125 = vadd.f32 %v1933, %v2124
      %2126 = vmatmul.f32.gmra.mxu0 %v2015
      %v2127 = vpop.f32.mrf.mxu0
      %v2128 = vadd.f32 %v1933, %v2127
      %2129 = vmatmul.f32.gmra.mxu0 %v2018
      %v2130 = vpop.f32.mrf.mxu0
      %v2131 = vadd.f32 %v1933, %v2130
      %2132 = vmatmul.f32.gmra.mxu0 %v2021
      %v2133 = vpop.f32.mrf.mxu0
      %v2134 = vadd.f32 %v1933, %v2133
      %2135 = vmatmul.f32.gmra.mxu0 %v2024
      %v2136 = vpop.f32.mrf.mxu0
      %v2137 = vadd.f32 %v1933, %v2136
      %2138 = vmatmul.f32.gmra.mxu0 %v2027
      %v2139 = vpop.f32.mrf.mxu0
      %v2140 = vadd.f32 %v1933, %v2139
      %2141 = vmatmul.f32.gmra.mxu0 %v2030
      %v2142 = vpop.f32.mrf.mxu0
      %v2143 = vadd.f32 %v1933, %v2142
      %2144 = vdwg.mxu0
      %v2145 = vmax.f32 %v2050, 0.0
      %v2146 = vmax.f32 %v2053, 0.0
      %v2147 = vmax.f32 %v2056, 0.0
      %v2148 = vmax.f32 %v2059, 0.0
      %v2149 = vmax.f32 %v2062, 0.0
      %v2150 = vmax.f32 %v2065, 0.0
      %v2151 = vmax.f32 %v2068, 0.0
      %v2152 = vmax.f32 %v2071, 0.0
      %v2153 = vmax.f32 %v2074, 0.0
      %v2154 = vmax.f32 %v2077, 0.0
      %v2155 = vmax.f32 %v2080, 0.0
      %v2156 = vmax.f32 %v2083, 0.0
      %v2157 = vmax.f32 %v2086, 0.0
      %v2158 = vmax.f32 %v2089, 0.0
      %v2159 = vmax.f32 %v2092, 0.0
      %v2160 = vmax.f32 %v2095, 0.0
      %v2161 = vmax.f32 %v2098, 0.0
      %v2162 = vmax.f32 %v2101, 0.0
      %v2163 = vmax.f32 %v2104, 0.0
      %v2164 = vmax.f32 %v2107, 0.0
      %v2165 = vmax.f32 %v2110, 0.0
      %v2166 = vmax.f32 %v2113, 0.0
      %v2167 = vmax.f32 %v2116, 0.0
      %v2168 = vmax.f32 %v2119, 0.0
      %v2169 = vmax.f32 %v2122, 0.0
      %v2170 = vmax.f32 %v2125, 0.0
      %v2171 = vmax.f32 %v2128, 0.0
      %v2172 = vmax.f32 %v2131, 0.0
      %v2173 = vmax.f32 %v2134, 0.0
      %v2174 = vmax.f32 %v2137, 0.0
      %v2175 = vmax.f32 %v2140, 0.0
      %v2176 = vmax.f32 %v2143, 0.0
      %2177 = vst.msk [vmem:[#allocation3] sm:$0xff] %vm311, 0.0
      %2178 = vst.msk [vmem:[#allocation3 + $0x8] sm:$0xff] %vm311, 0.0
      %vm2179 = vcmask 58368
      %2180 = vst.msk [vmem:[#allocation3 + $0x10] sm:$0x3] %vm2179, 0.0
      %s2181 = scalar_lea.vmem [#allocation3], 408
      %2182 = vst.msk [vmem:[%s2181] sm:$0xff] %vm311, 0.0
      %2183 = vst.msk [vmem:[%s2181 + $0x8] sm:$0xff] %vm311, 0.0
      %2184 = vst.msk [vmem:[%s2181 + $0x10] sm:$0x3] %vm2179, 0.0
      %s2185 = scalar_lea.vmem [#allocation3], 24
      %vm2186 = vcmask 57344
      %2187 = vst.msk [vmem:[%s2185] sm:$0x1] %vm2186, 0.0
      %2188 = vst.msk [vmem:[%s2185 + $0x18] sm:$0x1] %vm2186, 0.0
      %2189 = vst.msk [vmem:[%s2185 + $0x30] sm:$0x1] %vm2186, 0.0
      %2190 = vst.msk [vmem:[%s2185 + $0x48] sm:$0x1] %vm2186, 0.0
      %2191 = vst.msk [vmem:[%s2185 + $0x60] sm:$0x1] %vm2186, 0.0
      %2192 = vst.msk [vmem:[%s2185 + $0x78] sm:$0x1] %vm2186, 0.0
      %2193 = vst.msk [vmem:[%s2185 + $0x90] sm:$0x1] %vm2186, 0.0
      %2194 = vst.msk [vmem:[%s2185 + $0xa8] sm:$0x1] %vm2186, 0.0
      %2195 = vst.msk [vmem:[%s2185 + $0xc0] sm:$0x1] %vm2186, 0.0
      %2196 = vst.msk [vmem:[%s2185 + $0xd8] sm:$0x1] %vm2186, 0.0
      %2197 = vst.msk [vmem:[%s2185 + $0xf0] sm:$0x1] %vm2186, 0.0
      %2198 = vst.msk [vmem:[%s2185 + $0x108] sm:$0x1] %vm2186, 0.0
      %2199 = vst.msk [vmem:[%s2185 + $0x120] sm:$0x1] %vm2186, 0.0
      %2200 = vst.msk [vmem:[%s2185 + $0x138] sm:$0x1] %vm2186, 0.0
      %2201 = vst.msk [vmem:[%s2185 + $0x150] sm:$0x1] %vm2186, 0.0
      %2202 = vst.msk [vmem:[%s2185 + $0x168] sm:$0x1] %vm2186, 0.0
      %2203 = vst.msk [vmem:[%s2185 + $0x11] sm:$0x1] %vm2186, 0.0
      %2204 = vst.msk [vmem:[%s2185 + $0x29] sm:$0x1] %vm2186, 0.0
      %2205 = vst.msk [vmem:[%s2185 + $0x41] sm:$0x1] %vm2186, 0.0
      %2206 = vst.msk [vmem:[%s2185 + $0x59] sm:$0x1] %vm2186, 0.0
      %2207 = vst.msk [vmem:[%s2185 + $0x71] sm:$0x1] %vm2186, 0.0
      %2208 = vst.msk [vmem:[%s2185 + $0x89] sm:$0x1] %vm2186, 0.0
      %2209 = vst.msk [vmem:[%s2185 + $0xa1] sm:$0x1] %vm2186, 0.0
      %2210 = vst.msk [vmem:[%s2185 + $0xb9] sm:$0x1] %vm2186, 0.0
      %2211 = vst.msk [vmem:[%s2185 + $0xd1] sm:$0x1] %vm2186, 0.0
      %2212 = vst.msk [vmem:[%s2185 + $0xe9] sm:$0x1] %vm2186, 0.0
      %2213 = vst.msk [vmem:[%s2185 + $0x101] sm:$0x1] %vm2186, 0.0
      %2214 = vst.msk [vmem:[%s2185 + $0x119] sm:$0x1] %vm2186, 0.0
      %2215 = vst.msk [vmem:[%s2185 + $0x131] sm:$0x1] %vm2186, 0.0
      %2216 = vst.msk [vmem:[%s2185 + $0x149] sm:$0x1] %vm2186, 0.0
      %2217 = vst.msk [vmem:[%s2185 + $0x161] sm:$0x1] %vm2186, 0.0
      %2218 = vst.msk [vmem:[%s2185 + $0x179] sm:$0x1] %vm2186, 0.0
      %2219 = vst.msk [vmem:[%s2185 + $0x1] sm:$0xff] %vm311, %v2145
      %2220 = vst.msk [vmem:[%s2185 + $0x9] sm:$0xff] %vm311, %v2146
      %2221 = vst.msk [vmem:[%s2185 + $0x19] sm:$0xff] %vm311, %v2147
      %2222 = vst.msk [vmem:[%s2185 + $0x21] sm:$0xff] %vm311, %v2148
      %2223 = vst.msk [vmem:[%s2185 + $0x31] sm:$0xff] %vm311, %v2149
      %2224 = vst.msk [vmem:[%s2185 + $0x39] sm:$0xff] %vm311, %v2150
      %2225 = vst.msk [vmem:[%s2185 + $0x49] sm:$0xff] %vm311, %v2151
      %2226 = vst.msk [vmem:[%s2185 + $0x51] sm:$0xff] %vm311, %v2152
      %2227 = vst.msk [vmem:[%s2185 + $0x61] sm:$0xff] %vm311, %v2153
      %2228 = vst.msk [vmem:[%s2185 + $0x69] sm:$0xff] %vm311, %v2154
      %2229 = vst.msk [vmem:[%s2185 + $0x79] sm:$0xff] %vm311, %v2155
      %2230 = vst.msk [vmem:[%s2185 + $0x81] sm:$0xff] %vm311, %v2156
      %2231 = vst.msk [vmem:[%s2185 + $0x91] sm:$0xff] %vm311, %v2157
      %2232 = vst.msk [vmem:[%s2185 + $0x99] sm:$0xff] %vm311, %v2158
      %2233 = vst.msk [vmem:[%s2185 + $0xa9] sm:$0xff] %vm311, %v2159
      %2234 = vst.msk [vmem:[%s2185 + $0xb1] sm:$0xff] %vm311, %v2160
      %2235 = vst.msk [vmem:[%s2185 + $0xc1] sm:$0xff] %vm311, %v2161
      %2236 = vst.msk [vmem:[%s2185 + $0xc9] sm:$0xff] %vm311, %v2162
      %2237 = vst.msk [vmem:[%s2185 + $0xd9] sm:$0xff] %vm311, %v2163
      %2238 = vst.msk [vmem:[%s2185 + $0xe1] sm:$0xff] %vm311, %v2164
      %2239 = vst.msk [vmem:[%s2185 + $0xf1] sm:$0xff] %vm311, %v2165
      %2240 = vst.msk [vmem:[%s2185 + $0xf9] sm:$0xff] %vm311, %v2166
      %2241 = vst.msk [vmem:[%s2185 + $0x109] sm:$0xff] %vm311, %v2167
      %2242 = vst.msk [vmem:[%s2185 + $0x111] sm:$0xff] %vm311, %v2168
      %2243 = vst.msk [vmem:[%s2185 + $0x121] sm:$0xff] %vm311, %v2169
      %2244 = vst.msk [vmem:[%s2185 + $0x129] sm:$0xff] %vm311, %v2170
      %2245 = vst.msk [vmem:[%s2185 + $0x139] sm:$0xff] %vm311, %v2171
      %2246 = vst.msk [vmem:[%s2185 + $0x141] sm:$0xff] %vm311, %v2172
      %2247 = vst.msk [vmem:[%s2185 + $0x151] sm:$0xff] %vm311, %v2173
      %2248 = vst.msk [vmem:[%s2185 + $0x159] sm:$0xff] %vm311, %v2174
      %2249 = vst.msk [vmem:[%s2185 + $0x169] sm:$0xff] %vm311, %v2175
      %2250 = vst.msk [vmem:[%s2185 + $0x171] sm:$0xff] %vm311, %v2176
      %v2251 = vld [vmem:[#allocation3] sm:$0xff]
      %v2252 = vld [vmem:[#allocation3 + $0x8] sm:$0xff]
      %v2253 = vld [vmem:[#allocation3 + $0x18] sm:$0xff]
      %v2254 = vld [vmem:[#allocation3 + $0x20] sm:$0xff]
      %v2255 = vld [vmem:[#allocation3 + $0x30] sm:$0xff]
      %v2256 = vld [vmem:[#allocation3 + $0x38] sm:$0xff]
      %v2257 = vld [vmem:[#allocation3 + $0x48] sm:$0xff]
      %v2258 = vld [vmem:[#allocation3 + $0x50] sm:$0xff]
      %v2259 = vld [vmem:[#allocation3 + $0x60] sm:$0xff]
      %v2260 = vld [vmem:[#allocation3 + $0x68] sm:$0xff]
      %v2261 = vld [vmem:[#allocation3 + $0x78] sm:$0xff]
      %v2262 = vld [vmem:[#allocation3 + $0x80] sm:$0xff]
      %v2263 = vld [vmem:[#allocation3 + $0x90] sm:$0xff]
      %v2264 = vld [vmem:[#allocation3 + $0x98] sm:$0xff]
      %v2265 = vld [vmem:[#allocation3 + $0xa8] sm:$0xff]
      %v2266 = vld [vmem:[#allocation3 + $0xb0] sm:$0xff]
      %v2267 = vld [vmem:[#allocation3 + $0xc0] sm:$0xff]
      %v2268 = vld [vmem:[#allocation3 + $0xc8] sm:$0xff]
      %v2269 = vld [vmem:[#allocation3 + $0xd8] sm:$0xff]
      %v2270 = vld [vmem:[#allocation3 + $0xe0] sm:$0xff]
      %v2271 = vld [vmem:[#allocation3 + $0xf0] sm:$0xff]
      %v2272 = vld [vmem:[#allocation3 + $0xf8] sm:$0xff]
      %v2273 = vld [vmem:[#allocation3 + $0x108] sm:$0xff]
      %v2274 = vld [vmem:[#allocation3 + $0x110] sm:$0xff]
      %v2275 = vld [vmem:[#allocation3 + $0x120] sm:$0xff]
      %v2276 = vld [vmem:[#allocation3 + $0x128] sm:$0xff]
      %v2277 = vld [vmem:[#allocation3 + $0x138] sm:$0xff]
      %v2278 = vld [vmem:[#allocation3 + $0x140] sm:$0xff]
      %v2279 = vld [vmem:[#allocation3 + $0x150] sm:$0xff]
      %v2280 = vld [vmem:[#allocation3 + $0x158] sm:$0xff]
      %v2281 = vld [vmem:[#allocation3 + $0x168] sm:$0xff]
      %v2282 = vld [vmem:[#allocation3 + $0x170] sm:$0xff]
      %2283 = vst.msk [vmem:[#allocation2] sm:$0xff] %vm311, %v2251
      %2284 = vst.msk [vmem:[#allocation2 + $0x8] sm:$0xff] %vm311, %v2252
      %2285 = vst.msk [vmem:[#allocation2 + $0x10] sm:$0xff] %vm311, %v2253
      %2286 = vst.msk [vmem:[#allocation2 + $0x18] sm:$0xff] %vm311, %v2254
      %2287 = vst.msk [vmem:[#allocation2 + $0x20] sm:$0xff] %vm311, %v2255
      %2288 = vst.msk [vmem:[#allocation2 + $0x28] sm:$0xff] %vm311, %v2256
      %2289 = vst.msk [vmem:[#allocation2 + $0x30] sm:$0xff] %vm311, %v2257
      %2290 = vst.msk [vmem:[#allocation2 + $0x38] sm:$0xff] %vm311, %v2258
      %2291 = vst.msk [vmem:[#allocation2 + $0x40] sm:$0xff] %vm311, %v2259
      %2292 = vst.msk [vmem:[#allocation2 + $0x48] sm:$0xff] %vm311, %v2260
      %2293 = vst.msk [vmem:[#allocation2 + $0x50] sm:$0xff] %vm311, %v2261
      %2294 = vst.msk [vmem:[#allocation2 + $0x58] sm:$0xff] %vm311, %v2262
      %2295 = vst.msk [vmem:[#allocation2 + $0x60] sm:$0xff] %vm311, %v2263
      %2296 = vst.msk [vmem:[#allocation2 + $0x68] sm:$0xff] %vm311, %v2264
      %2297 = vst.msk [vmem:[#allocation2 + $0x70] sm:$0xff] %vm311, %v2265
      %2298 = vst.msk [vmem:[#allocation2 + $0x78] sm:$0xff] %vm311, %v2266
      %2299 = vst.msk [vmem:[#allocation2 + $0x80] sm:$0xff] %vm311, %v2267
      %2300 = vst.msk [vmem:[#allocation2 + $0x88] sm:$0xff] %vm311, %v2268
      %2301 = vst.msk [vmem:[#allocation2 + $0x90] sm:$0xff] %vm311, %v2269
      %2302 = vst.msk [vmem:[#allocation2 + $0x98] sm:$0xff] %vm311, %v2270
      %2303 = vst.msk [vmem:[#allocation2 + $0xa0] sm:$0xff] %vm311, %v2271
      %2304 = vst.msk [vmem:[#allocation2 + $0xa8] sm:$0xff] %vm311, %v2272
      %2305 = vst.msk [vmem:[#allocation2 + $0xb0] sm:$0xff] %vm311, %v2273
      %2306 = vst.msk [vmem:[#allocation2 + $0xb8] sm:$0xff] %vm311, %v2274
      %2307 = vst.msk [vmem:[#allocation2 + $0xc0] sm:$0xff] %vm311, %v2275
      %2308 = vst.msk [vmem:[#allocation2 + $0xc8] sm:$0xff] %vm311, %v2276
      %2309 = vst.msk [vmem:[#allocation2 + $0xd0] sm:$0xff] %vm311, %v2277
      %2310 = vst.msk [vmem:[#allocation2 + $0xd8] sm:$0xff] %vm311, %v2278
      %2311 = vst.msk [vmem:[#allocation2 + $0xe0] sm:$0xff] %vm311, %v2279
      %2312 = vst.msk [vmem:[#allocation2 + $0xe8] sm:$0xff] %vm311, %v2280
      %2313 = vst.msk [vmem:[#allocation2 + $0xf0] sm:$0xff] %vm311, %v2281
      %2314 = vst.msk [vmem:[#allocation2 + $0xf8] sm:$0xff] %vm311, %v2282
      %v2315 = vld [vmem:[#allocation3 + $0x1] sm:$0xff]
      %v2316 = vld [vmem:[#allocation3 + $0x9] sm:$0xff]
      %v2317 = vld [vmem:[#allocation3 + $0x19] sm:$0xff]
      %v2318 = vld [vmem:[#allocation3 + $0x21] sm:$0xff]
      %v2319 = vld [vmem:[#allocation3 + $0x31] sm:$0xff]
      %v2320 = vld [vmem:[#allocation3 + $0x39] sm:$0xff]
      %v2321 = vld [vmem:[#allocation3 + $0x49] sm:$0xff]
      %v2322 = vld [vmem:[#allocation3 + $0x51] sm:$0xff]
      %v2323 = vld [vmem:[#allocation3 + $0x61] sm:$0xff]
      %v2324 = vld [vmem:[#allocation3 + $0x69] sm:$0xff]
      %v2325 = vld [vmem:[#allocation3 + $0x79] sm:$0xff]
      %v2326 = vld [vmem:[#allocation3 + $0x81] sm:$0xff]
      %v2327 = vld [vmem:[#allocation3 + $0x91] sm:$0xff]
      %v2328 = vld [vmem:[#allocation3 + $0x99] sm:$0xff]
      %v2329 = vld [vmem:[#allocation3 + $0xa9] sm:$0xff]
      %v2330 = vld [vmem:[#allocation3 + $0xb1] sm:$0xff]
      %v2331 = vld [vmem:[#allocation3 + $0xc1] sm:$0xff]
      %v2332 = vld [vmem:[#allocation3 + $0xc9] sm:$0xff]
      %v2333 = vld [vmem:[#allocation3 + $0xd9] sm:$0xff]
      %v2334 = vld [vmem:[#allocation3 + $0xe1] sm:$0xff]
      %v2335 = vld [vmem:[#allocation3 + $0xf1] sm:$0xff]
      %v2336 = vld [vmem:[#allocation3 + $0xf9] sm:$0xff]
      %v2337 = vld [vmem:[#allocation3 + $0x109] sm:$0xff]
      %v2338 = vld [vmem:[#allocation3 + $0x111] sm:$0xff]
      %v2339 = vld [vmem:[#allocation3 + $0x121] sm:$0xff]
      %v2340 = vld [vmem:[#allocation3 + $0x129] sm:$0xff]
      %v2341 = vld [vmem:[#allocation3 + $0x139] sm:$0xff]
      %v2342 = vld [vmem:[#allocation3 + $0x141] sm:$0xff]
      %v2343 = vld [vmem:[#allocation3 + $0x151] sm:$0xff]
      %v2344 = vld [vmem:[#allocation3 + $0x159] sm:$0xff]
      %v2345 = vld [vmem:[#allocation3 + $0x169] sm:$0xff]
      %v2346 = vld [vmem:[#allocation3 + $0x171] sm:$0xff]
      %2379 = vrot.lane.b32.xlu0 %v2315, 8
      %v2380 = vpop.permute.xlu0 %2379
      %2381 = vrot.lane.b32.xlu0 %v2316, 8
      %v2382 = vpop.permute.xlu0 %2381
      %2383 = vrot.lane.b32.xlu0 %v2317, 8
      %v2384 = vpop.permute.xlu0 %2383
      %2385 = vrot.lane.b32.xlu0 %v2318, 8
      %v2386 = vpop.permute.xlu0 %2385
      %2387 = vrot.lane.b32.xlu0 %v2319, 8
      %v2388 = vpop.permute.xlu0 %2387
      %2389 = vrot.lane.b32.xlu0 %v2320, 8
      %v2390 = vpop.permute.xlu0 %2389
      %2391 = vrot.lane.b32.xlu0 %v2321, 8
      %v2392 = vpop.permute.xlu0 %2391
      %2393 = vrot.lane.b32.xlu0 %v2322, 8
      %v2394 = vpop.permute.xlu0 %2393
      %2395 = vrot.lane.b32.xlu0 %v2323, 8
      %v2396 = vpop.permute.xlu0 %2395
      %2397 = vrot.lane.b32.xlu0 %v2324, 8
      %v2398 = vpop.permute.xlu0 %2397
      %2399 = vrot.lane.b32.xlu0 %v2325, 8
      %v2400 = vpop.permute.xlu0 %2399
      %2401 = vrot.lane.b32.xlu0 %v2326, 8
      %v2402 = vpop.permute.xlu0 %2401
      %2403 = vrot.lane.b32.xlu0 %v2327, 8
      %v2404 = vpop.permute.xlu0 %2403
      %2405 = vrot.lane.b32.xlu0 %v2328, 8
      %v2406 = vpop.permute.xlu0 %2405
      %2407 = vrot.lane.b32.xlu0 %v2329, 8
      %v2408 = vpop.permute.xlu0 %2407
      %2409 = vrot.lane.b32.xlu0 %v2330, 8
      %v2410 = vpop.permute.xlu0 %2409
      %2411 = vrot.lane.b32.xlu0 %v2331, 8
      %v2412 = vpop.permute.xlu0 %2411
      %2413 = vrot.lane.b32.xlu0 %v2332, 8
      %v2414 = vpop.permute.xlu0 %2413
      %2415 = vrot.lane.b32.xlu0 %v2333, 8
      %v2416 = vpop.permute.xlu0 %2415
      %2417 = vrot.lane.b32.xlu0 %v2334, 8
      %v2418 = vpop.permute.xlu0 %2417
      %2419 = vrot.lane.b32.xlu0 %v2335, 8
      %v2420 = vpop.permute.xlu0 %2419
      %2421 = vrot.lane.b32.xlu0 %v2336, 8
      %v2422 = vpop.permute.xlu0 %2421
      %2423 = vrot.lane.b32.xlu0 %v2337, 8
      %v2424 = vpop.permute.xlu0 %2423
      %2425 = vrot.lane.b32.xlu0 %v2338, 8
      %v2426 = vpop.permute.xlu0 %2425
      %2427 = vrot.lane.b32.xlu0 %v2339, 8
      %v2428 = vpop.permute.xlu0 %2427
      %2429 = vrot.lane.b32.xlu0 %v2340, 8
      %v2430 = vpop.permute.xlu0 %2429
      %2431 = vrot.lane.b32.xlu0 %v2341, 8
      %v2432 = vpop.permute.xlu0 %2431
      %2433 = vrot.lane.b32.xlu0 %v2342, 8
      %v2434 = vpop.permute.xlu0 %2433
      %2435 = vrot.lane.b32.xlu0 %v2343, 8
      %v2436 = vpop.permute.xlu0 %2435
      %2437 = vrot.lane.b32.xlu0 %v2344, 8
      %v2438 = vpop.permute.xlu0 %2437
      %2439 = vrot.lane.b32.xlu0 %v2345, 8
      %v2440 = vpop.permute.xlu0 %2439
      %2441 = vrot.lane.b32.xlu0 %v2346, 8
      %v2442 = vpop.permute.xlu0 %2441
      %2475 = vst.msk [vmem:[#allocation2] sm:$0xff] %vm504, %v2380
      %2476 = vst.msk [vmem:[#allocation2 + $0x8] sm:$0xff] %vm504, %v2382
      %2477 = vst.msk [vmem:[#allocation2 + $0x10] sm:$0xff] %vm504, %v2384
      %2478 = vst.msk [vmem:[#allocation2 + $0x18] sm:$0xff] %vm504, %v2386
      %2479 = vst.msk [vmem:[#allocation2 + $0x20] sm:$0xff] %vm504, %v2388
      %2480 = vst.msk [vmem:[#allocation2 + $0x28] sm:$0xff] %vm504, %v2390
      %2481 = vst.msk [vmem:[#allocation2 + $0x30] sm:$0xff] %vm504, %v2392
      %2482 = vst.msk [vmem:[#allocation2 + $0x38] sm:$0xff] %vm504, %v2394
      %2483 = vst.msk [vmem:[#allocation2 + $0x40] sm:$0xff] %vm504, %v2396
      %2484 = vst.msk [vmem:[#allocation2 + $0x48] sm:$0xff] %vm504, %v2398
      %2485 = vst.msk [vmem:[#allocation2 + $0x50] sm:$0xff] %vm504, %v2400
      %2486 = vst.msk [vmem:[#allocation2 + $0x58] sm:$0xff] %vm504, %v2402
      %2487 = vst.msk [vmem:[#allocation2 + $0x60] sm:$0xff] %vm504, %v2404
      %2488 = vst.msk [vmem:[#allocation2 + $0x68] sm:$0xff] %vm504, %v2406
      %2489 = vst.msk [vmem:[#allocation2 + $0x70] sm:$0xff] %vm504, %v2408
      %2490 = vst.msk [vmem:[#allocation2 + $0x78] sm:$0xff] %vm504, %v2410
      %2491 = vst.msk [vmem:[#allocation2 + $0x80] sm:$0xff] %vm504, %v2412
      %2492 = vst.msk [vmem:[#allocation2 + $0x88] sm:$0xff] %vm504, %v2414
      %2493 = vst.msk [vmem:[#allocation2 + $0x90] sm:$0xff] %vm504, %v2416
      %2494 = vst.msk [vmem:[#allocation2 + $0x98] sm:$0xff] %vm504, %v2418
      %2495 = vst.msk [vmem:[#allocation2 + $0xa0] sm:$0xff] %vm504, %v2420
      %2496 = vst.msk [vmem:[#allocation2 + $0xa8] sm:$0xff] %vm504, %v2422
      %2497 = vst.msk [vmem:[#allocation2 + $0xb0] sm:$0xff] %vm504, %v2424
      %2498 = vst.msk [vmem:[#allocation2 + $0xb8] sm:$0xff] %vm504, %v2426
      %2499 = vst.msk [vmem:[#allocation2 + $0xc0] sm:$0xff] %vm504, %v2428
      %2500 = vst.msk [vmem:[#allocation2 + $0xc8] sm:$0xff] %vm504, %v2430
      %2501 = vst.msk [vmem:[#allocation2 + $0xd0] sm:$0xff] %vm504, %v2432
      %2502 = vst.msk [vmem:[#allocation2 + $0xd8] sm:$0xff] %vm504, %v2434
      %2503 = vst.msk [vmem:[#allocation2 + $0xe0] sm:$0xff] %vm504, %v2436
      %2504 = vst.msk [vmem:[#allocation2 + $0xe8] sm:$0xff] %vm504, %v2438
      %2505 = vst.msk [vmem:[#allocation2 + $0xf0] sm:$0xff] %vm504, %v2440
      %2506 = vst.msk [vmem:[#allocation2 + $0xf8] sm:$0xff] %vm504, %v2442
      %v2507 = vld [vmem:[#allocation3 + $0x2] sm:$0xff]
      %v2508 = vld [vmem:[#allocation3 + $0xa] sm:$0xff]
      %v2509 = vld [vmem:[#allocation3 + $0x1a] sm:$0xff]
      %v2510 = vld [vmem:[#allocation3 + $0x22] sm:$0xff]
      %v2511 = vld [vmem:[#allocation3 + $0x32] sm:$0xff]
      %v2512 = vld [vmem:[#allocation3 + $0x3a] sm:$0xff]
      %v2513 = vld [vmem:[#allocation3 + $0x4a] sm:$0xff]
      %v2514 = vld [vmem:[#allocation3 + $0x52] sm:$0xff]
      %v2515 = vld [vmem:[#allocation3 + $0x62] sm:$0xff]
      %v2516 = vld [vmem:[#allocation3 + $0x6a] sm:$0xff]
      %v2517 = vld [vmem:[#allocation3 + $0x7a] sm:$0xff]
      %v2518 = vld [vmem:[#allocation3 + $0x82] sm:$0xff]
      %v2519 = vld [vmem:[#allocation3 + $0x92] sm:$0xff]
      %v2520 = vld [vmem:[#allocation3 + $0x9a] sm:$0xff]
      %v2521 = vld [vmem:[#allocation3 + $0xaa] sm:$0xff]
      %v2522 = vld [vmem:[#allocation3 + $0xb2] sm:$0xff]
      %v2523 = vld [vmem:[#allocation3 + $0xc2] sm:$0xff]
      %v2524 = vld [vmem:[#allocation3 + $0xca] sm:$0xff]
      %v2525 = vld [vmem:[#allocation3 + $0xda] sm:$0xff]
      %v2526 = vld [vmem:[#allocation3 + $0xe2] sm:$0xff]
      %v2527 = vld [vmem:[#allocation3 + $0xf2] sm:$0xff]
      %v2528 = vld [vmem:[#allocation3 + $0xfa] sm:$0xff]
      %v2529 = vld [vmem:[#allocation3 + $0x10a] sm:$0xff]
      %v2530 = vld [vmem:[#allocation3 + $0x112] sm:$0xff]
      %v2531 = vld [vmem:[#allocation3 + $0x122] sm:$0xff]
      %v2532 = vld [vmem:[#allocation3 + $0x12a] sm:$0xff]
      %v2533 = vld [vmem:[#allocation3 + $0x13a] sm:$0xff]
      %v2534 = vld [vmem:[#allocation3 + $0x142] sm:$0xff]
      %v2535 = vld [vmem:[#allocation3 + $0x152] sm:$0xff]
      %v2536 = vld [vmem:[#allocation3 + $0x15a] sm:$0xff]
      %v2537 = vld [vmem:[#allocation3 + $0x16a] sm:$0xff]
      %v2538 = vld [vmem:[#allocation3 + $0x172] sm:$0xff]
      %2571 = vrot.lane.b32.xlu0 %v2507, 16
      %v2572 = vpop.permute.xlu0 %2571
      %2573 = vrot.lane.b32.xlu0 %v2508, 16
      %v2574 = vpop.permute.xlu0 %2573
      %2575 = vrot.lane.b32.xlu0 %v2509, 16
      %v2576 = vpop.permute.xlu0 %2575
      %2577 = vrot.lane.b32.xlu0 %v2510, 16
      %v2578 = vpop.permute.xlu0 %2577
      %2579 = vrot.lane.b32.xlu0 %v2511, 16
      %v2580 = vpop.permute.xlu0 %2579
      %2581 = vrot.lane.b32.xlu0 %v2512, 16
      %v2582 = vpop.permute.xlu0 %2581
      %2583 = vrot.lane.b32.xlu0 %v2513, 16
      %v2584 = vpop.permute.xlu0 %2583
      %2585 = vrot.lane.b32.xlu0 %v2514, 16
      %v2586 = vpop.permute.xlu0 %2585
      %2587 = vrot.lane.b32.xlu0 %v2515, 16
      %v2588 = vpop.permute.xlu0 %2587
      %2589 = vrot.lane.b32.xlu0 %v2516, 16
      %v2590 = vpop.permute.xlu0 %2589
      %2591 = vrot.lane.b32.xlu0 %v2517, 16
      %v2592 = vpop.permute.xlu0 %2591
      %2593 = vrot.lane.b32.xlu0 %v2518, 16
      %v2594 = vpop.permute.xlu0 %2593
      %2595 = vrot.lane.b32.xlu0 %v2519, 16
      %v2596 = vpop.permute.xlu0 %2595
      %2597 = vrot.lane.b32.xlu0 %v2520, 16
      %v2598 = vpop.permute.xlu0 %2597
      %2599 = vrot.lane.b32.xlu0 %v2521, 16
      %v2600 = vpop.permute.xlu0 %2599
      %2601 = vrot.lane.b32.xlu0 %v2522, 16
      %v2602 = vpop.permute.xlu0 %2601
      %2603 = vrot.lane.b32.xlu0 %v2523, 16
      %v2604 = vpop.permute.xlu0 %2603
      %2605 = vrot.lane.b32.xlu0 %v2524, 16
      %v2606 = vpop.permute.xlu0 %2605
      %2607 = vrot.lane.b32.xlu0 %v2525, 16
      %v2608 = vpop.permute.xlu0 %2607
      %2609 = vrot.lane.b32.xlu0 %v2526, 16
      %v2610 = vpop.permute.xlu0 %2609
      %2611 = vrot.lane.b32.xlu0 %v2527, 16
      %v2612 = vpop.permute.xlu0 %2611
      %2613 = vrot.lane.b32.xlu0 %v2528, 16
      %v2614 = vpop.permute.xlu0 %2613
      %2615 = vrot.lane.b32.xlu0 %v2529, 16
      %v2616 = vpop.permute.xlu0 %2615
      %2617 = vrot.lane.b32.xlu0 %v2530, 16
      %v2618 = vpop.permute.xlu0 %2617
      %2619 = vrot.lane.b32.xlu0 %v2531, 16
      %v2620 = vpop.permute.xlu0 %2619
      %2621 = vrot.lane.b32.xlu0 %v2532, 16
      %v2622 = vpop.permute.xlu0 %2621
      %2623 = vrot.lane.b32.xlu0 %v2533, 16
      %v2624 = vpop.permute.xlu0 %2623
      %2625 = vrot.lane.b32.xlu0 %v2534, 16
      %v2626 = vpop.permute.xlu0 %2625
      %2627 = vrot.lane.b32.xlu0 %v2535, 16
      %v2628 = vpop.permute.xlu0 %2627
      %2629 = vrot.lane.b32.xlu0 %v2536, 16
      %v2630 = vpop.permute.xlu0 %2629
      %2631 = vrot.lane.b32.xlu0 %v2537, 16
      %v2632 = vpop.permute.xlu0 %2631
      %2633 = vrot.lane.b32.xlu0 %v2538, 16
      %v2634 = vpop.permute.xlu0 %2633
      %2667 = vst.msk [vmem:[#allocation2] sm:$0xff] %vm697, %v2572
      %2668 = vst.msk [vmem:[#allocation2 + $0x8] sm:$0xff] %vm697, %v2574
      %2669 = vst.msk [vmem:[#allocation2 + $0x10] sm:$0xff] %vm697, %v2576
      %2670 = vst.msk [vmem:[#allocation2 + $0x18] sm:$0xff] %vm697, %v2578
      %2671 = vst.msk [vmem:[#allocation2 + $0x20] sm:$0xff] %vm697, %v2580
      %2672 = vst.msk [vmem:[#allocation2 + $0x28] sm:$0xff] %vm697, %v2582
      %2673 = vst.msk [vmem:[#allocation2 + $0x30] sm:$0xff] %vm697, %v2584
      %2674 = vst.msk [vmem:[#allocation2 + $0x38] sm:$0xff] %vm697, %v2586
      %2675 = vst.msk [vmem:[#allocation2 + $0x40] sm:$0xff] %vm697, %v2588
      %2676 = vst.msk [vmem:[#allocation2 + $0x48] sm:$0xff] %vm697, %v2590
      %2677 = vst.msk [vmem:[#allocation2 + $0x50] sm:$0xff] %vm697, %v2592
      %2678 = vst.msk [vmem:[#allocation2 + $0x58] sm:$0xff] %vm697, %v2594
      %2679 = vst.msk [vmem:[#allocation2 + $0x60] sm:$0xff] %vm697, %v2596
      %2680 = vst.msk [vmem:[#allocation2 + $0x68] sm:$0xff] %vm697, %v2598
      %2681 = vst.msk [vmem:[#allocation2 + $0x70] sm:$0xff] %vm697, %v2600
      %2682 = vst.msk [vmem:[#allocation2 + $0x78] sm:$0xff] %vm697, %v2602
      %2683 = vst.msk [vmem:[#allocation2 + $0x80] sm:$0xff] %vm697, %v2604
      %2684 = vst.msk [vmem:[#allocation2 + $0x88] sm:$0xff] %vm697, %v2606
      %2685 = vst.msk [vmem:[#allocation2 + $0x90] sm:$0xff] %vm697, %v2608
      %2686 = vst.msk [vmem:[#allocation2 + $0x98] sm:$0xff] %vm697, %v2610
      %2687 = vst.msk [vmem:[#allocation2 + $0xa0] sm:$0xff] %vm697, %v2612
      %2688 = vst.msk [vmem:[#allocation2 + $0xa8] sm:$0xff] %vm697, %v2614
      %2689 = vst.msk [vmem:[#allocation2 + $0xb0] sm:$0xff] %vm697, %v2616
      %2690 = vst.msk [vmem:[#allocation2 + $0xb8] sm:$0xff] %vm697, %v2618
      %2691 = vst.msk [vmem:[#allocation2 + $0xc0] sm:$0xff] %vm697, %v2620
      %2692 = vst.msk [vmem:[#allocation2 + $0xc8] sm:$0xff] %vm697, %v2622
      %2693 = vst.msk [vmem:[#allocation2 + $0xd0] sm:$0xff] %vm697, %v2624
      %2694 = vst.msk [vmem:[#allocation2 + $0xd8] sm:$0xff] %vm697, %v2626
      %2695 = vst.msk [vmem:[#allocation2 + $0xe0] sm:$0xff] %vm697, %v2628
      %2696 = vst.msk [vmem:[#allocation2 + $0xe8] sm:$0xff] %vm697, %v2630
      %2697 = vst.msk [vmem:[#allocation2 + $0xf0] sm:$0xff] %vm697, %v2632
      %2698 = vst.msk [vmem:[#allocation2 + $0xf8] sm:$0xff] %vm697, %v2634
      %v2699 = vld [vmem:[%s2185] sm:$0xff]
      %v2700 = vld [vmem:[%s2185 + $0x8] sm:$0xff]
      %v2701 = vld [vmem:[%s2185 + $0x18] sm:$0xff]
      %v2702 = vld [vmem:[%s2185 + $0x20] sm:$0xff]
      %v2703 = vld [vmem:[%s2185 + $0x30] sm:$0xff]
      %v2704 = vld [vmem:[%s2185 + $0x38] sm:$0xff]
      %v2705 = vld [vmem:[%s2185 + $0x48] sm:$0xff]
      %v2706 = vld [vmem:[%s2185 + $0x50] sm:$0xff]
      %v2707 = vld [vmem:[%s2185 + $0x60] sm:$0xff]
      %v2708 = vld [vmem:[%s2185 + $0x68] sm:$0xff]
      %v2709 = vld [vmem:[%s2185 + $0x78] sm:$0xff]
      %v2710 = vld [vmem:[%s2185 + $0x80] sm:$0xff]
      %v2711 = vld [vmem:[%s2185 + $0x90] sm:$0xff]
      %v2712 = vld [vmem:[%s2185 + $0x98] sm:$0xff]
      %v2713 = vld [vmem:[%s2185 + $0xa8] sm:$0xff]
      %v2714 = vld [vmem:[%s2185 + $0xb0] sm:$0xff]
      %v2715 = vld [vmem:[%s2185 + $0xc0] sm:$0xff]
      %v2716 = vld [vmem:[%s2185 + $0xc8] sm:$0xff]
      %v2717 = vld [vmem:[%s2185 + $0xd8] sm:$0xff]
      %v2718 = vld [vmem:[%s2185 + $0xe0] sm:$0xff]
      %v2719 = vld [vmem:[%s2185 + $0xf0] sm:$0xff]
      %v2720 = vld [vmem:[%s2185 + $0xf8] sm:$0xff]
      %v2721 = vld [vmem:[%s2185 + $0x108] sm:$0xff]
      %v2722 = vld [vmem:[%s2185 + $0x110] sm:$0xff]
      %v2723 = vld [vmem:[%s2185 + $0x120] sm:$0xff]
      %v2724 = vld [vmem:[%s2185 + $0x128] sm:$0xff]
      %v2725 = vld [vmem:[%s2185 + $0x138] sm:$0xff]
      %v2726 = vld [vmem:[%s2185 + $0x140] sm:$0xff]
      %v2727 = vld [vmem:[%s2185 + $0x150] sm:$0xff]
      %v2728 = vld [vmem:[%s2185 + $0x158] sm:$0xff]
      %v2729 = vld [vmem:[%s2185 + $0x168] sm:$0xff]
      %v2730 = vld [vmem:[%s2185 + $0x170] sm:$0xff]
      %2763 = vrot.lane.b32.xlu0 %v2699, 24
      %v2764 = vpop.permute.xlu0 %2763
      %2765 = vrot.lane.b32.xlu0 %v2700, 24
      %v2766 = vpop.permute.xlu0 %2765
      %2767 = vrot.lane.b32.xlu0 %v2701, 24
      %v2768 = vpop.permute.xlu0 %2767
      %2769 = vrot.lane.b32.xlu0 %v2702, 24
      %v2770 = vpop.permute.xlu0 %2769
      %2771 = vrot.lane.b32.xlu0 %v2703, 24
      %v2772 = vpop.permute.xlu0 %2771
      %2773 = vrot.lane.b32.xlu0 %v2704, 24
      %v2774 = vpop.permute.xlu0 %2773
      %2775 = vrot.lane.b32.xlu0 %v2705, 24
      %v2776 = vpop.permute.xlu0 %2775
      %2777 = vrot.lane.b32.xlu0 %v2706, 24
      %v2778 = vpop.permute.xlu0 %2777
      %2779 = vrot.lane.b32.xlu0 %v2707, 24
      %v2780 = vpop.permute.xlu0 %2779
      %2781 = vrot.lane.b32.xlu0 %v2708, 24
      %v2782 = vpop.permute.xlu0 %2781
      %2783 = vrot.lane.b32.xlu0 %v2709, 24
      %v2784 = vpop.permute.xlu0 %2783
      %2785 = vrot.lane.b32.xlu0 %v2710, 24
      %v2786 = vpop.permute.xlu0 %2785
      %2787 = vrot.lane.b32.xlu0 %v2711, 24
      %v2788 = vpop.permute.xlu0 %2787
      %2789 = vrot.lane.b32.xlu0 %v2712, 24
      %v2790 = vpop.permute.xlu0 %2789
      %2791 = vrot.lane.b32.xlu0 %v2713, 24
      %v2792 = vpop.permute.xlu0 %2791
      %2793 = vrot.lane.b32.xlu0 %v2714, 24
      %v2794 = vpop.permute.xlu0 %2793
      %2795 = vrot.lane.b32.xlu0 %v2715, 24
      %v2796 = vpop.permute.xlu0 %2795
      %2797 = vrot.lane.b32.xlu0 %v2716, 24
      %v2798 = vpop.permute.xlu0 %2797
      %2799 = vrot.lane.b32.xlu0 %v2717, 24
      %v2800 = vpop.permute.xlu0 %2799
      %2801 = vrot.lane.b32.xlu0 %v2718, 24
      %v2802 = vpop.permute.xlu0 %2801
      %2803 = vrot.lane.b32.xlu0 %v2719, 24
      %v2804 = vpop.permute.xlu0 %2803
      %2805 = vrot.lane.b32.xlu0 %v2720, 24
      %v2806 = vpop.permute.xlu0 %2805
      %2807 = vrot.lane.b32.xlu0 %v2721, 24
      %v2808 = vpop.permute.xlu0 %2807
      %2809 = vrot.lane.b32.xlu0 %v2722, 24
      %v2810 = vpop.permute.xlu0 %2809
      %2811 = vrot.lane.b32.xlu0 %v2723, 24
      %v2812 = vpop.permute.xlu0 %2811
      %2813 = vrot.lane.b32.xlu0 %v2724, 24
      %v2814 = vpop.permute.xlu0 %2813
      %2815 = vrot.lane.b32.xlu0 %v2725, 24
      %v2816 = vpop.permute.xlu0 %2815
      %2817 = vrot.lane.b32.xlu0 %v2726, 24
      %v2818 = vpop.permute.xlu0 %2817
      %2819 = vrot.lane.b32.xlu0 %v2727, 24
      %v2820 = vpop.permute.xlu0 %2819
      %2821 = vrot.lane.b32.xlu0 %v2728, 24
      %v2822 = vpop.permute.xlu0 %2821
      %2823 = vrot.lane.b32.xlu0 %v2729, 24
      %v2824 = vpop.permute.xlu0 %2823
      %2825 = vrot.lane.b32.xlu0 %v2730, 24
      %v2826 = vpop.permute.xlu0 %2825
      %2859 = vst.msk [vmem:[#allocation2] sm:$0xff] %vm891, %v2764
      %2860 = vst.msk [vmem:[#allocation2 + $0x8] sm:$0xff] %vm891, %v2766
      %2861 = vst.msk [vmem:[#allocation2 + $0x10] sm:$0xff] %vm891, %v2768
      %2862 = vst.msk [vmem:[#allocation2 + $0x18] sm:$0xff] %vm891, %v2770
      %2863 = vst.msk [vmem:[#allocation2 + $0x20] sm:$0xff] %vm891, %v2772
      %2864 = vst.msk [vmem:[#allocation2 + $0x28] sm:$0xff] %vm891, %v2774
      %2865 = vst.msk [vmem:[#allocation2 + $0x30] sm:$0xff] %vm891, %v2776
      %2866 = vst.msk [vmem:[#allocation2 + $0x38] sm:$0xff] %vm891, %v2778
      %2867 = vst.msk [vmem:[#allocation2 + $0x40] sm:$0xff] %vm891, %v2780
      %2868 = vst.msk [vmem:[#allocation2 + $0x48] sm:$0xff] %vm891, %v2782
      %2869 = vst.msk [vmem:[#allocation2 + $0x50] sm:$0xff] %vm891, %v2784
      %2870 = vst.msk [vmem:[#allocation2 + $0x58] sm:$0xff] %vm891, %v2786
      %2871 = vst.msk [vmem:[#allocation2 + $0x60] sm:$0xff] %vm891, %v2788
      %2872 = vst.msk [vmem:[#allocation2 + $0x68] sm:$0xff] %vm891, %v2790
      %2873 = vst.msk [vmem:[#allocation2 + $0x70] sm:$0xff] %vm891, %v2792
      %2874 = vst.msk [vmem:[#allocation2 + $0x78] sm:$0xff] %vm891, %v2794
      %2875 = vst.msk [vmem:[#allocation2 + $0x80] sm:$0xff] %vm891, %v2796
      %2876 = vst.msk [vmem:[#allocation2 + $0x88] sm:$0xff] %vm891, %v2798
      %2877 = vst.msk [vmem:[#allocation2 + $0x90] sm:$0xff] %vm891, %v2800
      %2878 = vst.msk [vmem:[#allocation2 + $0x98] sm:$0xff] %vm891, %v2802
      %2879 = vst.msk [vmem:[#allocation2 + $0xa0] sm:$0xff] %vm891, %v2804
      %2880 = vst.msk [vmem:[#allocation2 + $0xa8] sm:$0xff] %vm891, %v2806
      %2881 = vst.msk [vmem:[#allocation2 + $0xb0] sm:$0xff] %vm891, %v2808
      %2882 = vst.msk [vmem:[#allocation2 + $0xb8] sm:$0xff] %vm891, %v2810
      %2883 = vst.msk [vmem:[#allocation2 + $0xc0] sm:$0xff] %vm891, %v2812
      %2884 = vst.msk [vmem:[#allocation2 + $0xc8] sm:$0xff] %vm891, %v2814
      %2885 = vst.msk [vmem:[#allocation2 + $0xd0] sm:$0xff] %vm891, %v2816
      %2886 = vst.msk [vmem:[#allocation2 + $0xd8] sm:$0xff] %vm891, %v2818
      %2887 = vst.msk [vmem:[#allocation2 + $0xe0] sm:$0xff] %vm891, %v2820
      %2888 = vst.msk [vmem:[#allocation2 + $0xe8] sm:$0xff] %vm891, %v2822
      %2889 = vst.msk [vmem:[#allocation2 + $0xf0] sm:$0xff] %vm891, %v2824
      %2890 = vst.msk [vmem:[#allocation2 + $0xf8] sm:$0xff] %vm891, %v2826
      %v2891 = vld [vmem:[%s2185 + $0x1] sm:$0xff]
      %v2892 = vld [vmem:[%s2185 + $0x9] sm:$0xff]
      %v2893 = vld [vmem:[%s2185 + $0x19] sm:$0xff]
      %v2894 = vld [vmem:[%s2185 + $0x21] sm:$0xff]
      %v2895 = vld [vmem:[%s2185 + $0x31] sm:$0xff]
      %v2896 = vld [vmem:[%s2185 + $0x39] sm:$0xff]
      %v2897 = vld [vmem:[%s2185 + $0x49] sm:$0xff]
      %v2898 = vld [vmem:[%s2185 + $0x51] sm:$0xff]
      %v2899 = vld [vmem:[%s2185 + $0x61] sm:$0xff]
      %v2900 = vld [vmem:[%s2185 + $0x69] sm:$0xff]
      %v2901 = vld [vmem:[%s2185 + $0x79] sm:$0xff]
      %v2902 = vld [vmem:[%s2185 + $0x81] sm:$0xff]
      %v2903 = vld [vmem:[%s2185 + $0x91] sm:$0xff]
      %v2904 = vld [vmem:[%s2185 + $0x99] sm:$0xff]
      %v2905 = vld [vmem:[%s2185 + $0xa9] sm:$0xff]
      %v2906 = vld [vmem:[%s2185 + $0xb1] sm:$0xff]
      %v2907 = vld [vmem:[%s2185 + $0xc1] sm:$0xff]
      %v2908 = vld [vmem:[%s2185 + $0xc9] sm:$0xff]
      %v2909 = vld [vmem:[%s2185 + $0xd9] sm:$0xff]
      %v2910 = vld [vmem:[%s2185 + $0xe1] sm:$0xff]
      %v2911 = vld [vmem:[%s2185 + $0xf1] sm:$0xff]
      %v2912 = vld [vmem:[%s2185 + $0xf9] sm:$0xff]
      %v2913 = vld [vmem:[%s2185 + $0x109] sm:$0xff]
      %v2914 = vld [vmem:[%s2185 + $0x111] sm:$0xff]
      %v2915 = vld [vmem:[%s2185 + $0x121] sm:$0xff]
      %v2916 = vld [vmem:[%s2185 + $0x129] sm:$0xff]
      %v2917 = vld [vmem:[%s2185 + $0x139] sm:$0xff]
      %v2918 = vld [vmem:[%s2185 + $0x141] sm:$0xff]
      %v2919 = vld [vmem:[%s2185 + $0x151] sm:$0xff]
      %v2920 = vld [vmem:[%s2185 + $0x159] sm:$0xff]
      %v2921 = vld [vmem:[%s2185 + $0x169] sm:$0xff]
      %v2922 = vld [vmem:[%s2185 + $0x171] sm:$0xff]
      %2955 = vrot.lane.b32.xlu0 %v2891, 32
      %v2956 = vpop.permute.xlu0 %2955
      %2957 = vrot.lane.b32.xlu0 %v2892, 32
      %v2958 = vpop.permute.xlu0 %2957
      %2959 = vrot.lane.b32.xlu0 %v2893, 32
      %v2960 = vpop.permute.xlu0 %2959
      %2961 = vrot.lane.b32.xlu0 %v2894, 32
      %v2962 = vpop.permute.xlu0 %2961
      %2963 = vrot.lane.b32.xlu0 %v2895, 32
      %v2964 = vpop.permute.xlu0 %2963
      %2965 = vrot.lane.b32.xlu0 %v2896, 32
      %v2966 = vpop.permute.xlu0 %2965
      %2967 = vrot.lane.b32.xlu0 %v2897, 32
      %v2968 = vpop.permute.xlu0 %2967
      %2969 = vrot.lane.b32.xlu0 %v2898, 32
      %v2970 = vpop.permute.xlu0 %2969
      %2971 = vrot.lane.b32.xlu0 %v2899, 32
      %v2972 = vpop.permute.xlu0 %2971
      %2973 = vrot.lane.b32.xlu0 %v2900, 32
      %v2974 = vpop.permute.xlu0 %2973
      %2975 = vrot.lane.b32.xlu0 %v2901, 32
      %v2976 = vpop.permute.xlu0 %2975
      %2977 = vrot.lane.b32.xlu0 %v2902, 32
      %v2978 = vpop.permute.xlu0 %2977
      %2979 = vrot.lane.b32.xlu0 %v2903, 32
      %v2980 = vpop.permute.xlu0 %2979
      %2981 = vrot.lane.b32.xlu0 %v2904, 32
      %v2982 = vpop.permute.xlu0 %2981
      %2983 = vrot.lane.b32.xlu0 %v2905, 32
      %v2984 = vpop.permute.xlu0 %2983
      %2985 = vrot.lane.b32.xlu0 %v2906, 32
      %v2986 = vpop.permute.xlu0 %2985
      %2987 = vrot.lane.b32.xlu0 %v2907, 32
      %v2988 = vpop.permute.xlu0 %2987
      %2989 = vrot.lane.b32.xlu0 %v2908, 32
      %v2990 = vpop.permute.xlu0 %2989
      %2991 = vrot.lane.b32.xlu0 %v2909, 32
      %v2992 = vpop.permute.xlu0 %2991
      %2993 = vrot.lane.b32.xlu0 %v2910, 32
      %v2994 = vpop.permute.xlu0 %2993
      %2995 = vrot.lane.b32.xlu0 %v2911, 32
      %v2996 = vpop.permute.xlu0 %2995
      %2997 = vrot.lane.b32.xlu0 %v2912, 32
      %v2998 = vpop.permute.xlu0 %2997
      %2999 = vrot.lane.b32.xlu0 %v2913, 32
      %v3000 = vpop.permute.xlu0 %2999
      %3001 = vrot.lane.b32.xlu0 %v2914, 32
      %v3002 = vpop.permute.xlu0 %3001
      %3003 = vrot.lane.b32.xlu0 %v2915, 32
      %v3004 = vpop.permute.xlu0 %3003
      %3005 = vrot.lane.b32.xlu0 %v2916, 32
      %v3006 = vpop.permute.xlu0 %3005
      %3007 = vrot.lane.b32.xlu0 %v2917, 32
      %v3008 = vpop.permute.xlu0 %3007
      %3009 = vrot.lane.b32.xlu0 %v2918, 32
      %v3010 = vpop.permute.xlu0 %3009
      %3011 = vrot.lane.b32.xlu0 %v2919, 32
      %v3012 = vpop.permute.xlu0 %3011
      %3013 = vrot.lane.b32.xlu0 %v2920, 32
      %v3014 = vpop.permute.xlu0 %3013
      %3015 = vrot.lane.b32.xlu0 %v2921, 32
      %v3016 = vpop.permute.xlu0 %3015
      %3017 = vrot.lane.b32.xlu0 %v2922, 32
      %v3018 = vpop.permute.xlu0 %3017
      %3051 = vst.msk [vmem:[#allocation2] sm:$0xff] %vm1084, %v2956
      %3052 = vst.msk [vmem:[#allocation2 + $0x8] sm:$0xff] %vm1084, %v2958
      %3053 = vst.msk [vmem:[#allocation2 + $0x10] sm:$0xff] %vm1084, %v2960
      %3054 = vst.msk [vmem:[#allocation2 + $0x18] sm:$0xff] %vm1084, %v2962
      %3055 = vst.msk [vmem:[#allocation2 + $0x20] sm:$0xff] %vm1084, %v2964
      %3056 = vst.msk [vmem:[#allocation2 + $0x28] sm:$0xff] %vm1084, %v2966
      %3057 = vst.msk [vmem:[#allocation2 + $0x30] sm:$0xff] %vm1084, %v2968
      %3058 = vst.msk [vmem:[#allocation2 + $0x38] sm:$0xff] %vm1084, %v2970
      %3059 = vst.msk [vmem:[#allocation2 + $0x40] sm:$0xff] %vm1084, %v2972
      %3060 = vst.msk [vmem:[#allocation2 + $0x48] sm:$0xff] %vm1084, %v2974
      %3061 = vst.msk [vmem:[#allocation2 + $0x50] sm:$0xff] %vm1084, %v2976
      %3062 = vst.msk [vmem:[#allocation2 + $0x58] sm:$0xff] %vm1084, %v2978
      %3063 = vst.msk [vmem:[#allocation2 + $0x60] sm:$0xff] %vm1084, %v2980
      %3064 = vst.msk [vmem:[#allocation2 + $0x68] sm:$0xff] %vm1084, %v2982
      %3065 = vst.msk [vmem:[#allocation2 + $0x70] sm:$0xff] %vm1084, %v2984
      %3066 = vst.msk [vmem:[#allocation2 + $0x78] sm:$0xff] %vm1084, %v2986
      %3067 = vst.msk [vmem:[#allocation2 + $0x80] sm:$0xff] %vm1084, %v2988
      %3068 = vst.msk [vmem:[#allocation2 + $0x88] sm:$0xff] %vm1084, %v2990
      %3069 = vst.msk [vmem:[#allocation2 + $0x90] sm:$0xff] %vm1084, %v2992
      %3070 = vst.msk [vmem:[#allocation2 + $0x98] sm:$0xff] %vm1084, %v2994
      %3071 = vst.msk [vmem:[#allocation2 + $0xa0] sm:$0xff] %vm1084, %v2996
      %3072 = vst.msk [vmem:[#allocation2 + $0xa8] sm:$0xff] %vm1084, %v2998
      %3073 = vst.msk [vmem:[#allocation2 + $0xb0] sm:$0xff] %vm1084, %v3000
      %3074 = vst.msk [vmem:[#allocation2 + $0xb8] sm:$0xff] %vm1084, %v3002
      %3075 = vst.msk [vmem:[#allocation2 + $0xc0] sm:$0xff] %vm1084, %v3004
      %3076 = vst.msk [vmem:[#allocation2 + $0xc8] sm:$0xff] %vm1084, %v3006
      %3077 = vst.msk [vmem:[#allocation2 + $0xd0] sm:$0xff] %vm1084, %v3008
      %3078 = vst.msk [vmem:[#allocation2 + $0xd8] sm:$0xff] %vm1084, %v3010
      %3079 = vst.msk [vmem:[#allocation2 + $0xe0] sm:$0xff] %vm1084, %v3012
      %3080 = vst.msk [vmem:[#allocation2 + $0xe8] sm:$0xff] %vm1084, %v3014
      %3081 = vst.msk [vmem:[#allocation2 + $0xf0] sm:$0xff] %vm1084, %v3016
      %3082 = vst.msk [vmem:[#allocation2 + $0xf8] sm:$0xff] %vm1084, %v3018
      %v3083 = vld [vmem:[%s2185 + $0x2] sm:$0xff]
      %v3084 = vld [vmem:[%s2185 + $0xa] sm:$0xff]
      %v3085 = vld [vmem:[%s2185 + $0x1a] sm:$0xff]
      %v3086 = vld [vmem:[%s2185 + $0x22] sm:$0xff]
      %v3087 = vld [vmem:[%s2185 + $0x32] sm:$0xff]
      %v3088 = vld [vmem:[%s2185 + $0x3a] sm:$0xff]
      %v3089 = vld [vmem:[%s2185 + $0x4a] sm:$0xff]
      %v3090 = vld [vmem:[%s2185 + $0x52] sm:$0xff]
      %v3091 = vld [vmem:[%s2185 + $0x62] sm:$0xff]
      %v3092 = vld [vmem:[%s2185 + $0x6a] sm:$0xff]
      %v3093 = vld [vmem:[%s2185 + $0x7a] sm:$0xff]
      %v3094 = vld [vmem:[%s2185 + $0x82] sm:$0xff]
      %v3095 = vld [vmem:[%s2185 + $0x92] sm:$0xff]
      %v3096 = vld [vmem:[%s2185 + $0x9a] sm:$0xff]
      %v3097 = vld [vmem:[%s2185 + $0xaa] sm:$0xff]
      %v3098 = vld [vmem:[%s2185 + $0xb2] sm:$0xff]
      %v3099 = vld [vmem:[%s2185 + $0xc2] sm:$0xff]
      %v3100 = vld [vmem:[%s2185 + $0xca] sm:$0xff]
      %v3101 = vld [vmem:[%s2185 + $0xda] sm:$0xff]
      %v3102 = vld [vmem:[%s2185 + $0xe2] sm:$0xff]
      %v3103 = vld [vmem:[%s2185 + $0xf2] sm:$0xff]
      %v3104 = vld [vmem:[%s2185 + $0xfa] sm:$0xff]
      %v3105 = vld [vmem:[%s2185 + $0x10a] sm:$0xff]
      %v3106 = vld [vmem:[%s2185 + $0x112] sm:$0xff]
      %v3107 = vld [vmem:[%s2185 + $0x122] sm:$0xff]
      %v3108 = vld [vmem:[%s2185 + $0x12a] sm:$0xff]
      %v3109 = vld [vmem:[%s2185 + $0x13a] sm:$0xff]
      %v3110 = vld [vmem:[%s2185 + $0x142] sm:$0xff]
      %v3111 = vld [vmem:[%s2185 + $0x152] sm:$0xff]
      %v3112 = vld [vmem:[%s2185 + $0x15a] sm:$0xff]
      %v3113 = vld [vmem:[%s2185 + $0x16a] sm:$0xff]
      %v3114 = vld [vmem:[%s2185 + $0x172] sm:$0xff]
      %3147 = vrot.lane.b32.xlu0 %v3083, 40
      %v3148 = vpop.permute.xlu0 %3147
      %3149 = vrot.lane.b32.xlu0 %v3084, 40
      %v3150 = vpop.permute.xlu0 %3149
      %3151 = vrot.lane.b32.xlu0 %v3085, 40
      %v3152 = vpop.permute.xlu0 %3151
      %3153 = vrot.lane.b32.xlu0 %v3086, 40
      %v3154 = vpop.permute.xlu0 %3153
      %3155 = vrot.lane.b32.xlu0 %v3087, 40
      %v3156 = vpop.permute.xlu0 %3155
      %3157 = vrot.lane.b32.xlu0 %v3088, 40
      %v3158 = vpop.permute.xlu0 %3157
      %3159 = vrot.lane.b32.xlu0 %v3089, 40
      %v3160 = vpop.permute.xlu0 %3159
      %3161 = vrot.lane.b32.xlu0 %v3090, 40
      %v3162 = vpop.permute.xlu0 %3161
      %3163 = vrot.lane.b32.xlu0 %v3091, 40
      %v3164 = vpop.permute.xlu0 %3163
      %3165 = vrot.lane.b32.xlu0 %v3092, 40
      %v3166 = vpop.permute.xlu0 %3165
      %3167 = vrot.lane.b32.xlu0 %v3093, 40
      %v3168 = vpop.permute.xlu0 %3167
      %3169 = vrot.lane.b32.xlu0 %v3094, 40
      %v3170 = vpop.permute.xlu0 %3169
      %3171 = vrot.lane.b32.xlu0 %v3095, 40
      %v3172 = vpop.permute.xlu0 %3171
      %3173 = vrot.lane.b32.xlu0 %v3096, 40
      %v3174 = vpop.permute.xlu0 %3173
      %3175 = vrot.lane.b32.xlu0 %v3097, 40
      %v3176 = vpop.permute.xlu0 %3175
      %3177 = vrot.lane.b32.xlu0 %v3098, 40
      %v3178 = vpop.permute.xlu0 %3177
      %3179 = vrot.lane.b32.xlu0 %v3099, 40
      %v3180 = vpop.permute.xlu0 %3179
      %3181 = vrot.lane.b32.xlu0 %v3100, 40
      %v3182 = vpop.permute.xlu0 %3181
      %3183 = vrot.lane.b32.xlu0 %v3101, 40
      %v3184 = vpop.permute.xlu0 %3183
      %3185 = vrot.lane.b32.xlu0 %v3102, 40
      %v3186 = vpop.permute.xlu0 %3185
      %3187 = vrot.lane.b32.xlu0 %v3103, 40
      %v3188 = vpop.permute.xlu0 %3187
      %3189 = vrot.lane.b32.xlu0 %v3104, 40
      %v3190 = vpop.permute.xlu0 %3189
      %3191 = vrot.lane.b32.xlu0 %v3105, 40
      %v3192 = vpop.permute.xlu0 %3191
      %3193 = vrot.lane.b32.xlu0 %v3106, 40
      %v3194 = vpop.permute.xlu0 %3193
      %3195 = vrot.lane.b32.xlu0 %v3107, 40
      %v3196 = vpop.permute.xlu0 %3195
      %3197 = vrot.lane.b32.xlu0 %v3108, 40
      %v3198 = vpop.permute.xlu0 %3197
      %3199 = vrot.lane.b32.xlu0 %v3109, 40
      %v3200 = vpop.permute.xlu0 %3199
      %3201 = vrot.lane.b32.xlu0 %v3110, 40
      %v3202 = vpop.permute.xlu0 %3201
      %3203 = vrot.lane.b32.xlu0 %v3111, 40
      %v3204 = vpop.permute.xlu0 %3203
      %3205 = vrot.lane.b32.xlu0 %v3112, 40
      %v3206 = vpop.permute.xlu0 %3205
      %3207 = vrot.lane.b32.xlu0 %v3113, 40
      %v3208 = vpop.permute.xlu0 %3207
      %3209 = vrot.lane.b32.xlu0 %v3114, 40
      %v3210 = vpop.permute.xlu0 %3209
      %3243 = vst.msk [vmem:[#allocation2] sm:$0xff] %vm1277, %v3148
      %3244 = vst.msk [vmem:[#allocation2 + $0x8] sm:$0xff] %vm1277, %v3150
      %3245 = vst.msk [vmem:[#allocation2 + $0x10] sm:$0xff] %vm1277, %v3152
      %3246 = vst.msk [vmem:[#allocation2 + $0x18] sm:$0xff] %vm1277, %v3154
      %3247 = vst.msk [vmem:[#allocation2 + $0x20] sm:$0xff] %vm1277, %v3156
      %3248 = vst.msk [vmem:[#allocation2 + $0x28] sm:$0xff] %vm1277, %v3158
      %3249 = vst.msk [vmem:[#allocation2 + $0x30] sm:$0xff] %vm1277, %v3160
      %3250 = vst.msk [vmem:[#allocation2 + $0x38] sm:$0xff] %vm1277, %v3162
      %3251 = vst.msk [vmem:[#allocation2 + $0x40] sm:$0xff] %vm1277, %v3164
      %3252 = vst.msk [vmem:[#allocation2 + $0x48] sm:$0xff] %vm1277, %v3166
      %3253 = vst.msk [vmem:[#allocation2 + $0x50] sm:$0xff] %vm1277, %v3168
      %3254 = vst.msk [vmem:[#allocation2 + $0x58] sm:$0xff] %vm1277, %v3170
      %3255 = vst.msk [vmem:[#allocation2 + $0x60] sm:$0xff] %vm1277, %v3172
      %3256 = vst.msk [vmem:[#allocation2 + $0x68] sm:$0xff] %vm1277, %v3174
      %3257 = vst.msk [vmem:[#allocation2 + $0x70] sm:$0xff] %vm1277, %v3176
      %3258 = vst.msk [vmem:[#allocation2 + $0x78] sm:$0xff] %vm1277, %v3178
      %3259 = vst.msk [vmem:[#allocation2 + $0x80] sm:$0xff] %vm1277, %v3180
      %3260 = vst.msk [vmem:[#allocation2 + $0x88] sm:$0xff] %vm1277, %v3182
      %3261 = vst.msk [vmem:[#allocation2 + $0x90] sm:$0xff] %vm1277, %v3184
      %3262 = vst.msk [vmem:[#allocation2 + $0x98] sm:$0xff] %vm1277, %v3186
      %3263 = vst.msk [vmem:[#allocation2 + $0xa0] sm:$0xff] %vm1277, %v3188
      %3264 = vst.msk [vmem:[#allocation2 + $0xa8] sm:$0xff] %vm1277, %v3190
      %3265 = vst.msk [vmem:[#allocation2 + $0xb0] sm:$0xff] %vm1277, %v3192
      %3266 = vst.msk [vmem:[#allocation2 + $0xb8] sm:$0xff] %vm1277, %v3194
      %3267 = vst.msk [vmem:[#allocation2 + $0xc0] sm:$0xff] %vm1277, %v3196
      %3268 = vst.msk [vmem:[#allocation2 + $0xc8] sm:$0xff] %vm1277, %v3198
      %3269 = vst.msk [vmem:[#allocation2 + $0xd0] sm:$0xff] %vm1277, %v3200
      %3270 = vst.msk [vmem:[#allocation2 + $0xd8] sm:$0xff] %vm1277, %v3202
      %3271 = vst.msk [vmem:[#allocation2 + $0xe0] sm:$0xff] %vm1277, %v3204
      %3272 = vst.msk [vmem:[#allocation2 + $0xe8] sm:$0xff] %vm1277, %v3206
      %3273 = vst.msk [vmem:[#allocation2 + $0xf0] sm:$0xff] %vm1277, %v3208
      %3274 = vst.msk [vmem:[#allocation2 + $0xf8] sm:$0xff] %vm1277, %v3210
      %s3275 = scalar_lea.vmem [#allocation3], 48
      %v3276 = vld [vmem:[%s3275] sm:$0xff]
      %v3277 = vld [vmem:[%s3275 + $0x8] sm:$0xff]
      %v3278 = vld [vmem:[%s3275 + $0x18] sm:$0xff]
      %v3279 = vld [vmem:[%s3275 + $0x20] sm:$0xff]
      %v3280 = vld [vmem:[%s3275 + $0x30] sm:$0xff]
      %v3281 = vld [vmem:[%s3275 + $0x38] sm:$0xff]
      %v3282 = vld [vmem:[%s3275 + $0x48] sm:$0xff]
      %v3283 = vld [vmem:[%s3275 + $0x50] sm:$0xff]
      %v3284 = vld [vmem:[%s3275 + $0x60] sm:$0xff]
      %v3285 = vld [vmem:[%s3275 + $0x68] sm:$0xff]
      %v3286 = vld [vmem:[%s3275 + $0x78] sm:$0xff]
      %v3287 = vld [vmem:[%s3275 + $0x80] sm:$0xff]
      %v3288 = vld [vmem:[%s3275 + $0x90] sm:$0xff]
      %v3289 = vld [vmem:[%s3275 + $0x98] sm:$0xff]
      %v3290 = vld [vmem:[%s3275 + $0xa8] sm:$0xff]
      %v3291 = vld [vmem:[%s3275 + $0xb0] sm:$0xff]
      %v3292 = vld [vmem:[%s3275 + $0xc0] sm:$0xff]
      %v3293 = vld [vmem:[%s3275 + $0xc8] sm:$0xff]
      %v3294 = vld [vmem:[%s3275 + $0xd8] sm:$0xff]
      %v3295 = vld [vmem:[%s3275 + $0xe0] sm:$0xff]
      %v3296 = vld [vmem:[%s3275 + $0xf0] sm:$0xff]
      %v3297 = vld [vmem:[%s3275 + $0xf8] sm:$0xff]
      %v3298 = vld [vmem:[%s3275 + $0x108] sm:$0xff]
      %v3299 = vld [vmem:[%s3275 + $0x110] sm:$0xff]
      %v3300 = vld [vmem:[%s3275 + $0x120] sm:$0xff]
      %v3301 = vld [vmem:[%s3275 + $0x128] sm:$0xff]
      %v3302 = vld [vmem:[%s3275 + $0x138] sm:$0xff]
      %v3303 = vld [vmem:[%s3275 + $0x140] sm:$0xff]
      %v3304 = vld [vmem:[%s3275 + $0x150] sm:$0xff]
      %v3305 = vld [vmem:[%s3275 + $0x158] sm:$0xff]
      %v3306 = vld [vmem:[%s3275 + $0x168] sm:$0xff]
      %v3307 = vld [vmem:[%s3275 + $0x170] sm:$0xff]
      %3340 = vrot.lane.b32.xlu0 %v3276, 48
      %v3341 = vpop.permute.xlu0 %3340
      %3342 = vrot.lane.b32.xlu0 %v3277, 48
      %v3343 = vpop.permute.xlu0 %3342
      %3344 = vrot.lane.b32.xlu0 %v3278, 48
      %v3345 = vpop.permute.xlu0 %3344
      %3346 = vrot.lane.b32.xlu0 %v3279, 48
      %v3347 = vpop.permute.xlu0 %3346
      %3348 = vrot.lane.b32.xlu0 %v3280, 48
      %v3349 = vpop.permute.xlu0 %3348
      %3350 = vrot.lane.b32.xlu0 %v3281, 48
      %v3351 = vpop.permute.xlu0 %3350
      %3352 = vrot.lane.b32.xlu0 %v3282, 48
      %v3353 = vpop.permute.xlu0 %3352
      %3354 = vrot.lane.b32.xlu0 %v3283, 48
      %v3355 = vpop.permute.xlu0 %3354
      %3356 = vrot.lane.b32.xlu0 %v3284, 48
      %v3357 = vpop.permute.xlu0 %3356
      %3358 = vrot.lane.b32.xlu0 %v3285, 48
      %v3359 = vpop.permute.xlu0 %3358
      %3360 = vrot.lane.b32.xlu0 %v3286, 48
      %v3361 = vpop.permute.xlu0 %3360
      %3362 = vrot.lane.b32.xlu0 %v3287, 48
      %v3363 = vpop.permute.xlu0 %3362
      %3364 = vrot.lane.b32.xlu0 %v3288, 48
      %v3365 = vpop.permute.xlu0 %3364
      %3366 = vrot.lane.b32.xlu0 %v3289, 48
      %v3367 = vpop.permute.xlu0 %3366
      %3368 = vrot.lane.b32.xlu0 %v3290, 48
      %v3369 = vpop.permute.xlu0 %3368
      %3370 = vrot.lane.b32.xlu0 %v3291, 48
      %v3371 = vpop.permute.xlu0 %3370
      %3372 = vrot.lane.b32.xlu0 %v3292, 48
      %v3373 = vpop.permute.xlu0 %3372
      %3374 = vrot.lane.b32.xlu0 %v3293, 48
      %v3375 = vpop.permute.xlu0 %3374
      %3376 = vrot.lane.b32.xlu0 %v3294, 48
      %v3377 = vpop.permute.xlu0 %3376
      %3378 = vrot.lane.b32.xlu0 %v3295, 48
      %v3379 = vpop.permute.xlu0 %3378
      %3380 = vrot.lane.b32.xlu0 %v3296, 48
      %v3381 = vpop.permute.xlu0 %3380
      %3382 = vrot.lane.b32.xlu0 %v3297, 48
      %v3383 = vpop.permute.xlu0 %3382
      %3384 = vrot.lane.b32.xlu0 %v3298, 48
      %v3385 = vpop.permute.xlu0 %3384
      %3386 = vrot.lane.b32.xlu0 %v3299, 48
      %v3387 = vpop.permute.xlu0 %3386
      %3388 = vrot.lane.b32.xlu0 %v3300, 48
      %v3389 = vpop.permute.xlu0 %3388
      %3390 = vrot.lane.b32.xlu0 %v3301, 48
      %v3391 = vpop.permute.xlu0 %3390
      %3392 = vrot.lane.b32.xlu0 %v3302, 48
      %v3393 = vpop.permute.xlu0 %3392
      %3394 = vrot.lane.b32.xlu0 %v3303, 48
      %v3395 = vpop.permute.xlu0 %3394
      %3396 = vrot.lane.b32.xlu0 %v3304, 48
      %v3397 = vpop.permute.xlu0 %3396
      %3398 = vrot.lane.b32.xlu0 %v3305, 48
      %v3399 = vpop.permute.xlu0 %3398
      %3400 = vrot.lane.b32.xlu0 %v3306, 48
      %v3401 = vpop.permute.xlu0 %3400
      %3402 = vrot.lane.b32.xlu0 %v3307, 48
      %v3403 = vpop.permute.xlu0 %3402
      %3436 = vst.msk [vmem:[#allocation2] sm:$0xff] %vm1471, %v3341
      %3437 = vst.msk [vmem:[#allocation2 + $0x8] sm:$0xff] %vm1471, %v3343
      %3438 = vst.msk [vmem:[#allocation2 + $0x10] sm:$0xff] %vm1471, %v3345
      %3439 = vst.msk [vmem:[#allocation2 + $0x18] sm:$0xff] %vm1471, %v3347
      %3440 = vst.msk [vmem:[#allocation2 + $0x20] sm:$0xff] %vm1471, %v3349
      %3441 = vst.msk [vmem:[#allocation2 + $0x28] sm:$0xff] %vm1471, %v3351
      %3442 = vst.msk [vmem:[#allocation2 + $0x30] sm:$0xff] %vm1471, %v3353
      %3443 = vst.msk [vmem:[#allocation2 + $0x38] sm:$0xff] %vm1471, %v3355
      %3444 = vst.msk [vmem:[#allocation2 + $0x40] sm:$0xff] %vm1471, %v3357
      %3445 = vst.msk [vmem:[#allocation2 + $0x48] sm:$0xff] %vm1471, %v3359
      %3446 = vst.msk [vmem:[#allocation2 + $0x50] sm:$0xff] %vm1471, %v3361
      %3447 = vst.msk [vmem:[#allocation2 + $0x58] sm:$0xff] %vm1471, %v3363
      %3448 = vst.msk [vmem:[#allocation2 + $0x60] sm:$0xff] %vm1471, %v3365
      %3449 = vst.msk [vmem:[#allocation2 + $0x68] sm:$0xff] %vm1471, %v3367
      %3450 = vst.msk [vmem:[#allocation2 + $0x70] sm:$0xff] %vm1471, %v3369
      %3451 = vst.msk [vmem:[#allocation2 + $0x78] sm:$0xff] %vm1471, %v3371
      %3452 = vst.msk [vmem:[#allocation2 + $0x80] sm:$0xff] %vm1471, %v3373
      %3453 = vst.msk [vmem:[#allocation2 + $0x88] sm:$0xff] %vm1471, %v3375
      %3454 = vst.msk [vmem:[#allocation2 + $0x90] sm:$0xff] %vm1471, %v3377
      %3455 = vst.msk [vmem:[#allocation2 + $0x98] sm:$0xff] %vm1471, %v3379
      %3456 = vst.msk [vmem:[#allocation2 + $0xa0] sm:$0xff] %vm1471, %v3381
      %3457 = vst.msk [vmem:[#allocation2 + $0xa8] sm:$0xff] %vm1471, %v3383
      %3458 = vst.msk [vmem:[#allocation2 + $0xb0] sm:$0xff] %vm1471, %v3385
      %3459 = vst.msk [vmem:[#allocation2 + $0xb8] sm:$0xff] %vm1471, %v3387
      %3460 = vst.msk [vmem:[#allocation2 + $0xc0] sm:$0xff] %vm1471, %v3389
      %3461 = vst.msk [vmem:[#allocation2 + $0xc8] sm:$0xff] %vm1471, %v3391
      %3462 = vst.msk [vmem:[#allocation2 + $0xd0] sm:$0xff] %vm1471, %v3393
      %3463 = vst.msk [vmem:[#allocation2 + $0xd8] sm:$0xff] %vm1471, %v3395
      %3464 = vst.msk [vmem:[#allocation2 + $0xe0] sm:$0xff] %vm1471, %v3397
      %3465 = vst.msk [vmem:[#allocation2 + $0xe8] sm:$0xff] %vm1471, %v3399
      %3466 = vst.msk [vmem:[#allocation2 + $0xf0] sm:$0xff] %vm1471, %v3401
      %3467 = vst.msk [vmem:[#allocation2 + $0xf8] sm:$0xff] %vm1471, %v3403
      %v3468 = vld [vmem:[%s3275 + $0x1] sm:$0xff]
      %v3469 = vld [vmem:[%s3275 + $0x9] sm:$0xff]
      %v3470 = vld [vmem:[%s3275 + $0x19] sm:$0xff]
      %v3471 = vld [vmem:[%s3275 + $0x21] sm:$0xff]
      %v3472 = vld [vmem:[%s3275 + $0x31] sm:$0xff]
      %v3473 = vld [vmem:[%s3275 + $0x39] sm:$0xff]
      %v3474 = vld [vmem:[%s3275 + $0x49] sm:$0xff]
      %v3475 = vld [vmem:[%s3275 + $0x51] sm:$0xff]
      %v3476 = vld [vmem:[%s3275 + $0x61] sm:$0xff]
      %v3477 = vld [vmem:[%s3275 + $0x69] sm:$0xff]
      %v3478 = vld [vmem:[%s3275 + $0x79] sm:$0xff]
      %v3479 = vld [vmem:[%s3275 + $0x81] sm:$0xff]
      %v3480 = vld [vmem:[%s3275 + $0x91] sm:$0xff]
      %v3481 = vld [vmem:[%s3275 + $0x99] sm:$0xff]
      %v3482 = vld [vmem:[%s3275 + $0xa9] sm:$0xff]
      %v3483 = vld [vmem:[%s3275 + $0xb1] sm:$0xff]
      %v3484 = vld [vmem:[%s3275 + $0xc1] sm:$0xff]
      %v3485 = vld [vmem:[%s3275 + $0xc9] sm:$0xff]
      %v3486 = vld [vmem:[%s3275 + $0xd9] sm:$0xff]
      %v3487 = vld [vmem:[%s3275 + $0xe1] sm:$0xff]
      %v3488 = vld [vmem:[%s3275 + $0xf1] sm:$0xff]
      %v3489 = vld [vmem:[%s3275 + $0xf9] sm:$0xff]
      %v3490 = vld [vmem:[%s3275 + $0x109] sm:$0xff]
      %v3491 = vld [vmem:[%s3275 + $0x111] sm:$0xff]
      %v3492 = vld [vmem:[%s3275 + $0x121] sm:$0xff]
      %v3493 = vld [vmem:[%s3275 + $0x129] sm:$0xff]
      %v3494 = vld [vmem:[%s3275 + $0x139] sm:$0xff]
      %v3495 = vld [vmem:[%s3275 + $0x141] sm:$0xff]
      %v3496 = vld [vmem:[%s3275 + $0x151] sm:$0xff]
      %v3497 = vld [vmem:[%s3275 + $0x159] sm:$0xff]
      %v3498 = vld [vmem:[%s3275 + $0x169] sm:$0xff]
      %v3499 = vld [vmem:[%s3275 + $0x171] sm:$0xff]
      %3532 = vrot.lane.b32.xlu0 %v3468, 56
      %v3533 = vpop.permute.xlu0 %3532
      %3534 = vrot.lane.b32.xlu0 %v3469, 56
      %v3535 = vpop.permute.xlu0 %3534
      %3536 = vrot.lane.b32.xlu0 %v3470, 56
      %v3537 = vpop.permute.xlu0 %3536
      %3538 = vrot.lane.b32.xlu0 %v3471, 56
      %v3539 = vpop.permute.xlu0 %3538
      %3540 = vrot.lane.b32.xlu0 %v3472, 56
      %v3541 = vpop.permute.xlu0 %3540
      %3542 = vrot.lane.b32.xlu0 %v3473, 56
      %v3543 = vpop.permute.xlu0 %3542
      %3544 = vrot.lane.b32.xlu0 %v3474, 56
      %v3545 = vpop.permute.xlu0 %3544
      %3546 = vrot.lane.b32.xlu0 %v3475, 56
      %v3547 = vpop.permute.xlu0 %3546
      %3548 = vrot.lane.b32.xlu0 %v3476, 56
      %v3549 = vpop.permute.xlu0 %3548
      %3550 = vrot.lane.b32.xlu0 %v3477, 56
      %v3551 = vpop.permute.xlu0 %3550
      %3552 = vrot.lane.b32.xlu0 %v3478, 56
      %v3553 = vpop.permute.xlu0 %3552
      %3554 = vrot.lane.b32.xlu0 %v3479, 56
      %v3555 = vpop.permute.xlu0 %3554
      %3556 = vrot.lane.b32.xlu0 %v3480, 56
      %v3557 = vpop.permute.xlu0 %3556
      %3558 = vrot.lane.b32.xlu0 %v3481, 56
      %v3559 = vpop.permute.xlu0 %3558
      %3560 = vrot.lane.b32.xlu0 %v3482, 56
      %v3561 = vpop.permute.xlu0 %3560
      %3562 = vrot.lane.b32.xlu0 %v3483, 56
      %v3563 = vpop.permute.xlu0 %3562
      %3564 = vrot.lane.b32.xlu0 %v3484, 56
      %v3565 = vpop.permute.xlu0 %3564
      %3566 = vrot.lane.b32.xlu0 %v3485, 56
      %v3567 = vpop.permute.xlu0 %3566
      %3568 = vrot.lane.b32.xlu0 %v3486, 56
      %v3569 = vpop.permute.xlu0 %3568
      %3570 = vrot.lane.b32.xlu0 %v3487, 56
      %v3571 = vpop.permute.xlu0 %3570
      %3572 = vrot.lane.b32.xlu0 %v3488, 56
      %v3573 = vpop.permute.xlu0 %3572
      %3574 = vrot.lane.b32.xlu0 %v3489, 56
      %v3575 = vpop.permute.xlu0 %3574
      %3576 = vrot.lane.b32.xlu0 %v3490, 56
      %v3577 = vpop.permute.xlu0 %3576
      %3578 = vrot.lane.b32.xlu0 %v3491, 56
      %v3579 = vpop.permute.xlu0 %3578
      %3580 = vrot.lane.b32.xlu0 %v3492, 56
      %v3581 = vpop.permute.xlu0 %3580
      %3582 = vrot.lane.b32.xlu0 %v3493, 56
      %v3583 = vpop.permute.xlu0 %3582
      %3584 = vrot.lane.b32.xlu0 %v3494, 56
      %v3585 = vpop.permute.xlu0 %3584
      %3586 = vrot.lane.b32.xlu0 %v3495, 56
      %v3587 = vpop.permute.xlu0 %3586
      %3588 = vrot.lane.b32.xlu0 %v3496, 56
      %v3589 = vpop.permute.xlu0 %3588
      %3590 = vrot.lane.b32.xlu0 %v3497, 56
      %v3591 = vpop.permute.xlu0 %3590
      %3592 = vrot.lane.b32.xlu0 %v3498, 56
      %v3593 = vpop.permute.xlu0 %3592
      %3594 = vrot.lane.b32.xlu0 %v3499, 56
      %v3595 = vpop.permute.xlu0 %3594
      %3628 = vst.msk [vmem:[#allocation2] sm:$0xff] %vm1664, %v3533
      %3629 = vst.msk [vmem:[#allocation2 + $0x8] sm:$0xff] %vm1664, %v3535
      %3630 = vst.msk [vmem:[#allocation2 + $0x10] sm:$0xff] %vm1664, %v3537
      %3631 = vst.msk [vmem:[#allocation2 + $0x18] sm:$0xff] %vm1664, %v3539
      %3632 = vst.msk [vmem:[#allocation2 + $0x20] sm:$0xff] %vm1664, %v3541
      %3633 = vst.msk [vmem:[#allocation2 + $0x28] sm:$0xff] %vm1664, %v3543
      %3634 = vst.msk [vmem:[#allocation2 + $0x30] sm:$0xff] %vm1664, %v3545
      %3635 = vst.msk [vmem:[#allocation2 + $0x38] sm:$0xff] %vm1664, %v3547
      %3636 = vst.msk [vmem:[#allocation2 + $0x40] sm:$0xff] %vm1664, %v3549
      %3637 = vst.msk [vmem:[#allocation2 + $0x48] sm:$0xff] %vm1664, %v3551
      %3638 = vst.msk [vmem:[#allocation2 + $0x50] sm:$0xff] %vm1664, %v3553
      %3639 = vst.msk [vmem:[#allocation2 + $0x58] sm:$0xff] %vm1664, %v3555
      %3640 = vst.msk [vmem:[#allocation2 + $0x60] sm:$0xff] %vm1664, %v3557
      %3641 = vst.msk [vmem:[#allocation2 + $0x68] sm:$0xff] %vm1664, %v3559
      %3642 = vst.msk [vmem:[#allocation2 + $0x70] sm:$0xff] %vm1664, %v3561
      %3643 = vst.msk [vmem:[#allocation2 + $0x78] sm:$0xff] %vm1664, %v3563
      %3644 = vst.msk [vmem:[#allocation2 + $0x80] sm:$0xff] %vm1664, %v3565
      %3645 = vst.msk [vmem:[#allocation2 + $0x88] sm:$0xff] %vm1664, %v3567
      %3646 = vst.msk [vmem:[#allocation2 + $0x90] sm:$0xff] %vm1664, %v3569
      %3647 = vst.msk [vmem:[#allocation2 + $0x98] sm:$0xff] %vm1664, %v3571
      %3648 = vst.msk [vmem:[#allocation2 + $0xa0] sm:$0xff] %vm1664, %v3573
      %3649 = vst.msk [vmem:[#allocation2 + $0xa8] sm:$0xff] %vm1664, %v3575
      %3650 = vst.msk [vmem:[#allocation2 + $0xb0] sm:$0xff] %vm1664, %v3577
      %3651 = vst.msk [vmem:[#allocation2 + $0xb8] sm:$0xff] %vm1664, %v3579
      %3652 = vst.msk [vmem:[#allocation2 + $0xc0] sm:$0xff] %vm1664, %v3581
      %3653 = vst.msk [vmem:[#allocation2 + $0xc8] sm:$0xff] %vm1664, %v3583
      %3654 = vst.msk [vmem:[#allocation2 + $0xd0] sm:$0xff] %vm1664, %v3585
      %3655 = vst.msk [vmem:[#allocation2 + $0xd8] sm:$0xff] %vm1664, %v3587
      %3656 = vst.msk [vmem:[#allocation2 + $0xe0] sm:$0xff] %vm1664, %v3589
      %3657 = vst.msk [vmem:[#allocation2 + $0xe8] sm:$0xff] %vm1664, %v3591
      %3658 = vst.msk [vmem:[#allocation2 + $0xf0] sm:$0xff] %vm1664, %v3593
      %3659 = vst.msk [vmem:[#allocation2 + $0xf8] sm:$0xff] %vm1664, %v3595
      %v3660 = vld [vmem:[%s3275 + $0x2] sm:$0xff]
      %v3661 = vld [vmem:[%s3275 + $0xa] sm:$0xff]
      %v3662 = vld [vmem:[%s3275 + $0x1a] sm:$0xff]
      %v3663 = vld [vmem:[%s3275 + $0x22] sm:$0xff]
      %v3664 = vld [vmem:[%s3275 + $0x32] sm:$0xff]
      %v3665 = vld [vmem:[%s3275 + $0x3a] sm:$0xff]
      %v3666 = vld [vmem:[%s3275 + $0x4a] sm:$0xff]
      %v3667 = vld [vmem:[%s3275 + $0x52] sm:$0xff]
      %v3668 = vld [vmem:[%s3275 + $0x62] sm:$0xff]
      %v3669 = vld [vmem:[%s3275 + $0x6a] sm:$0xff]
      %v3670 = vld [vmem:[%s3275 + $0x7a] sm:$0xff]
      %v3671 = vld [vmem:[%s3275 + $0x82] sm:$0xff]
      %v3672 = vld [vmem:[%s3275 + $0x92] sm:$0xff]
      %v3673 = vld [vmem:[%s3275 + $0x9a] sm:$0xff]
      %v3674 = vld [vmem:[%s3275 + $0xaa] sm:$0xff]
      %v3675 = vld [vmem:[%s3275 + $0xb2] sm:$0xff]
      %v3676 = vld [vmem:[%s3275 + $0xc2] sm:$0xff]
      %v3677 = vld [vmem:[%s3275 + $0xca] sm:$0xff]
      %v3678 = vld [vmem:[%s3275 + $0xda] sm:$0xff]
      %v3679 = vld [vmem:[%s3275 + $0xe2] sm:$0xff]
      %v3680 = vld [vmem:[%s3275 + $0xf2] sm:$0xff]
      %v3681 = vld [vmem:[%s3275 + $0xfa] sm:$0xff]
      %v3682 = vld [vmem:[%s3275 + $0x10a] sm:$0xff]
      %v3683 = vld [vmem:[%s3275 + $0x112] sm:$0xff]
      %v3684 = vld [vmem:[%s3275 + $0x122] sm:$0xff]
      %v3685 = vld [vmem:[%s3275 + $0x12a] sm:$0xff]
      %v3686 = vld [vmem:[%s3275 + $0x13a] sm:$0xff]
      %v3687 = vld [vmem:[%s3275 + $0x142] sm:$0xff]
      %v3688 = vld [vmem:[%s3275 + $0x152] sm:$0xff]
      %v3689 = vld [vmem:[%s3275 + $0x15a] sm:$0xff]
      %v3690 = vld [vmem:[%s3275 + $0x16a] sm:$0xff]
      %v3691 = vld [vmem:[%s3275 + $0x172] sm:$0xff]
      %3724 = vrot.lane.b32.xlu0 %v3660, 64
      %v3725 = vpop.permute.xlu0 %3724
      %3726 = vrot.lane.b32.xlu0 %v3661, 64
      %v3727 = vpop.permute.xlu0 %3726
      %3728 = vrot.lane.b32.xlu0 %v3662, 64
      %v3729 = vpop.permute.xlu0 %3728
      %3730 = vrot.lane.b32.xlu0 %v3663, 64
      %v3731 = vpop.permute.xlu0 %3730
      %3732 = vrot.lane.b32.xlu0 %v3664, 64
      %v3733 = vpop.permute.xlu0 %3732
      %3734 = vrot.lane.b32.xlu0 %v3665, 64
      %v3735 = vpop.permute.xlu0 %3734
      %3736 = vrot.lane.b32.xlu0 %v3666, 64
      %v3737 = vpop.permute.xlu0 %3736
      %3738 = vrot.lane.b32.xlu0 %v3667, 64
      %v3739 = vpop.permute.xlu0 %3738
      %3740 = vrot.lane.b32.xlu0 %v3668, 64
      %v3741 = vpop.permute.xlu0 %3740
      %3742 = vrot.lane.b32.xlu0 %v3669, 64
      %v3743 = vpop.permute.xlu0 %3742
      %3744 = vrot.lane.b32.xlu0 %v3670, 64
      %v3745 = vpop.permute.xlu0 %3744
      %3746 = vrot.lane.b32.xlu0 %v3671, 64
      %v3747 = vpop.permute.xlu0 %3746
      %3748 = vrot.lane.b32.xlu0 %v3672, 64
      %v3749 = vpop.permute.xlu0 %3748
      %3750 = vrot.lane.b32.xlu0 %v3673, 64
      %v3751 = vpop.permute.xlu0 %3750
      %3752 = vrot.lane.b32.xlu0 %v3674, 64
      %v3753 = vpop.permute.xlu0 %3752
      %3754 = vrot.lane.b32.xlu0 %v3675, 64
      %v3755 = vpop.permute.xlu0 %3754
      %3756 = vrot.lane.b32.xlu0 %v3676, 64
      %v3757 = vpop.permute.xlu0 %3756
      %3758 = vrot.lane.b32.xlu0 %v3677, 64
      %v3759 = vpop.permute.xlu0 %3758
      %3760 = vrot.lane.b32.xlu0 %v3678, 64
      %v3761 = vpop.permute.xlu0 %3760
      %3762 = vrot.lane.b32.xlu0 %v3679, 64
      %v3763 = vpop.permute.xlu0 %3762
      %3764 = vrot.lane.b32.xlu0 %v3680, 64
      %v3765 = vpop.permute.xlu0 %3764
      %3766 = vrot.lane.b32.xlu0 %v3681, 64
      %v3767 = vpop.permute.xlu0 %3766
      %3768 = vrot.lane.b32.xlu0 %v3682, 64
      %v3769 = vpop.permute.xlu0 %3768
      %3770 = vrot.lane.b32.xlu0 %v3683, 64
      %v3771 = vpop.permute.xlu0 %3770
      %3772 = vrot.lane.b32.xlu0 %v3684, 64
      %v3773 = vpop.permute.xlu0 %3772
      %3774 = vrot.lane.b32.xlu0 %v3685, 64
      %v3775 = vpop.permute.xlu0 %3774
      %3776 = vrot.lane.b32.xlu0 %v3686, 64
      %v3777 = vpop.permute.xlu0 %3776
      %3778 = vrot.lane.b32.xlu0 %v3687, 64
      %v3779 = vpop.permute.xlu0 %3778
      %3780 = vrot.lane.b32.xlu0 %v3688, 64
      %v3781 = vpop.permute.xlu0 %3780
      %3782 = vrot.lane.b32.xlu0 %v3689, 64
      %v3783 = vpop.permute.xlu0 %3782
      %3784 = vrot.lane.b32.xlu0 %v3690, 64
      %v3785 = vpop.permute.xlu0 %3784
      %3786 = vrot.lane.b32.xlu0 %v3691, 64
      %v3787 = vpop.permute.xlu0 %3786
      %3820 = vst.msk [vmem:[#allocation2] sm:$0xff] %vm1857, %v3725
      %3821 = vst.msk [vmem:[#allocation2 + $0x8] sm:$0xff] %vm1857, %v3727
      %3822 = vst.msk [vmem:[#allocation2 + $0x10] sm:$0xff] %vm1857, %v3729
      %3823 = vst.msk [vmem:[#allocation2 + $0x18] sm:$0xff] %vm1857, %v3731
      %3824 = vst.msk [vmem:[#allocation2 + $0x20] sm:$0xff] %vm1857, %v3733
      %3825 = vst.msk [vmem:[#allocation2 + $0x28] sm:$0xff] %vm1857, %v3735
      %3826 = vst.msk [vmem:[#allocation2 + $0x30] sm:$0xff] %vm1857, %v3737
      %3827 = vst.msk [vmem:[#allocation2 + $0x38] sm:$0xff] %vm1857, %v3739
      %3828 = vst.msk [vmem:[#allocation2 + $0x40] sm:$0xff] %vm1857, %v3741
      %3829 = vst.msk [vmem:[#allocation2 + $0x48] sm:$0xff] %vm1857, %v3743
      %3830 = vst.msk [vmem:[#allocation2 + $0x50] sm:$0xff] %vm1857, %v3745
      %3831 = vst.msk [vmem:[#allocation2 + $0x58] sm:$0xff] %vm1857, %v3747
      %3832 = vst.msk [vmem:[#allocation2 + $0x60] sm:$0xff] %vm1857, %v3749
      %3833 = vst.msk [vmem:[#allocation2 + $0x68] sm:$0xff] %vm1857, %v3751
      %3834 = vst.msk [vmem:[#allocation2 + $0x70] sm:$0xff] %vm1857, %v3753
      %3835 = vst.msk [vmem:[#allocation2 + $0x78] sm:$0xff] %vm1857, %v3755
      %3836 = vst.msk [vmem:[#allocation2 + $0x80] sm:$0xff] %vm1857, %v3757
      %3837 = vst.msk [vmem:[#allocation2 + $0x88] sm:$0xff] %vm1857, %v3759
      %3838 = vst.msk [vmem:[#allocation2 + $0x90] sm:$0xff] %vm1857, %v3761
      %3839 = vst.msk [vmem:[#allocation2 + $0x98] sm:$0xff] %vm1857, %v3763
      %3840 = vst.msk [vmem:[#allocation2 + $0xa0] sm:$0xff] %vm1857, %v3765
      %3841 = vst.msk [vmem:[#allocation2 + $0xa8] sm:$0xff] %vm1857, %v3767
      %3842 = vst.msk [vmem:[#allocation2 + $0xb0] sm:$0xff] %vm1857, %v3769
      %3843 = vst.msk [vmem:[#allocation2 + $0xb8] sm:$0xff] %vm1857, %v3771
      %3844 = vst.msk [vmem:[#allocation2 + $0xc0] sm:$0xff] %vm1857, %v3773
      %3845 = vst.msk [vmem:[#allocation2 + $0xc8] sm:$0xff] %vm1857, %v3775
      %3846 = vst.msk [vmem:[#allocation2 + $0xd0] sm:$0xff] %vm1857, %v3777
      %3847 = vst.msk [vmem:[#allocation2 + $0xd8] sm:$0xff] %vm1857, %v3779
      %3848 = vst.msk [vmem:[#allocation2 + $0xe0] sm:$0xff] %vm1857, %v3781
      %3849 = vst.msk [vmem:[#allocation2 + $0xe8] sm:$0xff] %vm1857, %v3783
      %3850 = vst.msk [vmem:[#allocation2 + $0xf0] sm:$0xff] %vm1857, %v3785
      %3851 = vst.msk [vmem:[#allocation2 + $0xf8] sm:$0xff] %vm1857, %v3787
      %v3852 = vld [vmem:[#allocation2] sm:$0xff]
      %v3853 = vld [vmem:[#allocation2 + $0x8] sm:$0xff]
      %v3854 = vld [vmem:[#allocation2 + $0x10] sm:$0xff]
      %v3855 = vld [vmem:[#allocation2 + $0x18] sm:$0xff]
      %v3856 = vld [vmem:[#allocation2 + $0x20] sm:$0xff]
      %v3857 = vld [vmem:[#allocation2 + $0x28] sm:$0xff]
      %v3858 = vld [vmem:[#allocation2 + $0x30] sm:$0xff]
      %v3859 = vld [vmem:[#allocation2 + $0x38] sm:$0xff]
      %v3860 = vld [vmem:[#allocation2 + $0x40] sm:$0xff]
      %v3861 = vld [vmem:[#allocation2 + $0x48] sm:$0xff]
      %v3862 = vld [vmem:[#allocation2 + $0x50] sm:$0xff]
      %v3863 = vld [vmem:[#allocation2 + $0x58] sm:$0xff]
      %v3864 = vld [vmem:[#allocation2 + $0x60] sm:$0xff]
      %v3865 = vld [vmem:[#allocation2 + $0x68] sm:$0xff]
      %v3866 = vld [vmem:[#allocation2 + $0x70] sm:$0xff]
      %v3867 = vld [vmem:[#allocation2 + $0x78] sm:$0xff]
      %v3868 = vld [vmem:[#allocation2 + $0x80] sm:$0xff]
      %v3869 = vld [vmem:[#allocation2 + $0x88] sm:$0xff]
      %v3870 = vld [vmem:[#allocation2 + $0x90] sm:$0xff]
      %v3871 = vld [vmem:[#allocation2 + $0x98] sm:$0xff]
      %v3872 = vld [vmem:[#allocation2 + $0xa0] sm:$0xff]
      %v3873 = vld [vmem:[#allocation2 + $0xa8] sm:$0xff]
      %v3874 = vld [vmem:[#allocation2 + $0xb0] sm:$0xff]
      %v3875 = vld [vmem:[#allocation2 + $0xb8] sm:$0xff]
      %v3876 = vld [vmem:[#allocation2 + $0xc0] sm:$0xff]
      %v3877 = vld [vmem:[#allocation2 + $0xc8] sm:$0xff]
      %v3878 = vld [vmem:[#allocation2 + $0xd0] sm:$0xff]
      %v3879 = vld [vmem:[#allocation2 + $0xd8] sm:$0xff]
      %v3880 = vld [vmem:[#allocation2 + $0xe0] sm:$0xff]
      %v3881 = vld [vmem:[#allocation2 + $0xe8] sm:$0xff]
      %v3882 = vld [vmem:[#allocation2 + $0xf0] sm:$0xff]
      %v3883 = vld [vmem:[#allocation2 + $0xf8] sm:$0xff]
      %v3884 = vld [vmem:[%s3] sm:$0xff]
      %v3885 = vld [vmem:[%s3 + $0x8] sm:$0xff]
      %v3886 = vld [vmem:[%s3 + $0x10] sm:$0xff]
      %v3887 = vld [vmem:[%s3 + $0x18] sm:$0xff]
      %v3888 = vld [vmem:[%s3 + $0x20] sm:$0xff]
      %v3889 = vld [vmem:[%s3 + $0x28] sm:$0xff]
      %v3890 = vld [vmem:[%s3 + $0x30] sm:$0xff]
      %v3891 = vld [vmem:[%s3 + $0x38] sm:$0xff]
      %v3892 = vld [vmem:[%s3 + $0x40] sm:$0xff]
      %v3893 = vld [vmem:[%s4] sm:$0x1]
      %v3895 = vperm.slane %v3893, 0
      %v3898 = vsel %vm1935, %v3852, 0
      %v3901 = vsel %vm1935, %v3853, 0
      %v3904 = vsel %vm1935, %v3854, 0
      %v3907 = vsel %vm1935, %v3855, 0
      %v3910 = vsel %vm1935, %v3856, 0
      %v3913 = vsel %vm1935, %v3857, 0
      %v3916 = vsel %vm1935, %v3858, 0
      %v3919 = vsel %vm1935, %v3859, 0
      %v3922 = vsel %vm1935, %v3860, 0
      %v3925 = vsel %vm1935, %v3861, 0
      %v3928 = vsel %vm1935, %v3862, 0
      %v3931 = vsel %vm1935, %v3863, 0
      %v3934 = vsel %vm1935, %v3864, 0
      %v3937 = vsel %vm1935, %v3865, 0
      %v3940 = vsel %vm1935, %v3866, 0
      %v3943 = vsel %vm1935, %v3867, 0
      %v3946 = vsel %vm1935, %v3868, 0
      %v3949 = vsel %vm1935, %v3869, 0
      %v3952 = vsel %vm1935, %v3870, 0
      %v3955 = vsel %vm1935, %v3871, 0
      %v3958 = vsel %vm1935, %v3872, 0
      %v3961 = vsel %vm1935, %v3873, 0
      %v3964 = vsel %vm1935, %v3874, 0
      %v3967 = vsel %vm1935, %v3875, 0
      %v3970 = vsel %vm1935, %v3876, 0
      %v3973 = vsel %vm1935, %v3877, 0
      %v3976 = vsel %vm1935, %v3878, 0
      %v3979 = vsel %vm1935, %v3879, 0
      %v3982 = vsel %vm1935, %v3880, 0
      %v3985 = vsel %vm1935, %v3881, 0
      %v3988 = vsel %vm1935, %v3882, 0
      %v3991 = vsel %vm1935, %v3883, 0
      %3993 = vmatpush.msra.mxu0 0.0
      %3994 = vmatpush.msra.mxu0 0.0
      %3995 = vmatpush.msra.mxu0 0.0
      %3996 = vmatpush.msra.mxu0 0.0
      %3997 = vmatpush.msra.mxu0 0.0
      %3998 = vmatpush.msra.mxu0 0.0
      %3999 = vmatpush.msra.mxu0 0.0
      %4000 = vmatpush.msra.mxu0 %v3892
      %4001 = vmatpush.msra.mxu0 %v3891
      %4002 = vmatpush.msra.mxu0 %v3890
      %4003 = vmatpush.msra.mxu0 %v3889
      %4004 = vmatpush.msra.mxu0 %v3888
      %4005 = vmatpush.msra.mxu0 %v3887
      %4006 = vmatpush.msra.mxu0 %v3886
      %4007 = vmatpush.msra.mxu0 %v3885
      %4008 = vmatpush.msra.mxu0 %v3884
      %4009 = vmatmul.f32.gmra.mxu0 %v3898
      %v4010 = vpop.f32.mrf.mxu0
      %v4011 = vadd.f32 %v3895, %v4010
      %4012 = vmatmul.f32.gmra.mxu0 %v3901
      %v4013 = vpop.f32.mrf.mxu0
      %v4014 = vadd.f32 %v3895, %v4013
      %4015 = vmatmul.f32.gmra.mxu0 %v3904
      %v4016 = vpop.f32.mrf.mxu0
      %v4017 = vadd.f32 %v3895, %v4016
      %4018 = vmatmul.f32.gmra.mxu0 %v3907
      %v4019 = vpop.f32.mrf.mxu0
      %v4020 = vadd.f32 %v3895, %v4019
      %4021 = vmatmul.f32.gmra.mxu0 %v3910
      %v4022 = vpop.f32.mrf.mxu0
      %v4023 = vadd.f32 %v3895, %v4022
      %4024 = vmatmul.f32.gmra.mxu0 %v3913
      %v4025 = vpop.f32.mrf.mxu0
      %v4026 = vadd.f32 %v3895, %v4025
      %4027 = vmatmul.f32.gmra.mxu0 %v3916
      %v4028 = vpop.f32.mrf.mxu0
      %v4029 = vadd.f32 %v3895, %v4028
      %4030 = vmatmul.f32.gmra.mxu0 %v3919
      %v4031 = vpop.f32.mrf.mxu0
      %v4032 = vadd.f32 %v3895, %v4031
      %4033 = vmatmul.f32.gmra.mxu0 %v3922
      %v4034 = vpop.f32.mrf.mxu0
      %v4035 = vadd.f32 %v3895, %v4034
      %4036 = vmatmul.f32.gmra.mxu0 %v3925
      %v4037 = vpop.f32.mrf.mxu0
      %v4038 = vadd.f32 %v3895, %v4037
      %4039 = vmatmul.f32.gmra.mxu0 %v3928
      %v4040 = vpop.f32.mrf.mxu0
      %v4041 = vadd.f32 %v3895, %v4040
      %4042 = vmatmul.f32.gmra.mxu0 %v3931
      %v4043 = vpop.f32.mrf.mxu0
      %v4044 = vadd.f32 %v3895, %v4043
      %4045 = vmatmul.f32.gmra.mxu0 %v3934
      %v4046 = vpop.f32.mrf.mxu0
      %v4047 = vadd.f32 %v3895, %v4046
      %4048 = vmatmul.f32.gmra.mxu0 %v3937
      %v4049 = vpop.f32.mrf.mxu0
      %v4050 = vadd.f32 %v3895, %v4049
      %4051 = vmatmul.f32.gmra.mxu0 %v3940
      %v4052 = vpop.f32.mrf.mxu0
      %v4053 = vadd.f32 %v3895, %v4052
      %4054 = vmatmul.f32.gmra.mxu0 %v3943
      %v4055 = vpop.f32.mrf.mxu0
      %v4056 = vadd.f32 %v3895, %v4055
      %4057 = vmatmul.f32.gmra.mxu0 %v3946
      %v4058 = vpop.f32.mrf.mxu0
      %v4059 = vadd.f32 %v3895, %v4058
      %4060 = vmatmul.f32.gmra.mxu0 %v3949
      %v4061 = vpop.f32.mrf.mxu0
      %v4062 = vadd.f32 %v3895, %v4061
      %4063 = vmatmul.f32.gmra.mxu0 %v3952
      %v4064 = vpop.f32.mrf.mxu0
      %v4065 = vadd.f32 %v3895, %v4064
      %4066 = vmatmul.f32.gmra.mxu0 %v3955
      %v4067 = vpop.f32.mrf.mxu0
      %v4068 = vadd.f32 %v3895, %v4067
      %4069 = vmatmul.f32.gmra.mxu0 %v3958
      %v4070 = vpop.f32.mrf.mxu0
      %v4071 = vadd.f32 %v3895, %v4070
      %4072 = vmatmul.f32.gmra.mxu0 %v3961
      %v4073 = vpop.f32.mrf.mxu0
      %v4074 = vadd.f32 %v3895, %v4073
      %4075 = vmatmul.f32.gmra.mxu0 %v3964
      %v4076 = vpop.f32.mrf.mxu0
      %v4077 = vadd.f32 %v3895, %v4076
      %4078 = vmatmul.f32.gmra.mxu0 %v3967
      %v4079 = vpop.f32.mrf.mxu0
      %v4080 = vadd.f32 %v3895, %v4079
      %4081 = vmatmul.f32.gmra.mxu0 %v3970
      %v4082 = vpop.f32.mrf.mxu0
      %v4083 = vadd.f32 %v3895, %v4082
      %4084 = vmatmul.f32.gmra.mxu0 %v3973
      %v4085 = vpop.f32.mrf.mxu0
      %v4086 = vadd.f32 %v3895, %v4085
      %4087 = vmatmul.f32.gmra.mxu0 %v3976
      %v4088 = vpop.f32.mrf.mxu0
      %v4089 = vadd.f32 %v3895, %v4088
      %4090 = vmatmul.f32.gmra.mxu0 %v3979
      %v4091 = vpop.f32.mrf.mxu0
      %v4092 = vadd.f32 %v3895, %v4091
      %4093 = vmatmul.f32.gmra.mxu0 %v3982
      %v4094 = vpop.f32.mrf.mxu0
      %v4095 = vadd.f32 %v3895, %v4094
      %4096 = vmatmul.f32.gmra.mxu0 %v3985
      %v4097 = vpop.f32.mrf.mxu0
      %v4098 = vadd.f32 %v3895, %v4097
      %4099 = vmatmul.f32.gmra.mxu0 %v3988
      %v4100 = vpop.f32.mrf.mxu0
      %v4101 = vadd.f32 %v3895, %v4100
      %4102 = vmatmul.f32.gmra.mxu0 %v3991
      %v4103 = vpop.f32.mrf.mxu0
      %v4104 = vadd.f32 %v3895, %v4103
      %4105 = vdwg.mxu0
      %v4106 = vld [vmem:[%s730 + $0x1] sm:$0xff]
      %v4107 = vld [vmem:[%s730 + $0x9] sm:$0xff]
      %v4108 = vld [vmem:[%s730 + $0x19] sm:$0xff]
      %v4109 = vld [vmem:[%s730 + $0x21] sm:$0xff]
      %v4110 = vld [vmem:[%s730 + $0x31] sm:$0xff]
      %v4111 = vld [vmem:[%s730 + $0x39] sm:$0xff]
      %v4112 = vld [vmem:[%s730 + $0x49] sm:$0xff]
      %v4113 = vld [vmem:[%s730 + $0x51] sm:$0xff]
      %v4114 = vld [vmem:[%s730 + $0x61] sm:$0xff]
      %v4115 = vld [vmem:[%s730 + $0x69] sm:$0xff]
      %v4116 = vld [vmem:[%s730 + $0x79] sm:$0xff]
      %v4117 = vld [vmem:[%s730 + $0x81] sm:$0xff]
      %v4118 = vld [vmem:[%s730 + $0x91] sm:$0xff]
      %v4119 = vld [vmem:[%s730 + $0x99] sm:$0xff]
      %v4120 = vld [vmem:[%s730 + $0xa9] sm:$0xff]
      %v4121 = vld [vmem:[%s730 + $0xb1] sm:$0xff]
      %v4122 = vld [vmem:[%s730 + $0xc1] sm:$0xff]
      %v4123 = vld [vmem:[%s730 + $0xc9] sm:$0xff]
      %v4124 = vld [vmem:[%s730 + $0xd9] sm:$0xff]
      %v4125 = vld [vmem:[%s730 + $0xe1] sm:$0xff]
      %v4126 = vld [vmem:[%s730 + $0xf1] sm:$0xff]
      %v4127 = vld [vmem:[%s730 + $0xf9] sm:$0xff]
      %v4128 = vld [vmem:[%s730 + $0x109] sm:$0xff]
      %v4129 = vld [vmem:[%s730 + $0x111] sm:$0xff]
      %v4130 = vld [vmem:[%s730 + $0x121] sm:$0xff]
      %v4131 = vld [vmem:[%s730 + $0x129] sm:$0xff]
      %v4132 = vld [vmem:[%s730 + $0x139] sm:$0xff]
      %v4133 = vld [vmem:[%s730 + $0x141] sm:$0xff]
      %v4134 = vld [vmem:[%s730 + $0x151] sm:$0xff]
      %v4135 = vld [vmem:[%s730 + $0x159] sm:$0xff]
      %v4136 = vld [vmem:[%s730 + $0x169] sm:$0xff]
      %v4137 = vld [vmem:[%s730 + $0x171] sm:$0xff]
      %v4138 = vld [vmem:[%s5] sm:$0xff]
      %v4139 = vld [vmem:[%s6] sm:$0x1]
      %v4141 = vperm.slane %v4139, 0
      %v4144 = vsel %vm311, %v4106, 0
      %v4147 = vsel %vm311, %v4107, 0
      %v4150 = vsel %vm311, %v4108, 0
      %v4153 = vsel %vm311, %v4109, 0
      %v4156 = vsel %vm311, %v4110, 0
      %v4159 = vsel %vm311, %v4111, 0
      %v4162 = vsel %vm311, %v4112, 0
      %v4165 = vsel %vm311, %v4113, 0
      %v4168 = vsel %vm311, %v4114, 0
      %v4171 = vsel %vm311, %v4115, 0
      %v4174 = vsel %vm311, %v4116, 0
      %v4177 = vsel %vm311, %v4117, 0
      %v4180 = vsel %vm311, %v4118, 0
      %v4183 = vsel %vm311, %v4119, 0
      %v4186 = vsel %vm311, %v4120, 0
      %v4189 = vsel %vm311, %v4121, 0
      %v4192 = vsel %vm311, %v4122, 0
      %v4195 = vsel %vm311, %v4123, 0
      %v4198 = vsel %vm311, %v4124, 0
      %v4201 = vsel %vm311, %v4125, 0
      %v4204 = vsel %vm311, %v4126, 0
      %v4207 = vsel %vm311, %v4127, 0
      %v4210 = vsel %vm311, %v4128, 0
      %v4213 = vsel %vm311, %v4129, 0
      %v4216 = vsel %vm311, %v4130, 0
      %v4219 = vsel %vm311, %v4131, 0
      %v4222 = vsel %vm311, %v4132, 0
      %v4225 = vsel %vm311, %v4133, 0
      %v4228 = vsel %vm311, %v4134, 0
      %v4231 = vsel %vm311, %v4135, 0
      %v4234 = vsel %vm311, %v4136, 0
      %v4237 = vsel %vm311, %v4137, 0
      %4239 = vmatpush.msra.mxu0 0.0
      %4240 = vmatpush.msra.mxu0 0.0
      %4241 = vmatpush.msra.mxu0 0.0
      %4242 = vmatpush.msra.mxu0 0.0
      %4243 = vmatpush.msra.mxu0 0.0
      %4244 = vmatpush.msra.mxu0 0.0
      %4245 = vmatpush.msra.mxu0 0.0
      %4246 = vmatpush.msra.mxu0 0.0
      %4247 = vmatpush.msra.mxu0 0.0
      %4248 = vmatpush.msra.mxu0 0.0
      %4249 = vmatpush.msra.mxu0 0.0
      %4250 = vmatpush.msra.mxu0 0.0
      %4251 = vmatpush.msra.mxu0 0.0
      %4252 = vmatpush.msra.mxu0 0.0
      %4253 = vmatpush.msra.mxu0 0.0
      %4254 = vmatpush.msra.mxu0 %v4138
      %4255 = vmatmul.f32.gmra.mxu0 %v4144
      %v4256 = vpop.f32.mrf.mxu0
      %v4257 = vadd.f32 %v4141, %v4256
      %4258 = vmatmul.f32.gmra.mxu0 %v4147
      %v4259 = vpop.f32.mrf.mxu0
      %v4260 = vadd.f32 %v4141, %v4259
      %4261 = vmatmul.f32.gmra.mxu0 %v4150
      %v4262 = vpop.f32.mrf.mxu0
      %v4263 = vadd.f32 %v4141, %v4262
      %4264 = vmatmul.f32.gmra.mxu0 %v4153
      %v4265 = vpop.f32.mrf.mxu0
      %v4266 = vadd.f32 %v4141, %v4265
      %4267 = vmatmul.f32.gmra.mxu0 %v4156
      %v4268 = vpop.f32.mrf.mxu0
      %v4269 = vadd.f32 %v4141, %v4268
      %4270 = vmatmul.f32.gmra.mxu0 %v4159
      %v4271 = vpop.f32.mrf.mxu0
      %v4272 = vadd.f32 %v4141, %v4271
      %4273 = vmatmul.f32.gmra.mxu0 %v4162
      %v4274 = vpop.f32.mrf.mxu0
      %v4275 = vadd.f32 %v4141, %v4274
      %4276 = vmatmul.f32.gmra.mxu0 %v4165
      %v4277 = vpop.f32.mrf.mxu0
      %v4278 = vadd.f32 %v4141, %v4277
      %4279 = vmatmul.f32.gmra.mxu0 %v4168
      %v4280 = vpop.f32.mrf.mxu0
      %v4281 = vadd.f32 %v4141, %v4280
      %4282 = vmatmul.f32.gmra.mxu0 %v4171
      %v4283 = vpop.f32.mrf.mxu0
      %v4284 = vadd.f32 %v4141, %v4283
      %4285 = vmatmul.f32.gmra.mxu0 %v4174
      %v4286 = vpop.f32.mrf.mxu0
      %v4287 = vadd.f32 %v4141, %v4286
      %4288 = vmatmul.f32.gmra.mxu0 %v4177
      %v4289 = vpop.f32.mrf.mxu0
      %v4290 = vadd.f32 %v4141, %v4289
      %4291 = vmatmul.f32.gmra.mxu0 %v4180
      %v4292 = vpop.f32.mrf.mxu0
      %v4293 = vadd.f32 %v4141, %v4292
      %4294 = vmatmul.f32.gmra.mxu0 %v4183
      %v4295 = vpop.f32.mrf.mxu0
      %v4296 = vadd.f32 %v4141, %v4295
      %4297 = vmatmul.f32.gmra.mxu0 %v4186
      %v4298 = vpop.f32.mrf.mxu0
      %v4299 = vadd.f32 %v4141, %v4298
      %4300 = vmatmul.f32.gmra.mxu0 %v4189
      %v4301 = vpop.f32.mrf.mxu0
      %v4302 = vadd.f32 %v4141, %v4301
      %4303 = vmatmul.f32.gmra.mxu0 %v4192
      %v4304 = vpop.f32.mrf.mxu0
      %v4305 = vadd.f32 %v4141, %v4304
      %4306 = vmatmul.f32.gmra.mxu0 %v4195
      %v4307 = vpop.f32.mrf.mxu0
      %v4308 = vadd.f32 %v4141, %v4307
      %4309 = vmatmul.f32.gmra.mxu0 %v4198
      %v4310 = vpop.f32.mrf.mxu0
      %v4311 = vadd.f32 %v4141, %v4310
      %4312 = vmatmul.f32.gmra.mxu0 %v4201
      %v4313 = vpop.f32.mrf.mxu0
      %v4314 = vadd.f32 %v4141, %v4313
      %4315 = vmatmul.f32.gmra.mxu0 %v4204
      %v4316 = vpop.f32.mrf.mxu0
      %v4317 = vadd.f32 %v4141, %v4316
      %4318 = vmatmul.f32.gmra.mxu0 %v4207
      %v4319 = vpop.f32.mrf.mxu0
      %v4320 = vadd.f32 %v4141, %v4319
      %4321 = vmatmul.f32.gmra.mxu0 %v4210
      %v4322 = vpop.f32.mrf.mxu0
      %v4323 = vadd.f32 %v4141, %v4322
      %4324 = vmatmul.f32.gmra.mxu0 %v4213
      %v4325 = vpop.f32.mrf.mxu0
      %v4326 = vadd.f32 %v4141, %v4325
      %4327 = vmatmul.f32.gmra.mxu0 %v4216
      %v4328 = vpop.f32.mrf.mxu0
      %v4329 = vadd.f32 %v4141, %v4328
      %4330 = vmatmul.f32.gmra.mxu0 %v4219
      %v4331 = vpop.f32.mrf.mxu0
      %v4332 = vadd.f32 %v4141, %v4331
      %4333 = vmatmul.f32.gmra.mxu0 %v4222
      %v4334 = vpop.f32.mrf.mxu0
      %v4335 = vadd.f32 %v4141, %v4334
      %4336 = vmatmul.f32.gmra.mxu0 %v4225
      %v4337 = vpop.f32.mrf.mxu0
      %v4338 = vadd.f32 %v4141, %v4337
      %4339 = vmatmul.f32.gmra.mxu0 %v4228
      %v4340 = vpop.f32.mrf.mxu0
      %v4341 = vadd.f32 %v4141, %v4340
      %4342 = vmatmul.f32.gmra.mxu0 %v4231
      %v4343 = vpop.f32.mrf.mxu0
      %v4344 = vadd.f32 %v4141, %v4343
      %4345 = vmatmul.f32.gmra.mxu0 %v4234
      %v4346 = vpop.f32.mrf.mxu0
      %v4347 = vadd.f32 %v4141, %v4346
      %4348 = vmatmul.f32.gmra.mxu0 %v4237
      %v4349 = vpop.f32.mrf.mxu0
      %v4350 = vadd.f32 %v4141, %v4349
      %4351 = vdwg.mxu0
      %v4352 = vadd.f32 %v4257, %v4011
      %v4353 = vadd.f32 %v4260, %v4014
      %v4354 = vadd.f32 %v4263, %v4017
      %v4355 = vadd.f32 %v4266, %v4020
      %v4356 = vadd.f32 %v4269, %v4023
      %v4357 = vadd.f32 %v4272, %v4026
      %v4358 = vadd.f32 %v4275, %v4029
      %v4359 = vadd.f32 %v4278, %v4032
      %v4360 = vadd.f32 %v4281, %v4035
      %v4361 = vadd.f32 %v4284, %v4038
      %v4362 = vadd.f32 %v4287, %v4041
      %v4363 = vadd.f32 %v4290, %v4044
      %v4364 = vadd.f32 %v4293, %v4047
      %v4365 = vadd.f32 %v4296, %v4050
      %v4366 = vadd.f32 %v4299, %v4053
      %v4367 = vadd.f32 %v4302, %v4056
      %v4368 = vadd.f32 %v4305, %v4059
      %v4369 = vadd.f32 %v4308, %v4062
      %v4370 = vadd.f32 %v4311, %v4065
      %v4371 = vadd.f32 %v4314, %v4068
      %v4372 = vadd.f32 %v4317, %v4071
      %v4373 = vadd.f32 %v4320, %v4074
      %v4374 = vadd.f32 %v4323, %v4077
      %v4375 = vadd.f32 %v4326, %v4080
      %v4376 = vadd.f32 %v4329, %v4083
      %v4377 = vadd.f32 %v4332, %v4086
      %v4378 = vadd.f32 %v4335, %v4089
      %v4379 = vadd.f32 %v4338, %v4092
      %v4380 = vadd.f32 %v4341, %v4095
      %v4381 = vadd.f32 %v4344, %v4098
      %v4382 = vadd.f32 %v4347, %v4101
      %v4383 = vadd.f32 %v4350, %v4104
      %v4384 = vmax.f32 %v4352, 0.0
      %v4385 = vmax.f32 %v4353, 0.0
      %v4386 = vmax.f32 %v4354, 0.0
      %v4387 = vmax.f32 %v4355, 0.0
      %v4388 = vmax.f32 %v4356, 0.0
      %v4389 = vmax.f32 %v4357, 0.0
      %v4390 = vmax.f32 %v4358, 0.0
      %v4391 = vmax.f32 %v4359, 0.0
      %v4392 = vmax.f32 %v4360, 0.0
      %v4393 = vmax.f32 %v4361, 0.0
      %v4394 = vmax.f32 %v4362, 0.0
      %v4395 = vmax.f32 %v4363, 0.0
      %v4396 = vmax.f32 %v4364, 0.0
      %v4397 = vmax.f32 %v4365, 0.0
      %v4398 = vmax.f32 %v4366, 0.0
      %v4399 = vmax.f32 %v4367, 0.0
      %v4400 = vmax.f32 %v4368, 0.0
      %v4401 = vmax.f32 %v4369, 0.0
      %v4402 = vmax.f32 %v4370, 0.0
      %v4403 = vmax.f32 %v4371, 0.0
      %v4404 = vmax.f32 %v4372, 0.0
      %v4405 = vmax.f32 %v4373, 0.0
      %v4406 = vmax.f32 %v4374, 0.0
      %v4407 = vmax.f32 %v4375, 0.0
      %v4408 = vmax.f32 %v4376, 0.0
      %v4409 = vmax.f32 %v4377, 0.0
      %v4410 = vmax.f32 %v4378, 0.0
      %v4411 = vmax.f32 %v4379, 0.0
      %v4412 = vmax.f32 %v4380, 0.0
      %v4413 = vmax.f32 %v4381, 0.0
      %v4414 = vmax.f32 %v4382, 0.0
      %v4415 = vmax.f32 %v4383, 0.0
      %4416 = vst.msk [vmem:[%s278] sm:$0xff] %vm311, %v4384
      %4417 = vst.msk [vmem:[%s278 + $0x8] sm:$0xff] %vm311, %v4385
      %4418 = vst.msk [vmem:[%s278 + $0x10] sm:$0xff] %vm311, %v4386
      %4419 = vst.msk [vmem:[%s278 + $0x18] sm:$0xff] %vm311, %v4387
      %4420 = vst.msk [vmem:[%s278 + $0x20] sm:$0xff] %vm311, %v4388
      %4421 = vst.msk [vmem:[%s278 + $0x28] sm:$0xff] %vm311, %v4389
      %4422 = vst.msk [vmem:[%s278 + $0x30] sm:$0xff] %vm311, %v4390
      %4423 = vst.msk [vmem:[%s278 + $0x38] sm:$0xff] %vm311, %v4391
      %4424 = vst.msk [vmem:[%s278 + $0x40] sm:$0xff] %vm311, %v4392
      %4425 = vst.msk [vmem:[%s278 + $0x48] sm:$0xff] %vm311, %v4393
      %4426 = vst.msk [vmem:[%s278 + $0x50] sm:$0xff] %vm311, %v4394
      %4427 = vst.msk [vmem:[%s278 + $0x58] sm:$0xff] %vm311, %v4395
      %4428 = vst.msk [vmem:[%s278 + $0x60] sm:$0xff] %vm311, %v4396
      %4429 = vst.msk [vmem:[%s278 + $0x68] sm:$0xff] %vm311, %v4397
      %4430 = vst.msk [vmem:[%s278 + $0x70] sm:$0xff] %vm311, %v4398
      %4431 = vst.msk [vmem:[%s278 + $0x78] sm:$0xff] %vm311, %v4399
      %4432 = vst.msk [vmem:[%s278 + $0x80] sm:$0xff] %vm311, %v4400
      %4433 = vst.msk [vmem:[%s278 + $0x88] sm:$0xff] %vm311, %v4401
      %4434 = vst.msk [vmem:[%s278 + $0x90] sm:$0xff] %vm311, %v4402
      %4435 = vst.msk [vmem:[%s278 + $0x98] sm:$0xff] %vm311, %v4403
      %4436 = vst.msk [vmem:[%s278 + $0xa0] sm:$0xff] %vm311, %v4404
      %4437 = vst.msk [vmem:[%s278 + $0xa8] sm:$0xff] %vm311, %v4405
      %4438 = vst.msk [vmem:[%s278 + $0xb0] sm:$0xff] %vm311, %v4406
      %4439 = vst.msk [vmem:[%s278 + $0xb8] sm:$0xff] %vm311, %v4407
      %4440 = vst.msk [vmem:[%s278 + $0xc0] sm:$0xff] %vm311, %v4408
      %4441 = vst.msk [vmem:[%s278 + $0xc8] sm:$0xff] %vm311, %v4409
      %4442 = vst.msk [vmem:[%s278 + $0xd0] sm:$0xff] %vm311, %v4410
      %4443 = vst.msk [vmem:[%s278 + $0xd8] sm:$0xff] %vm311, %v4411
      %4444 = vst.msk [vmem:[%s278 + $0xe0] sm:$0xff] %vm311, %v4412
      %4445 = vst.msk [vmem:[%s278 + $0xe8] sm:$0xff] %vm311, %v4413
      %4446 = vst.msk [vmem:[%s278 + $0xf0] sm:$0xff] %vm311, %v4414
      %4447 = vst.msk [vmem:[%s278 + $0xf8] sm:$0xff] %vm311, %v4415
      %p4448 = scmp.lt.s32.totalorder %s18, 1
      %s4449 = scalar_select %p4448, %s18, 1
      %s4450 = smul.addr %s4449, 32
      %s4451 = smul.addr %s4450, 8
      %s4452 = scalar_lea.vmem %s7, %s4451
      // Predicated region
      $region49: #{tpu_custom_call.1} parent=47 // pred_check
        %p4453 = pneg %p188
      $region50: #{tpu_custom_call.1} parent=47 // pred_check_branch
        %4455 = sbr.rel (%p4453) target = $region52
      $region51: #{tpu_custom_call.1} parent=47 // pred_region
        _
      $region52: #{tpu_custom_call.1} parent=47 // pred_fallthru
        _
    $region48: #{tpu_custom_call.1} parent=5 // pred_fallthru
      _
    %p4456 = scmp.le.s32.totalorder 2, %s13
    // Predicated region
    $region53: #{tpu_custom_call.1} parent=5 // pred_check
      %p4457 = pneg %p4456
    $region54: #{tpu_custom_call.1} parent=5 // pred_check_branch
      %4459 = sbr.rel (%p4457) target = $region56
    $region55: #{tpu_custom_call.1} parent=5 // pred_region
      %s4460 = ssub.s32 %s13, 2
      // Predicated region
      $region57: #{tpu_custom_call.1} parent=55 // pred_check
        %p4461 = pneg %p194
      $region58: #{tpu_custom_call.1} parent=55 // pred_check_branch
        %4463 = sbr.rel (%p4461) target = $region60
      $region59: #{tpu_custom_call.1} parent=55 // pred_region
        %p4464 = scmp.lt.s32.totalorder %s19, 1
        %s4465 = scalar_select %p4464, %s19, 1
        %s4466 = smul.addr %s4465, 32
        %s4467 = smul.addr %s4466, 8
        %s4468 = scalar_lea.vmem %s7, %s4467
      $region60: #{tpu_custom_call.1} parent=55 // pred_fallthru
        _
    $region56: #{tpu_custom_call.1} parent=5 // pred_fallthru
      _
  $region6: #{tpu_custom_call.1} parent=0 // loop_footer
    %s17 = sadd.s32 1, %s13
  $region7: #{tpu_custom_call.1} parent=0 // loop_footer_branch
    %12 = sbr.rel target = $region3
  $region8: #{tpu_custom_call.1} parent=0 // loop_exit
    _

</llo_original>
